<compile_context>
chip_gen: v5e
topology: v5e:2x2
jax: 0.10.0
libtpu: 0.0.40
codegen_flags: <defaults>
</compile_context>

<pallas_src>
import functools

import jax
import jax.numpy as jnp
from jax.experimental import pallas as pl
from jax.experimental.pallas import tpu as pltpu

G = 8          # images per block-diagonal conv group (= sublane tile height)
LANE = 128     # lane width used for pixel / head padding
MAX_TB = 256   # max images per grid step (multiple of 8)


def _round_up(n, m):
    return ((n + m - 1) // m) * m


# ---------------------------------------------------------------------------
# Fused kernel: conv1 -> relu -> conv2 -> relu -> flatten -> fc4 -> relu -> head
# ---------------------------------------------------------------------------
def dqn_fused_kernel(x_ref, w1_ref, b1_ref, w2_ref, b2_ref,
                     w4_ref, b4_ref, wh_ref, bh_ref, o_ref, act_ref):
    TB, C_IN, P = x_ref.shape                 # (batch tile, 16, 121)
    C2 = w2_ref.shape[0] // G                 # conv2 output channels (16)
    P_PAD = act_ref.shape[1] // C2            # per-channel lane stride (128)
    n_groups = TB // G

    # Zero the flat-activation scratch so the pixel-pad lanes (p in [P, 128))
    # are exactly 0; they line up with zero rows of the padded fc4 weight.
    # (Done every step: scratch instances are per-core under megacore.)
    act_ref[...] = jnp.zeros_like(act_ref)

    # NCHW block -> rows = (image, in_channel), pixels on lanes.  Merging the
    # leading batch dim into the 16-channel sublane dim is a free re-tiling;
    # the f32 -> bf16 cast happens here, in-kernel.
    x_rows = x_ref[...].astype(jnp.bfloat16).reshape(TB * C_IN, P)

    w1 = w1_ref[...]      # (G*32, G*C_IN)  block-diagonal conv1 (image-major rows)
    b1 = b1_ref[...]      # (G*32, 1)
    w2 = w2_ref[...]      # (G*16, G*32)    block-diagonal conv2 (channel-major rows)
    b2 = b2_ref[...]      # (G*16, 1)

    for g in range(n_groups):
        # One group = G images stacked block-diagonally along the contraction
        # dim, so both 1x1 convs are lane-dense matmuls (pixels on 128 lanes)
        # with no per-image loop and no MXU K/N-tile waste.
        xg = x_rows[g * G * C_IN:(g + 1) * G * C_IN, :]              # (G*C_IN, P)
        h1 = jnp.dot(w1, xg, preferred_element_type=jnp.float32)      # (G*32, P)
        h1 = jnp.maximum(h1 + b1, 0.0).astype(jnp.bfloat16)
        h2 = jnp.dot(w2, h1, preferred_element_type=jnp.float32)      # (G*16, P)
        h2 = jnp.maximum(h2 + b2, 0.0)                                # rows = c*G + r

        # PyTorch x.view(B,-1) (channel-major NCHW flatten): channel-major row
        # blocks of h2 are copied as aligned (G, P) rectangles into the flat
        # per-image activation at 128-aligned lane offsets.  Pure vreg copies.
        for c in range(C2):
            act_ref[g * G:(g + 1) * G, c * P_PAD:c * P_PAD + P] = \
                h2[c * G:(c + 1) * G, :]

    # fc4 -> ReLU -> head for the whole batch tile; the (TB, 2048) activation
    # stays in VMEM and both matmuls stream TB rows per MXU weight tile.
    act = act_ref[...].astype(jnp.bfloat16)
    h4 = jnp.dot(act, w4_ref[...], preferred_element_type=jnp.float32)
    h4 = jnp.maximum(h4 + b4_ref[...], 0.0).astype(jnp.bfloat16)
    out = jnp.dot(h4, wh_ref[...], preferred_element_type=jnp.float32)
    o_ref[...] = out + bh_ref[...]            # (TB, 128) f32, lane-dense store


# ---------------------------------------------------------------------------
# One-time parameter preprocessing (hoisted out of the per-call forward).
# ---------------------------------------------------------------------------
def preprocess_params(p):
    """Relayout PyTorch weights for the fused kernel, once.

    * conv weights -> block-diagonal over G=8 images: conv1 rows ordered
      (image, out_ch), conv2 rows ordered (out_ch, image) so the kernel's
      channel-major flatten needs only aligned rectangle copies.
    * fc4 rows reordered to K = out_ch*128 + pixel with zero rows at the
      pixel-pad positions (K padded 1936 -> 2048).
    * head transposed and zero-padded to 128 output lanes.
    * matmul operands cast to bf16 (f32 accumulation in-kernel), biases f32.
    """
    oc1, ic1 = p["conv1_w"].shape[:2]          # 32, in_channels*4
    oc2, ic2 = p["conv2_w"].shape[:2]          # 16, 32
    n_hidden, n_feat = p["fc4_w"].shape        # 512, 11*11*16
    n_act = p["head_w"].shape[0]
    n_pix = n_feat // oc2                      # 121
    p_pad = _round_up(n_pix, LANE)             # 128
    nh_pad = _round_up(n_act, LANE)            # 128

    w1 = p["conv1_w"].reshape(oc1, ic1)        # (32, C_IN)   [m, c]
    w2 = p["conv2_w"].reshape(oc2, ic2)        # (16, 32)     [n, m]
    eye = jnp.eye(G, dtype=jnp.float32)

    # conv1 block-diag: rows r*oc1+m, cols r*ic1+c.
    w1bd = jnp.kron(eye, w1)                                      # (G*32, G*C_IN)
    b1bd = jnp.tile(p["conv1_b"], G).reshape(G * oc1, 1)
    # conv2 block-diag: rows n*G+r, cols r*oc1+m (channel-major output rows).
    w2bd = (w2[:, None, None, :] * eye[None, :, :, None]).reshape(oc2 * G, G * oc1)
    b2bd = jnp.repeat(p["conv2_b"], G).reshape(oc2 * G, 1)

    # fc4: K = n*121+p  ->  padded K = n*128+p, zero rows for p in [121, 128).
    w4 = p["fc4_w"].reshape(n_hidden, oc2, n_pix)                  # [j, n, p]
    w4 = jnp.pad(w4, ((0, 0), (0, 0), (0, p_pad - n_pix)))         # [j, n, 128]
    w4p = jnp.transpose(w4, (1, 2, 0)).reshape(oc2 * p_pad, n_hidden)

    whp = jnp.pad(p["head_w"].T, ((0, 0), (0, nh_pad - n_act)))    # (512, 128)
    bhp = jnp.pad(p["head_b"], (0, nh_pad - n_act)).reshape(1, nh_pad)

    bf, f32 = jnp.bfloat16, jnp.float32
    return {
        "w1bd": w1bd.astype(bf), "b1bd": b1bd.astype(f32),
        "w2bd": w2bd.astype(bf), "b2bd": b2bd.astype(f32),
        "w4p": w4p.astype(bf), "b4": p["fc4_b"].reshape(1, n_hidden).astype(f32),
        "whp": whp.astype(bf), "bhp": bhp.astype(f32),
    }


# ---------------------------------------------------------------------------
# Forward pass (Pallas) and pure-JAX f32 reference.
# ---------------------------------------------------------------------------
def dqn_forward(x, pp, *, n_actions=14, max_tile=MAX_TB):
    """x: (B, in_channels*4, H, W) float32 -> (B, n_actions)."""
    B, C_IN, H, W = x.shape
    P = H * W
    NH = pp["whp"].shape[1]
    C2 = pp["w2bd"].shape[0] // G
    P_PAD = pp["w4p"].shape[0] // C2

    x3 = x.reshape(B, C_IN, P)                 # row-major view, no data movement
    Bp = _round_up(B, G)
    if Bp != B:                                # only when B is not a multiple of 8
        x3 = jnp.pad(x3, ((0, Bp - B), (0, 0), (0, 0)))

    # Batch tile: multiple of 8, capped, and chosen so the grid has >= 2 steps
    # whenever possible so dimension_semantics=("parallel",) can use both v7x
    # TensorCores.  Weights use constant index_maps -> fetched into VMEM once.
    TB = min(max_tile, max(G, _round_up((Bp + 1) // 2, G)))
    n_steps = -(-Bp // TB)

    out = pl.pallas_call(
        dqn_fused_kernel,
        out_shape=jax.ShapeDtypeStruct((Bp, NH), jnp.float32),
        grid=(n_steps,),
        in_specs=[
            pl.BlockSpec((TB, C_IN, P), lambda i: (i, 0, 0)),
            pl.BlockSpec(pp["w1bd"].shape, lambda i: (0, 0)),
            pl.BlockSpec(pp["b1bd"].shape, lambda i: (0, 0)),
            pl.BlockSpec(pp["w2bd"].shape, lambda i: (0, 0)),
            pl.BlockSpec(pp["b2bd"].shape, lambda i: (0, 0)),
            pl.BlockSpec(pp["w4p"].shape, lambda i: (0, 0)),
            pl.BlockSpec(pp["b4"].shape, lambda i: (0, 0)),
            pl.BlockSpec(pp["whp"].shape, lambda i: (0, 0)),
            pl.BlockSpec(pp["bhp"].shape, lambda i: (0, 0)),
        ],
        out_specs=pl.BlockSpec((TB, NH), lambda i: (i, 0)),
        scratch_shapes=[pltpu.VMEM((TB, C2 * P_PAD), jnp.float32)],
        compiler_params=pltpu.CompilerParams(
            dimension_semantics=("parallel",),
            vmem_limit_bytes=32 * 1024 * 1024),
    )(x3, pp["w1bd"], pp["b1bd"], pp["w2bd"], pp["b2bd"],
      pp["w4p"], pp["b4"], pp["whp"], pp["bhp"])
    return out[:B, :n_actions]


def dqn_reference(x, p):
    """Pure-JAX float32 replica of the PyTorch forward()."""
    B = x.shape[0]
    w1 = p["conv1_w"][:, :, 0, 0]
    w2 = p["conv2_w"][:, :, 0, 0]
    h = jnp.einsum("oc,bchw->bohw", w1, x) + p["conv1_b"][None, :, None, None]
    h = jax.nn.relu(h)
    h = jnp.einsum("oc,bchw->bohw", w2, h) + p["conv2_b"][None, :, None, None]
    h = jax.nn.relu(h)
    h = h.reshape(B, -1)                       # NCHW flatten == x.view(B, -1)
    h = jax.nn.relu(h @ p["fc4_w"].T + p["fc4_b"])
    return h @ p["head_w"].T + p["head_b"]


# ---------------------------------------------------------------------------
# Deterministic synthetic parameters (shapes from the module definition).
# ---------------------------------------------------------------------------
def init_params(key, in_channels=4, n_actions=14, h=11, w=11):
    c_in = in_channels * 4
    n_feat = h * w * 16
    ks = jax.random.split(key, 8)

    def nrm(k, shape, scale):
        return jax.random.normal(k, shape, jnp.float32) * scale

    return {
        "conv1_w": nrm(ks[0], (32, c_in, 1, 1), 0.25),
        "conv1_b": nrm(ks[1], (32,), 0.1),
        "conv2_w": nrm(ks[2], (16, 32, 1, 1), 0.25),
        "conv2_b": nrm(ks[3], (16,), 0.1),
        "fc4_w": nrm(ks[4], (512, n_feat), 0.03),
        "fc4_b": nrm(ks[5], (512,), 0.1),
        "head_w": nrm(ks[6], (n_actions, 512), 0.06),
        "head_b": nrm(ks[7], (n_actions,), 0.1),
    }


if __name__ == "__main__":
    key = jax.random.PRNGKey(0)
    kx, kp = jax.random.split(key)

    B, IN_CH, N_ACT = 2, 4, 14
    H = W = 11                       # fc4 expects 11*11*16 flattened features
    x = jax.random.normal(kx, (B, IN_CH * 4, H, W), jnp.float32)

    params = init_params(kp, in_channels=IN_CH, n_actions=N_ACT, h=H, w=W)
    pp = preprocess_params(params)   # one-time weight relayout, outside jit

    fwd = jax.jit(functools.partial(dqn_forward, n_actions=N_ACT))
    out = jax.block_until_ready(fwd(x, pp))

    ref = dqn_reference(x, params)
    assert out.shape == (B, N_ACT), out.shape
    assert bool(jnp.all(jnp.isfinite(out)))
    max_err = float(jnp.max(jnp.abs(out - ref)))
    # bf16 matmul operands vs f32 reference -> loose-ish tolerance.
    assert jnp.allclose(out, ref, atol=5e-2, rtol=5e-2), max_err

    print("KERNEL_OK")
</pallas_src>

<mosaic_0001>
module attributes {stable_mosaic.version = 11 : i64} {
  func.func @dqn_fused_kernel(%arg0: i32, %arg1: memref<8x16x121xf32, #tpu.memory_space<vmem>>, %arg2: memref<256x128xbf16, #tpu.memory_space<vmem>>, %arg3: memref<256x1xf32, #tpu.memory_space<vmem>>, %arg4: memref<128x256xbf16, #tpu.memory_space<vmem>>, %arg5: memref<128x1xf32, #tpu.memory_space<vmem>>, %arg6: memref<2048x512xbf16, #tpu.memory_space<vmem>>, %arg7: memref<1x512xf32, #tpu.memory_space<vmem>>, %arg8: memref<512x128xbf16, #tpu.memory_space<vmem>>, %arg9: memref<1x128xf32, #tpu.memory_space<vmem>>, %arg10: memref<8x128xf32, #tpu.memory_space<vmem>>, %arg11: memref<8x2048xf32, #tpu.memory_space<vmem>>) attributes {dimension_semantics = [#tpu.dimension_semantics<parallel>], iteration_bounds = array<i64: 1>, scalar_prefetch = 0 : i64, scratch_operands = 1 : i64, tpu.core_type = #tpu.core_type<tc>, window_params = [{transform_indices = @transform_0, window_bounds = array<i64: 8, 16, 121>}, {pipeline_mode = #tpu.pipeline_mode<synchronous>, transform_indices = @transform_1, window_bounds = array<i64: 256, 128>}, {pipeline_mode = #tpu.pipeline_mode<synchronous>, transform_indices = @transform_2, window_bounds = array<i64: 256, 1>}, {pipeline_mode = #tpu.pipeline_mode<synchronous>, transform_indices = @transform_3, window_bounds = array<i64: 128, 256>}, {pipeline_mode = #tpu.pipeline_mode<synchronous>, transform_indices = @transform_4, window_bounds = array<i64: 128, 1>}, {pipeline_mode = #tpu.pipeline_mode<synchronous>, transform_indices = @transform_5, window_bounds = array<i64: 2048, 512>}, {pipeline_mode = #tpu.pipeline_mode<synchronous>, transform_indices = @transform_6, window_bounds = array<i64: 1, 512>}, {pipeline_mode = #tpu.pipeline_mode<synchronous>, transform_indices = @transform_7, window_bounds = array<i64: 512, 128>}, {pipeline_mode = #tpu.pipeline_mode<synchronous>, transform_indices = @transform_8, window_bounds = array<i64: 1, 128>}, {transform_indices = @transform_9, window_bounds = array<i64: 8, 128>}]} {
    %cst = arith.constant 0.000000e+00 : f32
    %0 = vector.broadcast %cst : f32 to vector<8x2048xf32>
    %c0 = arith.constant 0 : index
    %c0_0 = arith.constant 0 : index
    %1 = vector.load %arg11[%c0, %c0_0] : memref<8x2048xf32, #tpu.memory_space<vmem>>, vector<8x2048xf32>
    tpu.vector_store %arg11[%c0, %c0_0], %0 {strides = array<i32>} : memref<8x2048xf32, #tpu.memory_space<vmem>>, vector<8x2048xf32>,
    %c0_1 = arith.constant 0 : index
    %c0_2 = arith.constant 0 : index
    %c0_3 = arith.constant 0 : index
    %2 = vector.load %arg1[%c0_1, %c0_2, %c0_3] : memref<8x16x121xf32, #tpu.memory_space<vmem>>, vector<8x16x121xf32>
    %3 = arith.truncf %2 : vector<8x16x121xf32> to vector<8x16x121xbf16>
    %4 = vector.shape_cast %3 : vector<8x16x121xbf16> to vector<128x121xbf16>
    %c0_4 = arith.constant 0 : index
    %c0_5 = arith.constant 0 : index
    %5 = vector.load %arg2[%c0_4, %c0_5] : memref<256x128xbf16, #tpu.memory_space<vmem>>, vector<256x128xbf16>
    %c0_6 = arith.constant 0 : index
    %c0_7 = arith.constant 0 : index
    %6 = vector.load %arg3[%c0_6, %c0_7] : memref<256x1xf32, #tpu.memory_space<vmem>>, vector<256x1xf32>
    %c0_8 = arith.constant 0 : index
    %c0_9 = arith.constant 0 : index
    %7 = vector.load %arg4[%c0_8, %c0_9] : memref<128x256xbf16, #tpu.memory_space<vmem>>, vector<128x256xbf16>
    %c0_10 = arith.constant 0 : index
    %c0_11 = arith.constant 0 : index
    %8 = vector.load %arg5[%c0_10, %c0_11] : memref<128x1xf32, #tpu.memory_space<vmem>>, vector<128x1xf32>
    %cst_12 = arith.constant dense<0.000000e+00> : vector<256x121xf32>
    %9 = tpu.matmul %5, %4, %cst_12 {dimension_numbers = #tpu.dot_dimension_numbers<[1], [0], [0], [1], [0, 0, 1, 1], [], []>} : vector<256x128xbf16>, vector<128x121xbf16>, vector<256x121xf32> -> vector<256x121xf32>
    %10 = vector.broadcast %6 : vector<256x1xf32> to vector<256x121xf32>
    %11 = arith.addf %9, %10 : vector<256x121xf32>
    %cst_13 = arith.constant 0.000000e+00 : f32
    %12 = vector.broadcast %cst_13 : f32 to vector<256x121xf32>
    %13 = arith.maximumf %11, %12 : vector<256x121xf32>
    %14 = arith.truncf %13 : vector<256x121xf32> to vector<256x121xbf16>
    %cst_14 = arith.constant dense<0.000000e+00> : vector<128x121xf32>
    %15 = tpu.matmul %7, %14, %cst_14 {dimension_numbers = #tpu.dot_dimension_numbers<[1], [0], [0], [1], [0, 0, 1, 1], [], []>} : vector<128x256xbf16>, vector<256x121xbf16>, vector<128x121xf32> -> vector<128x121xf32>
    %16 = vector.broadcast %8 : vector<128x1xf32> to vector<128x121xf32>
    %17 = arith.addf %15, %16 : vector<128x121xf32>
    %cst_15 = arith.constant 0.000000e+00 : f32
    %18 = vector.broadcast %cst_15 : f32 to vector<128x121xf32>
    %19 = arith.maximumf %17, %18 : vector<128x121xf32>
    %20 = vector.extract_strided_slice %19 {offsets = [0, 0], sizes = [8, 121], strides = [1, 1]} : vector<128x121xf32> to vector<8x121xf32>
    %c0_16 = arith.constant 0 : index
    %c0_17 = arith.constant 0 : index
    %21 = vector.load %arg11[%c0_16, %c0_17] : memref<8x2048xf32, #tpu.memory_space<vmem>>, vector<8x121xf32>
    tpu.vector_store %arg11[%c0_16, %c0_17], %20 {strides = array<i32>} : memref<8x2048xf32, #tpu.memory_space<vmem>>, vector<8x121xf32>,
    %22 = vector.extract_strided_slice %19 {offsets = [8, 0], sizes = [8, 121], strides = [1, 1]} : vector<128x121xf32> to vector<8x121xf32>
    %c0_18 = arith.constant 0 : index
    %c128 = arith.constant 128 : index
    %23 = vector.load %arg11[%c0_18, %c128] : memref<8x2048xf32, #tpu.memory_space<vmem>>, vector<8x121xf32>
    tpu.vector_store %arg11[%c0_18, %c128], %22 {strides = array<i32>} : memref<8x2048xf32, #tpu.memory_space<vmem>>, vector<8x121xf32>,
    %24 = vector.extract_strided_slice %19 {offsets = [16, 0], sizes = [8, 121], strides = [1, 1]} : vector<128x121xf32> to vector<8x121xf32>
    %c0_19 = arith.constant 0 : index
    %c256 = arith.constant 256 : index
    %25 = vector.load %arg11[%c0_19, %c256] : memref<8x2048xf32, #tpu.memory_space<vmem>>, vector<8x121xf32>
    tpu.vector_store %arg11[%c0_19, %c256], %24 {strides = array<i32>} : memref<8x2048xf32, #tpu.memory_space<vmem>>, vector<8x121xf32>,
    %26 = vector.extract_strided_slice %19 {offsets = [24, 0], sizes = [8, 121], strides = [1, 1]} : vector<128x121xf32> to vector<8x121xf32>
    %c0_20 = arith.constant 0 : index
    %c384 = arith.constant 384 : index
    %27 = vector.load %arg11[%c0_20, %c384] : memref<8x2048xf32, #tpu.memory_space<vmem>>, vector<8x121xf32>
    tpu.vector_store %arg11[%c0_20, %c384], %26 {strides = array<i32>} : memref<8x2048xf32, #tpu.memory_space<vmem>>, vector<8x121xf32>,
    %28 = vector.extract_strided_slice %19 {offsets = [32, 0], sizes = [8, 121], strides = [1, 1]} : vector<128x121xf32> to vector<8x121xf32>
    %c0_21 = arith.constant 0 : index
    %c512 = arith.constant 512 : index
    %29 = vector.load %arg11[%c0_21, %c512] : memref<8x2048xf32, #tpu.memory_space<vmem>>, vector<8x121xf32>
    tpu.vector_store %arg11[%c0_21, %c512], %28 {strides = array<i32>} : memref<8x2048xf32, #tpu.memory_space<vmem>>, vector<8x121xf32>,
    %30 = vector.extract_strided_slice %19 {offsets = [40, 0], sizes = [8, 121], strides = [1, 1]} : vector<128x121xf32> to vector<8x121xf32>
    %c0_22 = arith.constant 0 : index
    %c640 = arith.constant 640 : index
    %31 = vector.load %arg11[%c0_22, %c640] : memref<8x2048xf32, #tpu.memory_space<vmem>>, vector<8x121xf32>
    tpu.vector_store %arg11[%c0_22, %c640], %30 {strides = array<i32>} : memref<8x2048xf32, #tpu.memory_space<vmem>>, vector<8x121xf32>,
    %32 = vector.extract_strided_slice %19 {offsets = [48, 0], sizes = [8, 121], strides = [1, 1]} : vector<128x121xf32> to vector<8x121xf32>
    %c0_23 = arith.constant 0 : index
    %c768 = arith.constant 768 : index
    %33 = vector.load %arg11[%c0_23, %c768] : memref<8x2048xf32, #tpu.memory_space<vmem>>, vector<8x121xf32>
    tpu.vector_store %arg11[%c0_23, %c768], %32 {strides = array<i32>} : memref<8x2048xf32, #tpu.memory_space<vmem>>, vector<8x121xf32>,
    %34 = vector.extract_strided_slice %19 {offsets = [56, 0], sizes = [8, 121], strides = [1, 1]} : vector<128x121xf32> to vector<8x121xf32>
    %c0_24 = arith.constant 0 : index
    %c896 = arith.constant 896 : index
    %35 = vector.load %arg11[%c0_24, %c896] : memref<8x2048xf32, #tpu.memory_space<vmem>>, vector<8x121xf32>
    tpu.vector_store %arg11[%c0_24, %c896], %34 {strides = array<i32>} : memref<8x2048xf32, #tpu.memory_space<vmem>>, vector<8x121xf32>,
    %36 = vector.extract_strided_slice %19 {offsets = [64, 0], sizes = [8, 121], strides = [1, 1]} : vector<128x121xf32> to vector<8x121xf32>
    %c0_25 = arith.constant 0 : index
    %c1024 = arith.constant 1024 : index
    %37 = vector.load %arg11[%c0_25, %c1024] : memref<8x2048xf32, #tpu.memory_space<vmem>>, vector<8x121xf32>
    tpu.vector_store %arg11[%c0_25, %c1024], %36 {strides = array<i32>} : memref<8x2048xf32, #tpu.memory_space<vmem>>, vector<8x121xf32>,
    %38 = vector.extract_strided_slice %19 {offsets = [72, 0], sizes = [8, 121], strides = [1, 1]} : vector<128x121xf32> to vector<8x121xf32>
    %c0_26 = arith.constant 0 : index
    %c1152 = arith.constant 1152 : index
    %39 = vector.load %arg11[%c0_26, %c1152] : memref<8x2048xf32, #tpu.memory_space<vmem>>, vector<8x121xf32>
    tpu.vector_store %arg11[%c0_26, %c1152], %38 {strides = array<i32>} : memref<8x2048xf32, #tpu.memory_space<vmem>>, vector<8x121xf32>,
    %40 = vector.extract_strided_slice %19 {offsets = [80, 0], sizes = [8, 121], strides = [1, 1]} : vector<128x121xf32> to vector<8x121xf32>
    %c0_27 = arith.constant 0 : index
    %c1280 = arith.constant 1280 : index
    %41 = vector.load %arg11[%c0_27, %c1280] : memref<8x2048xf32, #tpu.memory_space<vmem>>, vector<8x121xf32>
    tpu.vector_store %arg11[%c0_27, %c1280], %40 {strides = array<i32>} : memref<8x2048xf32, #tpu.memory_space<vmem>>, vector<8x121xf32>,
    %42 = vector.extract_strided_slice %19 {offsets = [88, 0], sizes = [8, 121], strides = [1, 1]} : vector<128x121xf32> to vector<8x121xf32>
    %c0_28 = arith.constant 0 : index
    %c1408 = arith.constant 1408 : index
    %43 = vector.load %arg11[%c0_28, %c1408] : memref<8x2048xf32, #tpu.memory_space<vmem>>, vector<8x121xf32>
    tpu.vector_store %arg11[%c0_28, %c1408], %42 {strides = array<i32>} : memref<8x2048xf32, #tpu.memory_space<vmem>>, vector<8x121xf32>,
    %44 = vector.extract_strided_slice %19 {offsets = [96, 0], sizes = [8, 121], strides = [1, 1]} : vector<128x121xf32> to vector<8x121xf32>
    %c0_29 = arith.constant 0 : index
    %c1536 = arith.constant 1536 : index
    %45 = vector.load %arg11[%c0_29, %c1536] : memref<8x2048xf32, #tpu.memory_space<vmem>>, vector<8x121xf32>
    tpu.vector_store %arg11[%c0_29, %c1536], %44 {strides = array<i32>} : memref<8x2048xf32, #tpu.memory_space<vmem>>, vector<8x121xf32>,
    %46 = vector.extract_strided_slice %19 {offsets = [104, 0], sizes = [8, 121], strides = [1, 1]} : vector<128x121xf32> to vector<8x121xf32>
    %c0_30 = arith.constant 0 : index
    %c1664 = arith.constant 1664 : index
    %47 = vector.load %arg11[%c0_30, %c1664] : memref<8x2048xf32, #tpu.memory_space<vmem>>, vector<8x121xf32>
    tpu.vector_store %arg11[%c0_30, %c1664], %46 {strides = array<i32>} : memref<8x2048xf32, #tpu.memory_space<vmem>>, vector<8x121xf32>,
    %48 = vector.extract_strided_slice %19 {offsets = [112, 0], sizes = [8, 121], strides = [1, 1]} : vector<128x121xf32> to vector<8x121xf32>
    %c0_31 = arith.constant 0 : index
    %c1792 = arith.constant 1792 : index
    %49 = vector.load %arg11[%c0_31, %c1792] : memref<8x2048xf32, #tpu.memory_space<vmem>>, vector<8x121xf32>
    tpu.vector_store %arg11[%c0_31, %c1792], %48 {strides = array<i32>} : memref<8x2048xf32, #tpu.memory_space<vmem>>, vector<8x121xf32>,
    %50 = vector.extract_strided_slice %19 {offsets = [120, 0], sizes = [8, 121], strides = [1, 1]} : vector<128x121xf32> to vector<8x121xf32>
    %c0_32 = arith.constant 0 : index
    %c1920 = arith.constant 1920 : index
    %51 = vector.load %arg11[%c0_32, %c1920] : memref<8x2048xf32, #tpu.memory_space<vmem>>, vector<8x121xf32>
    tpu.vector_store %arg11[%c0_32, %c1920], %50 {strides = array<i32>} : memref<8x2048xf32, #tpu.memory_space<vmem>>, vector<8x121xf32>,
    %c0_33 = arith.constant 0 : index
    %c0_34 = arith.constant 0 : index
    %52 = vector.load %arg11[%c0_33, %c0_34] : memref<8x2048xf32, #tpu.memory_space<vmem>>, vector<8x2048xf32>
    %53 = arith.truncf %52 : vector<8x2048xf32> to vector<8x2048xbf16>
    %c0_35 = arith.constant 0 : index
    %c0_36 = arith.constant 0 : index
    %54 = vector.load %arg6[%c0_35, %c0_36] : memref<2048x512xbf16, #tpu.memory_space<vmem>>, vector<2048x512xbf16>
    %cst_37 = arith.constant dense<0.000000e+00> : vector<8x512xf32>
    %55 = tpu.matmul %53, %54, %cst_37 {dimension_numbers = #tpu.dot_dimension_numbers<[1], [0], [0], [1], [0, 0, 1, 1], [], []>} : vector<8x2048xbf16>, vector<2048x512xbf16>, vector<8x512xf32> -> vector<8x512xf32>
    %c0_38 = arith.constant 0 : index
    %c0_39 = arith.constant 0 : index
    %56 = vector.load %arg7[%c0_38, %c0_39] : memref<1x512xf32, #tpu.memory_space<vmem>>, vector<1x512xf32>
    %57 = vector.broadcast %56 : vector<1x512xf32> to vector<8x512xf32>
    %58 = arith.addf %55, %57 : vector<8x512xf32>
    %cst_40 = arith.constant 0.000000e+00 : f32
    %59 = vector.broadcast %cst_40 : f32 to vector<8x512xf32>
    %60 = arith.maximumf %58, %59 : vector<8x512xf32>
    %61 = arith.truncf %60 : vector<8x512xf32> to vector<8x512xbf16>
    %c0_41 = arith.constant 0 : index
    %c0_42 = arith.constant 0 : index
    %62 = vector.load %arg8[%c0_41, %c0_42] : memref<512x128xbf16, #tpu.memory_space<vmem>>, vector<512x128xbf16>
    %cst_43 = arith.constant dense<0.000000e+00> : vector<8x128xf32>
    %63 = tpu.matmul %61, %62, %cst_43 {dimension_numbers = #tpu.dot_dimension_numbers<[1], [0], [0], [1], [0, 0, 1, 1], [], []>} : vector<8x512xbf16>, vector<512x128xbf16>, vector<8x128xf32> -> vector<8x128xf32>
    %c0_44 = arith.constant 0 : index
    %c0_45 = arith.constant 0 : index
    %64 = vector.load %arg9[%c0_44, %c0_45] : memref<1x128xf32, #tpu.memory_space<vmem>>, vector<1x128xf32>
    %65 = vector.broadcast %64 : vector<1x128xf32> to vector<8x128xf32>
    %66 = arith.addf %63, %65 : vector<8x128xf32>
    %c0_46 = arith.constant 0 : index
    %c0_47 = arith.constant 0 : index
    %67 = vector.load %arg10[%c0_46, %c0_47] : memref<8x128xf32, #tpu.memory_space<vmem>>, vector<8x128xf32>
    tpu.vector_store %arg10[%c0_46, %c0_47], %66 {strides = array<i32>} : memref<8x128xf32, #tpu.memory_space<vmem>>, vector<8x128xf32>,
    return
  }
  func.func @transform_0(%arg0: i32) -> (i32, i32, i32) {
    %c0_i32 = arith.constant 0 : i32
    %c0_i32_0 = arith.constant 0 : i32
    %c0_i32_1 = arith.constant 0 : i32
    return %arg0, %c0_i32, %c0_i32_0 : i32, i32, i32
  }
  func.func @transform_1(%arg0: i32) -> (i32, i32) {
    %c0_i32 = arith.constant 0 : i32
    %c0_i32_0 = arith.constant 0 : i32
    %c0_i32_1 = arith.constant 0 : i32
    return %c0_i32, %c0_i32_0 : i32, i32
  }
  func.func @transform_2(%arg0: i32) -> (i32, i32) {
    %c0_i32 = arith.constant 0 : i32
    %c0_i32_0 = arith.constant 0 : i32
    %c0_i32_1 = arith.constant 0 : i32
    return %c0_i32, %c0_i32_0 : i32, i32
  }
  func.func @transform_3(%arg0: i32) -> (i32, i32) {
    %c0_i32 = arith.constant 0 : i32
    %c0_i32_0 = arith.constant 0 : i32
    %c0_i32_1 = arith.constant 0 : i32
    return %c0_i32, %c0_i32_0 : i32, i32
  }
  func.func @transform_4(%arg0: i32) -> (i32, i32) {
    %c0_i32 = arith.constant 0 : i32
    %c0_i32_0 = arith.constant 0 : i32
    %c0_i32_1 = arith.constant 0 : i32
    return %c0_i32, %c0_i32_0 : i32, i32
  }
  func.func @transform_5(%arg0: i32) -> (i32, i32) {
    %c0_i32 = arith.constant 0 : i32
    %c0_i32_0 = arith.constant 0 : i32
    %c0_i32_1 = arith.constant 0 : i32
    return %c0_i32, %c0_i32_0 : i32, i32
  }
  func.func @transform_6(%arg0: i32) -> (i32, i32) {
    %c0_i32 = arith.constant 0 : i32
    %c0_i32_0 = arith.constant 0 : i32
    %c0_i32_1 = arith.constant 0 : i32
    return %c0_i32, %c0_i32_0 : i32, i32
  }
  func.func @transform_7(%arg0: i32) -> (i32, i32) {
    %c0_i32 = arith.constant 0 : i32
    %c0_i32_0 = arith.constant 0 : i32
    %c0_i32_1 = arith.constant 0 : i32
    return %c0_i32, %c0_i32_0 : i32, i32
  }
  func.func @transform_8(%arg0: i32) -> (i32, i32) {
    %c0_i32 = arith.constant 0 : i32
    %c0_i32_0 = arith.constant 0 : i32
    %c0_i32_1 = arith.constant 0 : i32
    return %c0_i32, %c0_i32_0 : i32, i32
  }
  func.func @transform_9(%arg0: i32) -> (i32, i32) {
    %c0_i32 = arith.constant 0 : i32
    %c0_i32_0 = arith.constant 0 : i32
    return %arg0, %c0_i32 : i32, i32
  }
}

</mosaic_0001>

<llo_original>
// kernel: dqn_forward.1
$region0: #{dqn_forward.1}
  #allocation0 [shape = 'u32[]', space=smem, size = 0x4, offset = 0x4, fixed_abs, tag = 'smem constant byte address 0x4 - core index']
  #allocation1 [shape = 'u32[72,128]{1,0:T(1,128)}', space=vmem, size = 0x9000, scoped, tag = 'internal scratch']
  #allocation2 [shape = 'f32[8,2048]{1,0:T(8,128)}', space=vmem, size = 0x10000, scoped, tag = 'scratch operand']
  %s0 = inlined_call_operand.vmem [shape: f32[8,16,121], index: 0, kind: input, shape index: {}]
  %s1 = inlined_call_operand.hbm [shape: bf16[256,128], index: 1, kind: input, shape index: {}]
  %s2 = inlined_call_operand.vmem [shape: f32[256,1], index: 2, kind: input, shape index: {}]
  %s3 = inlined_call_operand.hbm [shape: bf16[128,256], index: 3, kind: input, shape index: {}]
  %s4 = inlined_call_operand.vmem [shape: f32[128,1], index: 4, kind: input, shape index: {}]
  %s5 = inlined_call_operand.hbm [shape: bf16[2048,512], index: 5, kind: input, shape index: {}]
  %s6 = inlined_call_operand.hbm [shape: f32[1,512], index: 6, kind: input, shape index: {}]
  %s7 = inlined_call_operand.hbm [shape: bf16[512,128], index: 7, kind: input, shape index: {}]
  %s8 = inlined_call_operand.hbm [shape: f32[1,128], index: 8, kind: input, shape index: {}]
  %s9 = inlined_call_operand.vmem [shape: f32[8,128], index: 9, kind: output, shape index: {}]
  %s10 = sld [smem:[#allocation0]]
  $region70: #{dqn_forward.1} parent=0
    _
  %s12 = ssub.s32 1, %s10
  %s13 = scalar_select 0, %s12, %s10
  $region1: #{dqn_forward.1} parent=0
    #allocation3 [shape = 'u8[65536]{0}', space=vmem, size = 0x10000, scoped, tag = 'input window, operand 1, single buffered']
    #allocation4 [shape = 's32[1]{0}', space=sflag, size = 0x4, scoped, tag = 'scoped memory for dqn_forward.1']
    #allocation5 [shape = 'u8[65536]{0}', space=vmem, size = 0x10000, scoped, tag = 'input window, operand 3, single buffered']
    #allocation6 [shape = 's32[1]{0}', space=sflag, size = 0x4, scoped, tag = 'scoped memory for dqn_forward.1']
    #allocation7 [shape = 'u8[2097152]{0}', space=vmem, size = 0x200000, scoped, tag = 'input window, operand 5, single buffered']
    #allocation8 [shape = 'u8[2048]{0}', space=vmem, size = 0x800, scoped, tag = 'input window, operand 6, single buffered']
    #allocation9 [shape = 's32[1]{0}', space=sflag, size = 0x4, scoped, tag = 'scoped memory for dqn_forward.1']
    #allocation10 [shape = 'u8[131072]{0}', space=vmem, size = 0x20000, scoped, tag = 'input window, operand 7, single buffered']
    #allocation11 [shape = 'u8[512]{0}', space=vmem, size = 0x400, scoped, tag = 'input window, operand 8, single buffered']
    #allocation12 [shape = 's32[1]{0}', space=sflag, size = 0x4, scoped, tag = 'scoped memory for dqn_forward.1']
    %14 = vsyncpa [#allocation4], 0
    %15 = vsyncpa [#allocation6], 0
    %16 = vsyncpa [#allocation9], 0
    %17 = vsyncpa [#allocation12], 0
    // Predicated region
    $region2: #{dqn_forward.1} parent=1 // pred_check
      _
    $region3: #{dqn_forward.1} parent=1 // pred_check_branch
      %19 = sbr.rel (0) target = $region5
    $region4: #{dqn_forward.1} parent=1 // pred_region
      _
    $region5: #{dqn_forward.1} parent=1 // pred_fallthru
      _
    // Predicated region
    $region6: #{dqn_forward.1} parent=1 // pred_check
      _
    $region7: #{dqn_forward.1} parent=1 // pred_check_branch
      %21 = sbr.rel (0) target = $region9
    $region8: #{dqn_forward.1} parent=1 // pred_region
      %23 = vsyncadd [#allocation4], 0
      %s24 = sshll.u32 %s1, 4
      %s25 = int_to_ptr.hbm [resolvable:$true] %s24
      %s26 = sshll.u32 [#allocation3], 4
      %s27 = int_to_ptr.vmem [resolvable:$true] %s26
      %32 = dma.hbm_to_vmem [thread:$0]  %s25, 2048, %s27, [#allocation4], 64, 64, 4
    $region9: #{dqn_forward.1} parent=1 // pred_fallthru
      _
    // Predicated region
    $region10: #{dqn_forward.1} parent=1 // pred_check
      _
    $region11: #{dqn_forward.1} parent=1 // pred_check_branch
      %34 = sbr.rel (0) target = $region13
    $region12: #{dqn_forward.1} parent=1 // pred_region
      _
    $region13: #{dqn_forward.1} parent=1 // pred_fallthru
      _
    // Predicated region
    $region14: #{dqn_forward.1} parent=1 // pred_check
      _
    $region15: #{dqn_forward.1} parent=1 // pred_check_branch
      %36 = sbr.rel (0) target = $region17
    $region16: #{dqn_forward.1} parent=1 // pred_region
      %38 = vsyncadd [#allocation6], 0
      %s39 = sshll.u32 %s3, 4
      %s40 = int_to_ptr.hbm [resolvable:$true] %s39
      %s41 = sshll.u32 [#allocation5], 4
      %s42 = int_to_ptr.vmem [resolvable:$true] %s41
      %47 = dma.hbm_to_vmem [thread:$0]  %s40, 2048, %s42, [#allocation6], 128, 128, 8
    $region17: #{dqn_forward.1} parent=1 // pred_fallthru
      _
    // Predicated region
    $region18: #{dqn_forward.1} parent=1 // pred_check
      _
    $region19: #{dqn_forward.1} parent=1 // pred_check_branch
      %49 = sbr.rel (0) target = $region21
    $region20: #{dqn_forward.1} parent=1 // pred_region
      _
    $region21: #{dqn_forward.1} parent=1 // pred_fallthru
      _
    // Predicated region
    $region22: #{dqn_forward.1} parent=1 // pred_check
      _
    $region23: #{dqn_forward.1} parent=1 // pred_check_branch
      %51 = sbr.rel (0) target = $region25
    $region24: #{dqn_forward.1} parent=1 // pred_region
      %53 = vsyncadd [#allocation6], 0
      %s54 = sshll.u32 %s5, 4
      %s55 = int_to_ptr.hbm [resolvable:$true] %s54
      %s56 = sshll.u32 [#allocation7], 4
      %s57 = int_to_ptr.vmem [resolvable:$true] %s56
      %62 = dma.hbm_to_vmem [thread:$0]  %s55, 65536, %s57, [#allocation6], 256, 256, 16
    $region25: #{dqn_forward.1} parent=1 // pred_fallthru
      _
    // Predicated region
    $region26: #{dqn_forward.1} parent=1 // pred_check
      _
    $region27: #{dqn_forward.1} parent=1 // pred_check_branch
      %64 = sbr.rel (0) target = $region29
    $region28: #{dqn_forward.1} parent=1 // pred_region
      %66 = vsyncadd [#allocation9], 0
      %s68 = sshll.u32 %s6, 4
      %s69 = int_to_ptr.hbm [resolvable:$true] %s68
      %s70 = sshll.u32 [#allocation8], 4
      %s71 = int_to_ptr.vmem [resolvable:$true] %s70
      %73 = dma.hbm_to_vmem [thread:$0]  %s69, 64, %s71, [#allocation9]
    $region29: #{dqn_forward.1} parent=1 // pred_fallthru
      _
    // Predicated region
    $region30: #{dqn_forward.1} parent=1 // pred_check
      _
    $region31: #{dqn_forward.1} parent=1 // pred_check_branch
      %75 = sbr.rel (0) target = $region33
    $region32: #{dqn_forward.1} parent=1 // pred_region
      %77 = vsyncadd [#allocation9], 0
      %s78 = sshll.u32 %s7, 4
      %s79 = int_to_ptr.hbm [resolvable:$true] %s78
      %s80 = sshll.u32 [#allocation10], 4
      %s81 = int_to_ptr.vmem [resolvable:$true] %s80
      %86 = dma.hbm_to_vmem [thread:$0]  %s79, 4096, %s81, [#allocation9], 64, 64, 4
    $region33: #{dqn_forward.1} parent=1 // pred_fallthru
      _
    // Predicated region
    $region34: #{dqn_forward.1} parent=1 // pred_check
      _
    $region35: #{dqn_forward.1} parent=1 // pred_check_branch
      %88 = sbr.rel (0) target = $region37
    $region36: #{dqn_forward.1} parent=1 // pred_region
      %90 = vsyncadd [#allocation12], 0
      %s92 = sshll.u32 %s8, 4
      %s93 = int_to_ptr.hbm [resolvable:$true] %s92
      %s94 = sshll.u32 [#allocation11], 4
      %s95 = int_to_ptr.vmem [resolvable:$true] %s94
      %97 = dma.hbm_to_vmem [thread:$0]  %s93, 16, %s95, [#allocation12]
    $region37: #{dqn_forward.1} parent=1 // pred_fallthru
      _
    // Predicated region
    $region38: #{dqn_forward.1} parent=1 // pred_check
      _
    $region39: #{dqn_forward.1} parent=1 // pred_check_branch
      %99 = sbr.rel (0) target = $region41
    $region40: #{dqn_forward.1} parent=1 // pred_region
      %101 = dma.done [#allocation4], 2048
    $region41: #{dqn_forward.1} parent=1 // pred_fallthru
      _
    // Predicated region
    $region42: #{dqn_forward.1} parent=1 // pred_check
      _
    $region43: #{dqn_forward.1} parent=1 // pred_check_branch
      %103 = sbr.rel (0) target = $region45
    $region44: #{dqn_forward.1} parent=1 // pred_region
      %105 = dma.done [#allocation6], 2048
    $region45: #{dqn_forward.1} parent=1 // pred_fallthru
      _
    // Predicated region
    $region46: #{dqn_forward.1} parent=1 // pred_check
      _
    $region47: #{dqn_forward.1} parent=1 // pred_check_branch
      %107 = sbr.rel (0) target = $region49
    $region48: #{dqn_forward.1} parent=1 // pred_region
      %109 = dma.done [#allocation6], 65536
    $region49: #{dqn_forward.1} parent=1 // pred_fallthru
      _
    // Predicated region
    $region50: #{dqn_forward.1} parent=1 // pred_check
      _
    $region51: #{dqn_forward.1} parent=1 // pred_check_branch
      %111 = sbr.rel (0) target = $region53
    $region52: #{dqn_forward.1} parent=1 // pred_region
      %113 = dma.done [#allocation9], 64
    $region53: #{dqn_forward.1} parent=1 // pred_fallthru
      _
    // Predicated region
    $region54: #{dqn_forward.1} parent=1 // pred_check
      _
    $region55: #{dqn_forward.1} parent=1 // pred_check_branch
      %115 = sbr.rel (0) target = $region57
    $region56: #{dqn_forward.1} parent=1 // pred_region
      %117 = dma.done [#allocation9], 4096
    $region57: #{dqn_forward.1} parent=1 // pred_fallthru
      _
    // Predicated region
    $region58: #{dqn_forward.1} parent=1 // pred_check
      _
    $region59: #{dqn_forward.1} parent=1 // pred_check_branch
      %119 = sbr.rel (0) target = $region61
    $region60: #{dqn_forward.1} parent=1 // pred_region
      %121 = dma.done [#allocation12], 16
    $region61: #{dqn_forward.1} parent=1 // pred_fallthru
      _
    %122 = vst [vmem:[#allocation2] sm:$0xff] 0.0
    %123 = vst [vmem:[#allocation2 + $0x8] sm:$0xff] 0.0
    %124 = vst [vmem:[#allocation2 + $0x10] sm:$0xff] 0.0
    %125 = vst [vmem:[#allocation2 + $0x18] sm:$0xff] 0.0
    %126 = vst [vmem:[#allocation2 + $0x20] sm:$0xff] 0.0
    %127 = vst [vmem:[#allocation2 + $0x28] sm:$0xff] 0.0
    %128 = vst [vmem:[#allocation2 + $0x30] sm:$0xff] 0.0
    %129 = vst [vmem:[#allocation2 + $0x38] sm:$0xff] 0.0
    %130 = vst [vmem:[#allocation2 + $0x40] sm:$0xff] 0.0
    %131 = vst [vmem:[#allocation2 + $0x48] sm:$0xff] 0.0
    %132 = vst [vmem:[#allocation2 + $0x50] sm:$0xff] 0.0
    %133 = vst [vmem:[#allocation2 + $0x58] sm:$0xff] 0.0
    %134 = vst [vmem:[#allocation2 + $0x60] sm:$0xff] 0.0
    %135 = vst [vmem:[#allocation2 + $0x68] sm:$0xff] 0.0
    %136 = vst [vmem:[#allocation2 + $0x70] sm:$0xff] 0.0
    %137 = vst [vmem:[#allocation2 + $0x78] sm:$0xff] 0.0
    %v138 = vld [vmem:[%s0] sm:$0xff]
    %v139 = vld [vmem:[%s0 + $0x8] sm:$0xff]
    %v140 = vld [vmem:[%s0 + $0x10] sm:$0xff]
    %v141 = vld [vmem:[%s0 + $0x18] sm:$0xff]
    %v142 = vld [vmem:[%s0 + $0x20] sm:$0xff]
    %v143 = vld [vmem:[%s0 + $0x28] sm:$0xff]
    %v144 = vld [vmem:[%s0 + $0x30] sm:$0xff]
    %v145 = vld [vmem:[%s0 + $0x38] sm:$0xff]
    %v146 = vld [vmem:[%s0 + $0x40] sm:$0xff]
    %v147 = vld [vmem:[%s0 + $0x48] sm:$0xff]
    %v148 = vld [vmem:[%s0 + $0x50] sm:$0xff]
    %v149 = vld [vmem:[%s0 + $0x58] sm:$0xff]
    %v150 = vld [vmem:[%s0 + $0x60] sm:$0xff]
    %v151 = vld [vmem:[%s0 + $0x68] sm:$0xff]
    %v152 = vld [vmem:[%s0 + $0x70] sm:$0xff]
    %v153 = vld [vmem:[%s0 + $0x78] sm:$0xff]
    %v154 = vpack.c.bf16 %v138, %v138
    %v155 = vpack.c.bf16 %v139, %v139
    %v156 = vpack.c.bf16 %v140, %v140
    %v157 = vpack.c.bf16 %v141, %v141
    %v158 = vpack.c.bf16 %v142, %v142
    %v159 = vpack.c.bf16 %v143, %v143
    %v160 = vpack.c.bf16 %v144, %v144
    %v161 = vpack.c.bf16 %v145, %v145
    %v162 = vpack.c.bf16 %v146, %v146
    %v163 = vpack.c.bf16 %v147, %v147
    %v164 = vpack.c.bf16 %v148, %v148
    %v165 = vpack.c.bf16 %v149, %v149
    %v166 = vpack.c.bf16 %v150, %v150
    %v167 = vpack.c.bf16 %v151, %v151
    %v168 = vpack.c.bf16 %v152, %v152
    %v169 = vpack.c.bf16 %v153, %v153
    %v170 = vld [vmem:[#allocation3] sm:$0xf]
    %v171 = vld [vmem:[#allocation3 + $0x4] sm:$0xf]
    %v172 = vld [vmem:[#allocation3 + $0x8] sm:$0xf]
    %v173 = vld [vmem:[#allocation3 + $0xc] sm:$0xf]
    %v174 = vld [vmem:[#allocation3 + $0x10] sm:$0xf]
    %v175 = vld [vmem:[#allocation3 + $0x14] sm:$0xf]
    %v176 = vld [vmem:[#allocation3 + $0x18] sm:$0xf]
    %v177 = vld [vmem:[#allocation3 + $0x1c] sm:$0xf]
    %v178 = vld [vmem:[#allocation3 + $0x20] sm:$0xf]
    %v179 = vld [vmem:[#allocation3 + $0x24] sm:$0xf]
    %v180 = vld [vmem:[#allocation3 + $0x28] sm:$0xf]
    %v181 = vld [vmem:[#allocation3 + $0x2c] sm:$0xf]
    %v182 = vld [vmem:[#allocation3 + $0x30] sm:$0xf]
    %v183 = vld [vmem:[#allocation3 + $0x34] sm:$0xf]
    %v184 = vld [vmem:[#allocation3 + $0x38] sm:$0xf]
    %v185 = vld [vmem:[#allocation3 + $0x3c] sm:$0xf]
    %v186 = vld [vmem:[#allocation3 + $0x40] sm:$0xf]
    %v187 = vld [vmem:[#allocation3 + $0x44] sm:$0xf]
    %v188 = vld [vmem:[#allocation3 + $0x48] sm:$0xf]
    %v189 = vld [vmem:[#allocation3 + $0x4c] sm:$0xf]
    %v190 = vld [vmem:[#allocation3 + $0x50] sm:$0xf]
    %v191 = vld [vmem:[#allocation3 + $0x54] sm:$0xf]
    %v192 = vld [vmem:[#allocation3 + $0x58] sm:$0xf]
    %v193 = vld [vmem:[#allocation3 + $0x5c] sm:$0xf]
    %v194 = vld [vmem:[#allocation3 + $0x60] sm:$0xf]
    %v195 = vld [vmem:[#allocation3 + $0x64] sm:$0xf]
    %v196 = vld [vmem:[#allocation3 + $0x68] sm:$0xf]
    %v197 = vld [vmem:[#allocation3 + $0x6c] sm:$0xf]
    %v198 = vld [vmem:[#allocation3 + $0x70] sm:$0xf]
    %v199 = vld [vmem:[#allocation3 + $0x74] sm:$0xf]
    %v200 = vld [vmem:[#allocation3 + $0x78] sm:$0xf]
    %v201 = vld [vmem:[#allocation3 + $0x7c] sm:$0xf]
    %v202 = vld [vmem:[%s2] sm:$0xff]
    %v203 = vld [vmem:[%s2 + $0x8] sm:$0xff]
    %v204 = vld [vmem:[%s2 + $0x10] sm:$0xff]
    %v205 = vld [vmem:[%s2 + $0x18] sm:$0xff]
    %v206 = vld [vmem:[%s2 + $0x20] sm:$0xff]
    %v207 = vld [vmem:[%s2 + $0x28] sm:$0xff]
    %v208 = vld [vmem:[%s2 + $0x30] sm:$0xff]
    %v209 = vld [vmem:[%s2 + $0x38] sm:$0xff]
    %v210 = vld [vmem:[%s2 + $0x40] sm:$0xff]
    %v211 = vld [vmem:[%s2 + $0x48] sm:$0xff]
    %v212 = vld [vmem:[%s2 + $0x50] sm:$0xff]
    %v213 = vld [vmem:[%s2 + $0x58] sm:$0xff]
    %v214 = vld [vmem:[%s2 + $0x60] sm:$0xff]
    %v215 = vld [vmem:[%s2 + $0x68] sm:$0xff]
    %v216 = vld [vmem:[%s2 + $0x70] sm:$0xff]
    %v217 = vld [vmem:[%s2 + $0x78] sm:$0xff]
    %v218 = vld [vmem:[%s2 + $0x80] sm:$0xff]
    %v219 = vld [vmem:[%s2 + $0x88] sm:$0xff]
    %v220 = vld [vmem:[%s2 + $0x90] sm:$0xff]
    %v221 = vld [vmem:[%s2 + $0x98] sm:$0xff]
    %v222 = vld [vmem:[%s2 + $0xa0] sm:$0xff]
    %v223 = vld [vmem:[%s2 + $0xa8] sm:$0xff]
    %v224 = vld [vmem:[%s2 + $0xb0] sm:$0xff]
    %v225 = vld [vmem:[%s2 + $0xb8] sm:$0xff]
    %v226 = vld [vmem:[%s2 + $0xc0] sm:$0xff]
    %v227 = vld [vmem:[%s2 + $0xc8] sm:$0xff]
    %v228 = vld [vmem:[%s2 + $0xd0] sm:$0xff]
    %v229 = vld [vmem:[%s2 + $0xd8] sm:$0xff]
    %v230 = vld [vmem:[%s2 + $0xe0] sm:$0xff]
    %v231 = vld [vmem:[%s2 + $0xe8] sm:$0xff]
    %v232 = vld [vmem:[%s2 + $0xf0] sm:$0xff]
    %v233 = vld [vmem:[%s2 + $0xf8] sm:$0xff]
    %v234 = vld [vmem:[#allocation5] sm:$0xff]
    %v235 = vld [vmem:[#allocation5 + $0x8] sm:$0xff]
    %v236 = vld [vmem:[#allocation5 + $0x10] sm:$0xff]
    %v237 = vld [vmem:[#allocation5 + $0x18] sm:$0xff]
    %v238 = vld [vmem:[#allocation5 + $0x20] sm:$0xff]
    %v239 = vld [vmem:[#allocation5 + $0x28] sm:$0xff]
    %v240 = vld [vmem:[#allocation5 + $0x30] sm:$0xff]
    %v241 = vld [vmem:[#allocation5 + $0x38] sm:$0xff]
    %v242 = vld [vmem:[#allocation5 + $0x40] sm:$0xff]
    %v243 = vld [vmem:[#allocation5 + $0x48] sm:$0xff]
    %v244 = vld [vmem:[#allocation5 + $0x50] sm:$0xff]
    %v245 = vld [vmem:[#allocation5 + $0x58] sm:$0xff]
    %v246 = vld [vmem:[#allocation5 + $0x60] sm:$0xff]
    %v247 = vld [vmem:[#allocation5 + $0x68] sm:$0xff]
    %v248 = vld [vmem:[#allocation5 + $0x70] sm:$0xff]
    %v249 = vld [vmem:[#allocation5 + $0x78] sm:$0xff]
    %v250 = vld [vmem:[%s4] sm:$0xff]
    %v251 = vld [vmem:[%s4 + $0x8] sm:$0xff]
    %v252 = vld [vmem:[%s4 + $0x10] sm:$0xff]
    %v253 = vld [vmem:[%s4 + $0x18] sm:$0xff]
    %v254 = vld [vmem:[%s4 + $0x20] sm:$0xff]
    %v255 = vld [vmem:[%s4 + $0x28] sm:$0xff]
    %v256 = vld [vmem:[%s4 + $0x30] sm:$0xff]
    %v257 = vld [vmem:[%s4 + $0x38] sm:$0xff]
    %v258 = vld [vmem:[%s4 + $0x40] sm:$0xff]
    %v259 = vld [vmem:[%s4 + $0x48] sm:$0xff]
    %v260 = vld [vmem:[%s4 + $0x50] sm:$0xff]
    %v261 = vld [vmem:[%s4 + $0x58] sm:$0xff]
    %v262 = vld [vmem:[%s4 + $0x60] sm:$0xff]
    %v263 = vld [vmem:[%s4 + $0x68] sm:$0xff]
    %v264 = vld [vmem:[%s4 + $0x70] sm:$0xff]
    %v265 = vld [vmem:[%s4 + $0x78] sm:$0xff]
    %267 = vset.pattern.permute.xlu0 0
    %268 = vperm.xlu0 %267, %v202
    %v269 = vpop.permute.xlu0 %268
    %272 = vset.pattern.permute.xlu0 0
    %273 = vperm.xlu0 %272, %v203
    %v274 = vpop.permute.xlu0 %273
    %277 = vset.pattern.permute.xlu0 0
    %278 = vperm.xlu0 %277, %v204
    %v279 = vpop.permute.xlu0 %278
    %282 = vset.pattern.permute.xlu0 0
    %283 = vperm.xlu0 %282, %v205
    %v284 = vpop.permute.xlu0 %283
    %287 = vset.pattern.permute.xlu0 0
    %288 = vperm.xlu0 %287, %v206
    %v289 = vpop.permute.xlu0 %288
    %292 = vset.pattern.permute.xlu0 0
    %293 = vperm.xlu0 %292, %v207
    %v294 = vpop.permute.xlu0 %293
    %297 = vset.pattern.permute.xlu0 0
    %298 = vperm.xlu0 %297, %v208
    %v299 = vpop.permute.xlu0 %298
    %302 = vset.pattern.permute.xlu0 0
    %303 = vperm.xlu0 %302, %v209
    %v304 = vpop.permute.xlu0 %303
    %307 = vset.pattern.permute.xlu0 0
    %308 = vperm.xlu0 %307, %v210
    %v309 = vpop.permute.xlu0 %308
    %312 = vset.pattern.permute.xlu0 0
    %313 = vperm.xlu0 %312, %v211
    %v314 = vpop.permute.xlu0 %313
    %317 = vset.pattern.permute.xlu0 0
    %318 = vperm.xlu0 %317, %v212
    %v319 = vpop.permute.xlu0 %318
    %322 = vset.pattern.permute.xlu0 0
    %323 = vperm.xlu0 %322, %v213
    %v324 = vpop.permute.xlu0 %323
    %327 = vset.pattern.permute.xlu0 0
    %328 = vperm.xlu0 %327, %v214
    %v329 = vpop.permute.xlu0 %328
    %332 = vset.pattern.permute.xlu0 0
    %333 = vperm.xlu0 %332, %v215
    %v334 = vpop.permute.xlu0 %333
    %337 = vset.pattern.permute.xlu0 0
    %338 = vperm.xlu0 %337, %v216
    %v339 = vpop.permute.xlu0 %338
    %342 = vset.pattern.permute.xlu0 0
    %343 = vperm.xlu0 %342, %v217
    %v344 = vpop.permute.xlu0 %343
    %347 = vset.pattern.permute.xlu0 0
    %348 = vperm.xlu0 %347, %v218
    %v349 = vpop.permute.xlu0 %348
    %352 = vset.pattern.permute.xlu0 0
    %353 = vperm.xlu0 %352, %v219
    %v354 = vpop.permute.xlu0 %353
    %357 = vset.pattern.permute.xlu0 0
    %358 = vperm.xlu0 %357, %v220
    %v359 = vpop.permute.xlu0 %358
    %362 = vset.pattern.permute.xlu0 0
    %363 = vperm.xlu0 %362, %v221
    %v364 = vpop.permute.xlu0 %363
    %367 = vset.pattern.permute.xlu0 0
    %368 = vperm.xlu0 %367, %v222
    %v369 = vpop.permute.xlu0 %368
    %372 = vset.pattern.permute.xlu0 0
    %373 = vperm.xlu0 %372, %v223
    %v374 = vpop.permute.xlu0 %373
    %377 = vset.pattern.permute.xlu0 0
    %378 = vperm.xlu0 %377, %v224
    %v379 = vpop.permute.xlu0 %378
    %382 = vset.pattern.permute.xlu0 0
    %383 = vperm.xlu0 %382, %v225
    %v384 = vpop.permute.xlu0 %383
    %387 = vset.pattern.permute.xlu0 0
    %388 = vperm.xlu0 %387, %v226
    %v389 = vpop.permute.xlu0 %388
    %392 = vset.pattern.permute.xlu0 0
    %393 = vperm.xlu0 %392, %v227
    %v394 = vpop.permute.xlu0 %393
    %397 = vset.pattern.permute.xlu0 0
    %398 = vperm.xlu0 %397, %v228
    %v399 = vpop.permute.xlu0 %398
    %402 = vset.pattern.permute.xlu0 0
    %403 = vperm.xlu0 %402, %v229
    %v404 = vpop.permute.xlu0 %403
    %407 = vset.pattern.permute.xlu0 0
    %408 = vperm.xlu0 %407, %v230
    %v409 = vpop.permute.xlu0 %408
    %412 = vset.pattern.permute.xlu0 0
    %413 = vperm.xlu0 %412, %v231
    %v414 = vpop.permute.xlu0 %413
    %417 = vset.pattern.permute.xlu0 0
    %418 = vperm.xlu0 %417, %v232
    %v419 = vpop.permute.xlu0 %418
    %422 = vset.pattern.permute.xlu0 0
    %423 = vperm.xlu0 %422, %v233
    %v424 = vpop.permute.xlu0 %423
    %v458 = vunpack.c.l.b16 %v170
    %v459 = vunpack.c.l.b16 %v171
    %v460 = vunpack.c.l.b16 %v172
    %v461 = vunpack.c.l.b16 %v173
    %v462 = vunpack.c.l.b16 %v174
    %v463 = vunpack.c.l.b16 %v175
    %v464 = vunpack.c.l.b16 %v176
    %v465 = vunpack.c.l.b16 %v177
    %v466 = vunpack.c.l.b16 %v178
    %v467 = vunpack.c.l.b16 %v179
    %v468 = vunpack.c.l.b16 %v180
    %v469 = vunpack.c.l.b16 %v181
    %v470 = vunpack.c.l.b16 %v182
    %v471 = vunpack.c.l.b16 %v183
    %v472 = vunpack.c.l.b16 %v184
    %v473 = vunpack.c.l.b16 %v185
    %v474 = vunpack.c.l.b16 %v186
    %v475 = vunpack.c.l.b16 %v187
    %v476 = vunpack.c.l.b16 %v188
    %v477 = vunpack.c.l.b16 %v189
    %v478 = vunpack.c.l.b16 %v190
    %v479 = vunpack.c.l.b16 %v191
    %v480 = vunpack.c.l.b16 %v192
    %v481 = vunpack.c.l.b16 %v193
    %v482 = vunpack.c.l.b16 %v194
    %v483 = vunpack.c.l.b16 %v195
    %v484 = vunpack.c.l.b16 %v196
    %v485 = vunpack.c.l.b16 %v197
    %v486 = vunpack.c.l.b16 %v198
    %v487 = vunpack.c.l.b16 %v199
    %v488 = vunpack.c.l.b16 %v200
    %v489 = vunpack.c.l.b16 %v201
    %v490 = vpack.c.b16 %v459, %v458
    %v491 = vpack.c.b16 %v461, %v460
    %v492 = vpack.c.b16 %v463, %v462
    %v493 = vpack.c.b16 %v465, %v464
    %v494 = vpack.c.b16 %v467, %v466
    %v495 = vpack.c.b16 %v469, %v468
    %v496 = vpack.c.b16 %v471, %v470
    %v497 = vpack.c.b16 %v473, %v472
    %v498 = vpack.c.b16 %v475, %v474
    %v499 = vpack.c.b16 %v477, %v476
    %v500 = vpack.c.b16 %v479, %v478
    %v501 = vpack.c.b16 %v481, %v480
    %v502 = vpack.c.b16 %v483, %v482
    %v503 = vpack.c.b16 %v485, %v484
    %v504 = vpack.c.b16 %v487, %v486
    %v505 = vpack.c.b16 %v489, %v488
    %v538 = vunpack.c.l.b16 %v154
    %v539 = vunpack.c.l.b16 %v155
    %v540 = vunpack.c.l.b16 %v156
    %v541 = vunpack.c.l.b16 %v157
    %v542 = vunpack.c.l.b16 %v158
    %v543 = vunpack.c.l.b16 %v159
    %v544 = vunpack.c.l.b16 %v160
    %v545 = vunpack.c.l.b16 %v161
    %v546 = vunpack.c.l.b16 %v162
    %v547 = vunpack.c.l.b16 %v163
    %v548 = vunpack.c.l.b16 %v164
    %v549 = vunpack.c.l.b16 %v165
    %v550 = vunpack.c.l.b16 %v166
    %v551 = vunpack.c.l.b16 %v167
    %v552 = vunpack.c.l.b16 %v168
    %v553 = vunpack.c.l.b16 %v169
    %v554 = vpack.c.b16 %v539, %v538
    %v555 = vpack.c.b16 %v541, %v540
    %v556 = vpack.c.b16 %v543, %v542
    %v557 = vpack.c.b16 %v545, %v544
    %v558 = vpack.c.b16 %v547, %v546
    %v559 = vpack.c.b16 %v549, %v548
    %v560 = vpack.c.b16 %v551, %v550
    %v561 = vpack.c.b16 %v553, %v552
    %570 = vmatpush.bf16.msra.mxu0 %v561
    %571 = vmatpush.bf16.msra.mxu0 %v560
    %572 = vmatpush.bf16.msra.mxu0 %v559
    %573 = vmatpush.bf16.msra.mxu0 %v558
    %574 = vmatpush.bf16.msra.mxu0 %v557
    %575 = vmatpush.bf16.msra.mxu0 %v556
    %576 = vmatpush.bf16.msra.mxu0 %v555
    %577 = vmatpush.bf16.msra.mxu0 %v554
    %578 = vmatmul.bf16.gmra.mxu0 %v490
    %v579 = vpop.f32.mrf.mxu0
    %v580 = vadd.f32 %v269, %v579
    %v581 = vpop.f32.mrf.mxu0
    %v582 = vadd.f32 %v274, %v581
    %583 = vmatmul.bf16.gmra.mxu0 %v491
    %v584 = vpop.f32.mrf.mxu0
    %v585 = vadd.f32 %v279, %v584
    %v586 = vpop.f32.mrf.mxu0
    %v587 = vadd.f32 %v284, %v586
    %588 = vmatmul.bf16.gmra.mxu0 %v492
    %v589 = vpop.f32.mrf.mxu0
    %v590 = vadd.f32 %v289, %v589
    %v591 = vpop.f32.mrf.mxu0
    %v592 = vadd.f32 %v294, %v591
    %593 = vmatmul.bf16.gmra.mxu0 %v493
    %v594 = vpop.f32.mrf.mxu0
    %v595 = vadd.f32 %v299, %v594
    %v596 = vpop.f32.mrf.mxu0
    %v597 = vadd.f32 %v304, %v596
    %598 = vmatmul.bf16.gmra.mxu0 %v494
    %v599 = vpop.f32.mrf.mxu0
    %v600 = vadd.f32 %v309, %v599
    %v601 = vpop.f32.mrf.mxu0
    %v602 = vadd.f32 %v314, %v601
    %603 = vmatmul.bf16.gmra.mxu0 %v495
    %v604 = vpop.f32.mrf.mxu0
    %v605 = vadd.f32 %v319, %v604
    %v606 = vpop.f32.mrf.mxu0
    %v607 = vadd.f32 %v324, %v606
    %608 = vmatmul.bf16.gmra.mxu0 %v496
    %v609 = vpop.f32.mrf.mxu0
    %v610 = vadd.f32 %v329, %v609
    %v611 = vpop.f32.mrf.mxu0
    %v612 = vadd.f32 %v334, %v611
    %613 = vmatmul.bf16.gmra.mxu0 %v497
    %v614 = vpop.f32.mrf.mxu0
    %v615 = vadd.f32 %v339, %v614
    %v616 = vpop.f32.mrf.mxu0
    %v617 = vadd.f32 %v344, %v616
    %618 = vmatmul.bf16.gmra.mxu0 %v498
    %v619 = vpop.f32.mrf.mxu0
    %v620 = vadd.f32 %v349, %v619
    %v621 = vpop.f32.mrf.mxu0
    %v622 = vadd.f32 %v354, %v621
    %623 = vmatmul.bf16.gmra.mxu0 %v499
    %v624 = vpop.f32.mrf.mxu0
    %v625 = vadd.f32 %v359, %v624
    %v626 = vpop.f32.mrf.mxu0
    %v627 = vadd.f32 %v364, %v626
    %628 = vmatmul.bf16.gmra.mxu0 %v500
    %v629 = vpop.f32.mrf.mxu0
    %v630 = vadd.f32 %v369, %v629
    %v631 = vpop.f32.mrf.mxu0
    %v632 = vadd.f32 %v374, %v631
    %633 = vmatmul.bf16.gmra.mxu0 %v501
    %v634 = vpop.f32.mrf.mxu0
    %v635 = vadd.f32 %v379, %v634
    %v636 = vpop.f32.mrf.mxu0
    %v637 = vadd.f32 %v384, %v636
    %638 = vmatmul.bf16.gmra.mxu0 %v502
    %v639 = vpop.f32.mrf.mxu0
    %v640 = vadd.f32 %v389, %v639
    %v641 = vpop.f32.mrf.mxu0
    %v642 = vadd.f32 %v394, %v641
    %643 = vmatmul.bf16.gmra.mxu0 %v503
    %v644 = vpop.f32.mrf.mxu0
    %v645 = vadd.f32 %v399, %v644
    %v646 = vpop.f32.mrf.mxu0
    %v647 = vadd.f32 %v404, %v646
    %648 = vmatmul.bf16.gmra.mxu0 %v504
    %v649 = vpop.f32.mrf.mxu0
    %v650 = vadd.f32 %v409, %v649
    %v651 = vpop.f32.mrf.mxu0
    %v652 = vadd.f32 %v414, %v651
    %653 = vmatmul.bf16.gmra.mxu0 %v505
    %v654 = vpop.f32.mrf.mxu0
    %v655 = vadd.f32 %v419, %v654
    %v656 = vpop.f32.mrf.mxu0
    %v657 = vadd.f32 %v424, %v656
    %658 = vdwg.mxu0
    %v659 = vmax.f32 %v580, 0.0
    %v660 = vmax.f32 %v582, 0.0
    %v661 = vmax.f32 %v585, 0.0
    %v662 = vmax.f32 %v587, 0.0
    %v663 = vmax.f32 %v590, 0.0
    %v664 = vmax.f32 %v592, 0.0
    %v665 = vmax.f32 %v595, 0.0
    %v666 = vmax.f32 %v597, 0.0
    %v667 = vmax.f32 %v600, 0.0
    %v668 = vmax.f32 %v602, 0.0
    %v669 = vmax.f32 %v605, 0.0
    %v670 = vmax.f32 %v607, 0.0
    %v671 = vmax.f32 %v610, 0.0
    %v672 = vmax.f32 %v612, 0.0
    %v673 = vmax.f32 %v615, 0.0
    %v674 = vmax.f32 %v617, 0.0
    %v675 = vmax.f32 %v620, 0.0
    %v676 = vmax.f32 %v622, 0.0
    %v677 = vmax.f32 %v625, 0.0
    %v678 = vmax.f32 %v627, 0.0
    %v679 = vmax.f32 %v630, 0.0
    %v680 = vmax.f32 %v632, 0.0
    %v681 = vmax.f32 %v635, 0.0
    %v682 = vmax.f32 %v637, 0.0
    %v683 = vmax.f32 %v640, 0.0
    %v684 = vmax.f32 %v642, 0.0
    %v685 = vmax.f32 %v645, 0.0
    %v686 = vmax.f32 %v647, 0.0
    %v687 = vmax.f32 %v650, 0.0
    %v688 = vmax.f32 %v652, 0.0
    %v689 = vmax.f32 %v655, 0.0
    %v690 = vmax.f32 %v657, 0.0
    %v691 = vpack.c.bf16 %v660, %v659
    %v692 = vpack.c.bf16 %v662, %v661
    %v693 = vpack.c.bf16 %v664, %v663
    %v694 = vpack.c.bf16 %v666, %v665
    %v695 = vpack.c.bf16 %v668, %v667
    %v696 = vpack.c.bf16 %v670, %v669
    %v697 = vpack.c.bf16 %v672, %v671
    %v698 = vpack.c.bf16 %v674, %v673
    %v699 = vpack.c.bf16 %v676, %v675
    %v700 = vpack.c.bf16 %v678, %v677
    %v701 = vpack.c.bf16 %v680, %v679
    %v702 = vpack.c.bf16 %v682, %v681
    %v703 = vpack.c.bf16 %v684, %v683
    %v704 = vpack.c.bf16 %v686, %v685
    %v705 = vpack.c.bf16 %v688, %v687
    %v706 = vpack.c.bf16 %v690, %v689
    %708 = vset.pattern.permute.xlu0 0
    %709 = vperm.xlu0 %708, %v250
    %v710 = vpop.permute.xlu0 %709
    %713 = vset.pattern.permute.xlu0 0
    %714 = vperm.xlu0 %713, %v251
    %v715 = vpop.permute.xlu0 %714
    %718 = vset.pattern.permute.xlu0 0
    %719 = vperm.xlu0 %718, %v252
    %v720 = vpop.permute.xlu0 %719
    %723 = vset.pattern.permute.xlu0 0
    %724 = vperm.xlu0 %723, %v253
    %v725 = vpop.permute.xlu0 %724
    %728 = vset.pattern.permute.xlu0 0
    %729 = vperm.xlu0 %728, %v254
    %v730 = vpop.permute.xlu0 %729
    %733 = vset.pattern.permute.xlu0 0
    %734 = vperm.xlu0 %733, %v255
    %v735 = vpop.permute.xlu0 %734
    %738 = vset.pattern.permute.xlu0 0
    %739 = vperm.xlu0 %738, %v256
    %v740 = vpop.permute.xlu0 %739
    %743 = vset.pattern.permute.xlu0 0
    %744 = vperm.xlu0 %743, %v257
    %v745 = vpop.permute.xlu0 %744
    %748 = vset.pattern.permute.xlu0 0
    %749 = vperm.xlu0 %748, %v258
    %v750 = vpop.permute.xlu0 %749
    %753 = vset.pattern.permute.xlu0 0
    %754 = vperm.xlu0 %753, %v259
    %v755 = vpop.permute.xlu0 %754
    %758 = vset.pattern.permute.xlu0 0
    %759 = vperm.xlu0 %758, %v260
    %v760 = vpop.permute.xlu0 %759
    %763 = vset.pattern.permute.xlu0 0
    %764 = vperm.xlu0 %763, %v261
    %v765 = vpop.permute.xlu0 %764
    %768 = vset.pattern.permute.xlu0 0
    %769 = vperm.xlu0 %768, %v262
    %v770 = vpop.permute.xlu0 %769
    %773 = vset.pattern.permute.xlu0 0
    %774 = vperm.xlu0 %773, %v263
    %v775 = vpop.permute.xlu0 %774
    %778 = vset.pattern.permute.xlu0 0
    %779 = vperm.xlu0 %778, %v264
    %v780 = vpop.permute.xlu0 %779
    %783 = vset.pattern.permute.xlu0 0
    %784 = vperm.xlu0 %783, %v265
    %v785 = vpop.permute.xlu0 %784
    %v803 = vunpack.c.l.b16 %v234
    %v804 = vunpack.c.h.b16 %v234
    %v805 = vunpack.c.l.b16 %v235
    %v806 = vunpack.c.h.b16 %v235
    %v807 = vunpack.c.l.b16 %v236
    %v808 = vunpack.c.h.b16 %v236
    %v809 = vunpack.c.l.b16 %v237
    %v810 = vunpack.c.h.b16 %v237
    %v811 = vunpack.c.l.b16 %v238
    %v812 = vunpack.c.h.b16 %v238
    %v813 = vunpack.c.l.b16 %v239
    %v814 = vunpack.c.h.b16 %v239
    %v815 = vunpack.c.l.b16 %v240
    %v816 = vunpack.c.h.b16 %v240
    %v817 = vunpack.c.l.b16 %v241
    %v818 = vunpack.c.h.b16 %v241
    %v819 = vunpack.c.l.b16 %v242
    %v820 = vunpack.c.h.b16 %v242
    %v821 = vunpack.c.l.b16 %v243
    %v822 = vunpack.c.h.b16 %v243
    %v823 = vunpack.c.l.b16 %v244
    %v824 = vunpack.c.h.b16 %v244
    %v825 = vunpack.c.l.b16 %v245
    %v826 = vunpack.c.h.b16 %v245
    %v827 = vunpack.c.l.b16 %v246
    %v828 = vunpack.c.h.b16 %v246
    %v829 = vunpack.c.l.b16 %v247
    %v830 = vunpack.c.h.b16 %v247
    %v831 = vunpack.c.l.b16 %v248
    %v832 = vunpack.c.h.b16 %v248
    %v833 = vunpack.c.l.b16 %v249
    %v834 = vunpack.c.h.b16 %v249
    %v835 = vpack.c.b16 %v805, %v803
    %v836 = vpack.c.b16 %v806, %v804
    %v837 = vpack.c.b16 %v809, %v807
    %v838 = vpack.c.b16 %v810, %v808
    %v839 = vpack.c.b16 %v813, %v811
    %v840 = vpack.c.b16 %v814, %v812
    %v841 = vpack.c.b16 %v817, %v815
    %v842 = vpack.c.b16 %v818, %v816
    %v843 = vpack.c.b16 %v821, %v819
    %v844 = vpack.c.b16 %v822, %v820
    %v845 = vpack.c.b16 %v825, %v823
    %v846 = vpack.c.b16 %v826, %v824
    %v847 = vpack.c.b16 %v829, %v827
    %v848 = vpack.c.b16 %v830, %v828
    %v849 = vpack.c.b16 %v833, %v831
    %v850 = vpack.c.b16 %v834, %v832
    %867 = vmatpush.bf16.msra.mxu0 %v698
    %868 = vmatpush.bf16.msra.mxu0 %v697
    %869 = vmatpush.bf16.msra.mxu0 %v696
    %870 = vmatpush.bf16.msra.mxu0 %v695
    %871 = vmatpush.bf16.msra.mxu0 %v694
    %872 = vmatpush.bf16.msra.mxu0 %v693
    %873 = vmatpush.bf16.msra.mxu0 %v692
    %874 = vmatpush.bf16.msra.mxu0 %v691
    %875 = vmatmul.bf16.gmra.mxu0 %v835
    %v876 = vpop.f32.mrf.mxu0
    %v877 = vadd.f32 %v710, %v876
    %v878 = vpop.f32.mrf.mxu0
    %v879 = vadd.f32 %v715, %v878
    %880 = vmatmul.bf16.gmra.mxu0 %v837
    %v881 = vpop.f32.mrf.mxu0
    %v882 = vadd.f32 %v720, %v881
    %v883 = vpop.f32.mrf.mxu0
    %v884 = vadd.f32 %v725, %v883
    %885 = vmatmul.bf16.gmra.mxu0 %v839
    %v886 = vpop.f32.mrf.mxu0
    %v887 = vadd.f32 %v730, %v886
    %v888 = vpop.f32.mrf.mxu0
    %v889 = vadd.f32 %v735, %v888
    %890 = vmatmul.bf16.gmra.mxu0 %v841
    %v891 = vpop.f32.mrf.mxu0
    %v892 = vadd.f32 %v740, %v891
    %v893 = vpop.f32.mrf.mxu0
    %v894 = vadd.f32 %v745, %v893
    %895 = vmatmul.bf16.gmra.mxu0 %v843
    %v896 = vpop.f32.mrf.mxu0
    %v897 = vadd.f32 %v750, %v896
    %v898 = vpop.f32.mrf.mxu0
    %v899 = vadd.f32 %v755, %v898
    %900 = vmatmul.bf16.gmra.mxu0 %v845
    %v901 = vpop.f32.mrf.mxu0
    %v902 = vadd.f32 %v760, %v901
    %v903 = vpop.f32.mrf.mxu0
    %v904 = vadd.f32 %v765, %v903
    %905 = vmatmul.bf16.gmra.mxu0 %v847
    %v906 = vpop.f32.mrf.mxu0
    %v907 = vadd.f32 %v770, %v906
    %v908 = vpop.f32.mrf.mxu0
    %v909 = vadd.f32 %v775, %v908
    %910 = vmatmul.bf16.gmra.mxu0 %v849
    %v911 = vpop.f32.mrf.mxu0
    %v912 = vadd.f32 %v780, %v911
    %v913 = vpop.f32.mrf.mxu0
    %v914 = vadd.f32 %v785, %v913
    %915 = vdwg.mxu0
    %916 = vmatpush.bf16.msra.mxu0 %v706
    %917 = vmatpush.bf16.msra.mxu0 %v705
    %918 = vmatpush.bf16.msra.mxu0 %v704
    %919 = vmatpush.bf16.msra.mxu0 %v703
    %920 = vmatpush.bf16.msra.mxu0 %v702
    %921 = vmatpush.bf16.msra.mxu0 %v701
    %922 = vmatpush.bf16.msra.mxu0 %v700
    %923 = vmatpush.bf16.msra.mxu0 %v699
    %924 = vmatmul.bf16.gmra.mxu0 %v836
    %v925 = vpop.f32.mrf.mxu0
    %v926 = vadd.f32 %v877, %v925
    %v927 = vpop.f32.mrf.mxu0
    %v928 = vadd.f32 %v879, %v927
    %929 = vmatmul.bf16.gmra.mxu0 %v838
    %v930 = vpop.f32.mrf.mxu0
    %v931 = vadd.f32 %v882, %v930
    %v932 = vpop.f32.mrf.mxu0
    %v933 = vadd.f32 %v884, %v932
    %934 = vmatmul.bf16.gmra.mxu0 %v840
    %v935 = vpop.f32.mrf.mxu0
    %v936 = vadd.f32 %v887, %v935
    %v937 = vpop.f32.mrf.mxu0
    %v938 = vadd.f32 %v889, %v937
    %939 = vmatmul.bf16.gmra.mxu0 %v842
    %v940 = vpop.f32.mrf.mxu0
    %v941 = vadd.f32 %v892, %v940
    %v942 = vpop.f32.mrf.mxu0
    %v943 = vadd.f32 %v894, %v942
    %944 = vmatmul.bf16.gmra.mxu0 %v844
    %v945 = vpop.f32.mrf.mxu0
    %v946 = vadd.f32 %v897, %v945
    %v947 = vpop.f32.mrf.mxu0
    %v948 = vadd.f32 %v899, %v947
    %949 = vmatmul.bf16.gmra.mxu0 %v846
    %v950 = vpop.f32.mrf.mxu0
    %v951 = vadd.f32 %v902, %v950
    %v952 = vpop.f32.mrf.mxu0
    %v953 = vadd.f32 %v904, %v952
    %954 = vmatmul.bf16.gmra.mxu0 %v848
    %v955 = vpop.f32.mrf.mxu0
    %v956 = vadd.f32 %v907, %v955
    %v957 = vpop.f32.mrf.mxu0
    %v958 = vadd.f32 %v909, %v957
    %959 = vmatmul.bf16.gmra.mxu0 %v850
    %v960 = vpop.f32.mrf.mxu0
    %v961 = vadd.f32 %v912, %v960
    %v962 = vpop.f32.mrf.mxu0
    %v963 = vadd.f32 %v914, %v962
    %964 = vdwg.mxu0
    %v965 = vmax.f32 %v926, 0.0
    %v966 = vmax.f32 %v928, 0.0
    %v967 = vmax.f32 %v931, 0.0
    %v968 = vmax.f32 %v933, 0.0
    %v969 = vmax.f32 %v936, 0.0
    %v970 = vmax.f32 %v938, 0.0
    %v971 = vmax.f32 %v941, 0.0
    %v972 = vmax.f32 %v943, 0.0
    %v973 = vmax.f32 %v946, 0.0
    %v974 = vmax.f32 %v948, 0.0
    %v975 = vmax.f32 %v951, 0.0
    %v976 = vmax.f32 %v953, 0.0
    %v977 = vmax.f32 %v956, 0.0
    %v978 = vmax.f32 %v958, 0.0
    %v979 = vmax.f32 %v961, 0.0
    %v980 = vmax.f32 %v963, 0.0
    %vm981 = vcmask 990208
    %982 = vst.msk [vmem:[#allocation2] sm:$0xff] %vm981, %v965
    %983 = vst.msk [vmem:[#allocation2 + $0x8] sm:$0xff] %vm981, %v966
    %984 = vst.msk [vmem:[#allocation2 + $0x10] sm:$0xff] %vm981, %v967
    %985 = vst.msk [vmem:[#allocation2 + $0x18] sm:$0xff] %vm981, %v968
    %986 = vst.msk [vmem:[#allocation2 + $0x20] sm:$0xff] %vm981, %v969
    %987 = vst.msk [vmem:[#allocation2 + $0x28] sm:$0xff] %vm981, %v970
    %988 = vst.msk [vmem:[#allocation2 + $0x30] sm:$0xff] %vm981, %v971
    %989 = vst.msk [vmem:[#allocation2 + $0x38] sm:$0xff] %vm981, %v972
    %990 = vst.msk [vmem:[#allocation2 + $0x40] sm:$0xff] %vm981, %v973
    %991 = vst.msk [vmem:[#allocation2 + $0x48] sm:$0xff] %vm981, %v974
    %992 = vst.msk [vmem:[#allocation2 + $0x50] sm:$0xff] %vm981, %v975
    %993 = vst.msk [vmem:[#allocation2 + $0x58] sm:$0xff] %vm981, %v976
    %994 = vst.msk [vmem:[#allocation2 + $0x60] sm:$0xff] %vm981, %v977
    %995 = vst.msk [vmem:[#allocation2 + $0x68] sm:$0xff] %vm981, %v978
    %996 = vst.msk [vmem:[#allocation2 + $0x70] sm:$0xff] %vm981, %v979
    %997 = vst.msk [vmem:[#allocation2 + $0x78] sm:$0xff] %vm981, %v980
    %v998 = vld [vmem:[#allocation2] sm:$0xff]
    %v999 = vld [vmem:[#allocation2 + $0x8] sm:$0xff]
    %v1000 = vld [vmem:[#allocation2 + $0x10] sm:$0xff]
    %v1001 = vld [vmem:[#allocation2 + $0x18] sm:$0xff]
    %v1002 = vld [vmem:[#allocation2 + $0x20] sm:$0xff]
    %v1003 = vld [vmem:[#allocation2 + $0x28] sm:$0xff]
    %v1004 = vld [vmem:[#allocation2 + $0x30] sm:$0xff]
    %v1005 = vld [vmem:[#allocation2 + $0x38] sm:$0xff]
    %v1006 = vld [vmem:[#allocation2 + $0x40] sm:$0xff]
    %v1007 = vld [vmem:[#allocation2 + $0x48] sm:$0xff]
    %v1008 = vld [vmem:[#allocation2 + $0x50] sm:$0xff]
    %v1009 = vld [vmem:[#allocation2 + $0x58] sm:$0xff]
    %v1010 = vld [vmem:[#allocation2 + $0x60] sm:$0xff]
    %v1011 = vld [vmem:[#allocation2 + $0x68] sm:$0xff]
    %v1012 = vld [vmem:[#allocation2 + $0x70] sm:$0xff]
    %v1013 = vld [vmem:[#allocation2 + $0x78] sm:$0xff]
    %v1014 = vpack.c.bf16 %v998, %v998
    %v1015 = vpack.c.bf16 %v999, %v999
    %v1016 = vpack.c.bf16 %v1000, %v1000
    %v1017 = vpack.c.bf16 %v1001, %v1001
    %v1018 = vpack.c.bf16 %v1002, %v1002
    %v1019 = vpack.c.bf16 %v1003, %v1003
    %v1020 = vpack.c.bf16 %v1004, %v1004
    %v1021 = vpack.c.bf16 %v1005, %v1005
    %v1022 = vpack.c.bf16 %v1006, %v1006
    %v1023 = vpack.c.bf16 %v1007, %v1007
    %v1024 = vpack.c.bf16 %v1008, %v1008
    %v1025 = vpack.c.bf16 %v1009, %v1009
    %v1026 = vpack.c.bf16 %v1010, %v1010
    %v1027 = vpack.c.bf16 %v1011, %v1011
    %v1028 = vpack.c.bf16 %v1012, %v1012
    %v1029 = vpack.c.bf16 %v1013, %v1013
    %v1030 = vld [vmem:[#allocation7] sm:$0xff]
    %v1031 = vld [vmem:[#allocation7 + $0x8] sm:$0xff]
    %v1032 = vld [vmem:[#allocation7 + $0x10] sm:$0xff]
    %v1033 = vld [vmem:[#allocation7 + $0x18] sm:$0xff]
    %v1034 = vld [vmem:[#allocation7 + $0x20] sm:$0xff]
    %v1035 = vld [vmem:[#allocation7 + $0x28] sm:$0xff]
    %v1036 = vld [vmem:[#allocation7 + $0x30] sm:$0xff]
    %v1037 = vld [vmem:[#allocation7 + $0x38] sm:$0xff]
    %v1038 = vld [vmem:[#allocation7 + $0x40] sm:$0xff]
    %v1039 = vld [vmem:[#allocation7 + $0x48] sm:$0xff]
    %v1040 = vld [vmem:[#allocation7 + $0x50] sm:$0xff]
    %v1041 = vld [vmem:[#allocation7 + $0x58] sm:$0xff]
    %v1042 = vld [vmem:[#allocation7 + $0x60] sm:$0xff]
    %v1043 = vld [vmem:[#allocation7 + $0x68] sm:$0xff]
    %v1044 = vld [vmem:[#allocation7 + $0x70] sm:$0xff]
    %v1045 = vld [vmem:[#allocation7 + $0x78] sm:$0xff]
    %v1046 = vld [vmem:[#allocation7 + $0x80] sm:$0xff]
    %v1047 = vld [vmem:[#allocation7 + $0x88] sm:$0xff]
    %v1048 = vld [vmem:[#allocation7 + $0x90] sm:$0xff]
    %v1049 = vld [vmem:[#allocation7 + $0x98] sm:$0xff]
    %v1050 = vld [vmem:[#allocation7 + $0xa0] sm:$0xff]
    %v1051 = vld [vmem:[#allocation7 + $0xa8] sm:$0xff]
    %v1052 = vld [vmem:[#allocation7 + $0xb0] sm:$0xff]
    %v1053 = vld [vmem:[#allocation7 + $0xb8] sm:$0xff]
    %v1054 = vld [vmem:[#allocation7 + $0xc0] sm:$0xff]
    %v1055 = vld [vmem:[#allocation7 + $0xc8] sm:$0xff]
    %v1056 = vld [vmem:[#allocation7 + $0xd0] sm:$0xff]
    %v1057 = vld [vmem:[#allocation7 + $0xd8] sm:$0xff]
    %v1058 = vld [vmem:[#allocation7 + $0xe0] sm:$0xff]
    %v1059 = vld [vmem:[#allocation7 + $0xe8] sm:$0xff]
    %v1060 = vld [vmem:[#allocation7 + $0xf0] sm:$0xff]
    %v1061 = vld [vmem:[#allocation7 + $0xf8] sm:$0xff]
    %v1062 = vld [vmem:[#allocation7 + $0x100] sm:$0xff]
    %v1063 = vld [vmem:[#allocation7 + $0x108] sm:$0xff]
    %v1064 = vld [vmem:[#allocation7 + $0x110] sm:$0xff]
    %v1065 = vld [vmem:[#allocation7 + $0x118] sm:$0xff]
    %v1066 = vld [vmem:[#allocation7 + $0x120] sm:$0xff]
    %v1067 = vld [vmem:[#allocation7 + $0x128] sm:$0xff]
    %v1068 = vld [vmem:[#allocation7 + $0x130] sm:$0xff]
    %v1069 = vld [vmem:[#allocation7 + $0x138] sm:$0xff]
    %v1070 = vld [vmem:[#allocation7 + $0x140] sm:$0xff]
    %v1071 = vld [vmem:[#allocation7 + $0x148] sm:$0xff]
    %v1072 = vld [vmem:[#allocation7 + $0x150] sm:$0xff]
    %v1073 = vld [vmem:[#allocation7 + $0x158] sm:$0xff]
    %v1074 = vld [vmem:[#allocation7 + $0x160] sm:$0xff]
    %v1075 = vld [vmem:[#allocation7 + $0x168] sm:$0xff]
    %v1076 = vld [vmem:[#allocation7 + $0x170] sm:$0xff]
    %v1077 = vld [vmem:[#allocation7 + $0x178] sm:$0xff]
    %v1078 = vld [vmem:[#allocation7 + $0x180] sm:$0xff]
    %v1079 = vld [vmem:[#allocation7 + $0x188] sm:$0xff]
    %v1080 = vld [vmem:[#allocation7 + $0x190] sm:$0xff]
    %v1081 = vld [vmem:[#allocation7 + $0x198] sm:$0xff]
    %v1082 = vld [vmem:[#allocation7 + $0x1a0] sm:$0xff]
    %v1083 = vld [vmem:[#allocation7 + $0x1a8] sm:$0xff]
    %v1084 = vld [vmem:[#allocation7 + $0x1b0] sm:$0xff]
    %v1085 = vld [vmem:[#allocation7 + $0x1b8] sm:$0xff]
    %v1086 = vld [vmem:[#allocation7 + $0x1c0] sm:$0xff]
    %v1087 = vld [vmem:[#allocation7 + $0x1c8] sm:$0xff]
    %v1088 = vld [vmem:[#allocation7 + $0x1d0] sm:$0xff]
    %v1089 = vld [vmem:[#allocation7 + $0x1d8] sm:$0xff]
    %v1090 = vld [vmem:[#allocation7 + $0x1e0] sm:$0xff]
    %v1091 = vld [vmem:[#allocation7 + $0x1e8] sm:$0xff]
    %v1092 = vld [vmem:[#allocation7 + $0x1f0] sm:$0xff]
    %v1093 = vld [vmem:[#allocation7 + $0x1f8] sm:$0xff]
    %v1094 = vld [vmem:[#allocation7 + $0x200] sm:$0xff]
    %v1095 = vld [vmem:[#allocation7 + $0x208] sm:$0xff]
    %v1096 = vld [vmem:[#allocation7 + $0x210] sm:$0xff]
    %v1097 = vld [vmem:[#allocation7 + $0x218] sm:$0xff]
    %v1098 = vld [vmem:[#allocation7 + $0x220] sm:$0xff]
    %v1099 = vld [vmem:[#allocation7 + $0x228] sm:$0xff]
    %v1100 = vld [vmem:[#allocation7 + $0x230] sm:$0xff]
    %v1101 = vld [vmem:[#allocation7 + $0x238] sm:$0xff]
    %v1102 = vld [vmem:[#allocation7 + $0x240] sm:$0xff]
    %v1103 = vld [vmem:[#allocation7 + $0x248] sm:$0xff]
    %v1104 = vld [vmem:[#allocation7 + $0x250] sm:$0xff]
    %v1105 = vld [vmem:[#allocation7 + $0x258] sm:$0xff]
    %v1106 = vld [vmem:[#allocation7 + $0x260] sm:$0xff]
    %v1107 = vld [vmem:[#allocation7 + $0x268] sm:$0xff]
    %v1108 = vld [vmem:[#allocation7 + $0x270] sm:$0xff]
    %v1109 = vld [vmem:[#allocation7 + $0x278] sm:$0xff]
    %v1110 = vld [vmem:[#allocation7 + $0x280] sm:$0xff]
    %v1111 = vld [vmem:[#allocation7 + $0x288] sm:$0xff]
    %v1112 = vld [vmem:[#allocation7 + $0x290] sm:$0xff]
    %v1113 = vld [vmem:[#allocation7 + $0x298] sm:$0xff]
    %v1114 = vld [vmem:[#allocation7 + $0x2a0] sm:$0xff]
    %v1115 = vld [vmem:[#allocation7 + $0x2a8] sm:$0xff]
    %v1116 = vld [vmem:[#allocation7 + $0x2b0] sm:$0xff]
    %v1117 = vld [vmem:[#allocation7 + $0x2b8] sm:$0xff]
    %v1118 = vld [vmem:[#allocation7 + $0x2c0] sm:$0xff]
    %v1119 = vld [vmem:[#allocation7 + $0x2c8] sm:$0xff]
    %v1120 = vld [vmem:[#allocation7 + $0x2d0] sm:$0xff]
    %v1121 = vld [vmem:[#allocation7 + $0x2d8] sm:$0xff]
    %v1122 = vld [vmem:[#allocation7 + $0x2e0] sm:$0xff]
    %v1123 = vld [vmem:[#allocation7 + $0x2e8] sm:$0xff]
    %v1124 = vld [vmem:[#allocation7 + $0x2f0] sm:$0xff]
    %v1125 = vld [vmem:[#allocation7 + $0x2f8] sm:$0xff]
    %v1126 = vld [vmem:[#allocation7 + $0x300] sm:$0xff]
    %v1127 = vld [vmem:[#allocation7 + $0x308] sm:$0xff]
    %v1128 = vld [vmem:[#allocation7 + $0x310] sm:$0xff]
    %v1129 = vld [vmem:[#allocation7 + $0x318] sm:$0xff]
    %v1130 = vld [vmem:[#allocation7 + $0x320] sm:$0xff]
    %v1131 = vld [vmem:[#allocation7 + $0x328] sm:$0xff]
    %v1132 = vld [vmem:[#allocation7 + $0x330] sm:$0xff]
    %v1133 = vld [vmem:[#allocation7 + $0x338] sm:$0xff]
    %v1134 = vld [vmem:[#allocation7 + $0x340] sm:$0xff]
    %v1135 = vld [vmem:[#allocation7 + $0x348] sm:$0xff]
    %v1136 = vld [vmem:[#allocation7 + $0x350] sm:$0xff]
    %v1137 = vld [vmem:[#allocation7 + $0x358] sm:$0xff]
    %v1138 = vld [vmem:[#allocation7 + $0x360] sm:$0xff]
    %v1139 = vld [vmem:[#allocation7 + $0x368] sm:$0xff]
    %v1140 = vld [vmem:[#allocation7 + $0x370] sm:$0xff]
    %v1141 = vld [vmem:[#allocation7 + $0x378] sm:$0xff]
    %v1142 = vld [vmem:[#allocation7 + $0x380] sm:$0xff]
    %v1143 = vld [vmem:[#allocation7 + $0x388] sm:$0xff]
    %v1144 = vld [vmem:[#allocation7 + $0x390] sm:$0xff]
    %v1145 = vld [vmem:[#allocation7 + $0x398] sm:$0xff]
    %v1146 = vld [vmem:[#allocation7 + $0x3a0] sm:$0xff]
    %v1147 = vld [vmem:[#allocation7 + $0x3a8] sm:$0xff]
    %v1148 = vld [vmem:[#allocation7 + $0x3b0] sm:$0xff]
    %v1149 = vld [vmem:[#allocation7 + $0x3b8] sm:$0xff]
    %v1150 = vld [vmem:[#allocation7 + $0x3c0] sm:$0xff]
    %v1151 = vld [vmem:[#allocation7 + $0x3c8] sm:$0xff]
    %v1152 = vld [vmem:[#allocation7 + $0x3d0] sm:$0xff]
    %v1153 = vld [vmem:[#allocation7 + $0x3d8] sm:$0xff]
    %v1154 = vld [vmem:[#allocation7 + $0x3e0] sm:$0xff]
    %v1155 = vld [vmem:[#allocation7 + $0x3e8] sm:$0xff]
    %v1156 = vld [vmem:[#allocation7 + $0x3f0] sm:$0xff]
    %v1157 = vld [vmem:[#allocation7 + $0x3f8] sm:$0xff]
    %v1158 = vld [vmem:[#allocation7 + $0x400] sm:$0xff]
    %v1159 = vld [vmem:[#allocation7 + $0x408] sm:$0xff]
    %v1160 = vld [vmem:[#allocation7 + $0x410] sm:$0xff]
    %v1161 = vld [vmem:[#allocation7 + $0x418] sm:$0xff]
    %v1162 = vld [vmem:[#allocation7 + $0x420] sm:$0xff]
    %v1163 = vld [vmem:[#allocation7 + $0x428] sm:$0xff]
    %v1164 = vld [vmem:[#allocation7 + $0x430] sm:$0xff]
    %v1165 = vld [vmem:[#allocation7 + $0x438] sm:$0xff]
    %v1166 = vld [vmem:[#allocation7 + $0x440] sm:$0xff]
    %v1167 = vld [vmem:[#allocation7 + $0x448] sm:$0xff]
    %v1168 = vld [vmem:[#allocation7 + $0x450] sm:$0xff]
    %v1169 = vld [vmem:[#allocation7 + $0x458] sm:$0xff]
    %v1170 = vld [vmem:[#allocation7 + $0x460] sm:$0xff]
    %v1171 = vld [vmem:[#allocation7 + $0x468] sm:$0xff]
    %v1172 = vld [vmem:[#allocation7 + $0x470] sm:$0xff]
    %v1173 = vld [vmem:[#allocation7 + $0x478] sm:$0xff]
    %v1174 = vld [vmem:[#allocation7 + $0x480] sm:$0xff]
    %v1175 = vld [vmem:[#allocation7 + $0x488] sm:$0xff]
    %v1176 = vld [vmem:[#allocation7 + $0x490] sm:$0xff]
    %v1177 = vld [vmem:[#allocation7 + $0x498] sm:$0xff]
    %v1178 = vld [vmem:[#allocation7 + $0x4a0] sm:$0xff]
    %v1179 = vld [vmem:[#allocation7 + $0x4a8] sm:$0xff]
    %v1180 = vld [vmem:[#allocation7 + $0x4b0] sm:$0xff]
    %v1181 = vld [vmem:[#allocation7 + $0x4b8] sm:$0xff]
    %v1182 = vld [vmem:[#allocation7 + $0x4c0] sm:$0xff]
    %v1183 = vld [vmem:[#allocation7 + $0x4c8] sm:$0xff]
    %v1184 = vld [vmem:[#allocation7 + $0x4d0] sm:$0xff]
    %v1185 = vld [vmem:[#allocation7 + $0x4d8] sm:$0xff]
    %v1186 = vld [vmem:[#allocation7 + $0x4e0] sm:$0xff]
    %v1187 = vld [vmem:[#allocation7 + $0x4e8] sm:$0xff]
    %v1188 = vld [vmem:[#allocation7 + $0x4f0] sm:$0xff]
    %v1189 = vld [vmem:[#allocation7 + $0x4f8] sm:$0xff]
    %v1190 = vld [vmem:[#allocation7 + $0x500] sm:$0xff]
    %v1191 = vld [vmem:[#allocation7 + $0x508] sm:$0xff]
    %v1192 = vld [vmem:[#allocation7 + $0x510] sm:$0xff]
    %v1193 = vld [vmem:[#allocation7 + $0x518] sm:$0xff]
    %v1194 = vld [vmem:[#allocation7 + $0x520] sm:$0xff]
    %v1195 = vld [vmem:[#allocation7 + $0x528] sm:$0xff]
    %v1196 = vld [vmem:[#allocation7 + $0x530] sm:$0xff]
    %v1197 = vld [vmem:[#allocation7 + $0x538] sm:$0xff]
    %v1198 = vld [vmem:[#allocation7 + $0x540] sm:$0xff]
    %v1199 = vld [vmem:[#allocation7 + $0x548] sm:$0xff]
    %v1200 = vld [vmem:[#allocation7 + $0x550] sm:$0xff]
    %v1201 = vld [vmem:[#allocation7 + $0x558] sm:$0xff]
    %v1202 = vld [vmem:[#allocation7 + $0x560] sm:$0xff]
    %v1203 = vld [vmem:[#allocation7 + $0x568] sm:$0xff]
    %v1204 = vld [vmem:[#allocation7 + $0x570] sm:$0xff]
    %v1205 = vld [vmem:[#allocation7 + $0x578] sm:$0xff]
    %v1206 = vld [vmem:[#allocation7 + $0x580] sm:$0xff]
    %v1207 = vld [vmem:[#allocation7 + $0x588] sm:$0xff]
    %v1208 = vld [vmem:[#allocation7 + $0x590] sm:$0xff]
    %v1209 = vld [vmem:[#allocation7 + $0x598] sm:$0xff]
    %v1210 = vld [vmem:[#allocation7 + $0x5a0] sm:$0xff]
    %v1211 = vld [vmem:[#allocation7 + $0x5a8] sm:$0xff]
    %v1212 = vld [vmem:[#allocation7 + $0x5b0] sm:$0xff]
    %v1213 = vld [vmem:[#allocation7 + $0x5b8] sm:$0xff]
    %v1214 = vld [vmem:[#allocation7 + $0x5c0] sm:$0xff]
    %v1215 = vld [vmem:[#allocation7 + $0x5c8] sm:$0xff]
    %v1216 = vld [vmem:[#allocation7 + $0x5d0] sm:$0xff]
    %v1217 = vld [vmem:[#allocation7 + $0x5d8] sm:$0xff]
    %v1218 = vld [vmem:[#allocation7 + $0x5e0] sm:$0xff]
    %v1219 = vld [vmem:[#allocation7 + $0x5e8] sm:$0xff]
    %v1220 = vld [vmem:[#allocation7 + $0x5f0] sm:$0xff]
    %v1221 = vld [vmem:[#allocation7 + $0x5f8] sm:$0xff]
    %v1222 = vld [vmem:[#allocation7 + $0x600] sm:$0xff]
    %v1223 = vld [vmem:[#allocation7 + $0x608] sm:$0xff]
    %v1224 = vld [vmem:[#allocation7 + $0x610] sm:$0xff]
    %v1225 = vld [vmem:[#allocation7 + $0x618] sm:$0xff]
    %v1226 = vld [vmem:[#allocation7 + $0x620] sm:$0xff]
    %v1227 = vld [vmem:[#allocation7 + $0x628] sm:$0xff]
    %v1228 = vld [vmem:[#allocation7 + $0x630] sm:$0xff]
    %v1229 = vld [vmem:[#allocation7 + $0x638] sm:$0xff]
    %v1230 = vld [vmem:[#allocation7 + $0x640] sm:$0xff]
    %v1231 = vld [vmem:[#allocation7 + $0x648] sm:$0xff]
    %v1232 = vld [vmem:[#allocation7 + $0x650] sm:$0xff]
    %v1233 = vld [vmem:[#allocation7 + $0x658] sm:$0xff]
    %v1234 = vld [vmem:[#allocation7 + $0x660] sm:$0xff]
    %v1235 = vld [vmem:[#allocation7 + $0x668] sm:$0xff]
    %v1236 = vld [vmem:[#allocation7 + $0x670] sm:$0xff]
    %v1237 = vld [vmem:[#allocation7 + $0x678] sm:$0xff]
    %v1238 = vld [vmem:[#allocation7 + $0x680] sm:$0xff]
    %v1239 = vld [vmem:[#allocation7 + $0x688] sm:$0xff]
    %v1240 = vld [vmem:[#allocation7 + $0x690] sm:$0xff]
    %v1241 = vld [vmem:[#allocation7 + $0x698] sm:$0xff]
    %v1242 = vld [vmem:[#allocation7 + $0x6a0] sm:$0xff]
    %v1243 = vld [vmem:[#allocation7 + $0x6a8] sm:$0xff]
    %v1244 = vld [vmem:[#allocation7 + $0x6b0] sm:$0xff]
    %v1245 = vld [vmem:[#allocation7 + $0x6b8] sm:$0xff]
    %v1246 = vld [vmem:[#allocation7 + $0x6c0] sm:$0xff]
    %v1247 = vld [vmem:[#allocation7 + $0x6c8] sm:$0xff]
    %v1248 = vld [vmem:[#allocation7 + $0x6d0] sm:$0xff]
    %v1249 = vld [vmem:[#allocation7 + $0x6d8] sm:$0xff]
    %v1250 = vld [vmem:[#allocation7 + $0x6e0] sm:$0xff]
    %v1251 = vld [vmem:[#allocation7 + $0x6e8] sm:$0xff]
    %v1252 = vld [vmem:[#allocation7 + $0x6f0] sm:$0xff]
    %v1253 = vld [vmem:[#allocation7 + $0x6f8] sm:$0xff]
    %v1254 = vld [vmem:[#allocation7 + $0x700] sm:$0xff]
    %v1255 = vld [vmem:[#allocation7 + $0x708] sm:$0xff]
    %v1256 = vld [vmem:[#allocation7 + $0x710] sm:$0xff]
    %v1257 = vld [vmem:[#allocation7 + $0x718] sm:$0xff]
    %v1258 = vld [vmem:[#allocation7 + $0x720] sm:$0xff]
    %v1259 = vld [vmem:[#allocation7 + $0x728] sm:$0xff]
    %v1260 = vld [vmem:[#allocation7 + $0x730] sm:$0xff]
    %v1261 = vld [vmem:[#allocation7 + $0x738] sm:$0xff]
    %v1262 = vld [vmem:[#allocation7 + $0x740] sm:$0xff]
    %v1263 = vld [vmem:[#allocation7 + $0x748] sm:$0xff]
    %v1264 = vld [vmem:[#allocation7 + $0x750] sm:$0xff]
    %v1265 = vld [vmem:[#allocation7 + $0x758] sm:$0xff]
    %v1266 = vld [vmem:[#allocation7 + $0x760] sm:$0xff]
    %v1267 = vld [vmem:[#allocation7 + $0x768] sm:$0xff]
    %v1268 = vld [vmem:[#allocation7 + $0x770] sm:$0xff]
    %v1269 = vld [vmem:[#allocation7 + $0x778] sm:$0xff]
    %v1270 = vld [vmem:[#allocation7 + $0x780] sm:$0xff]
    %v1271 = vld [vmem:[#allocation7 + $0x788] sm:$0xff]
    %v1272 = vld [vmem:[#allocation7 + $0x790] sm:$0xff]
    %v1273 = vld [vmem:[#allocation7 + $0x798] sm:$0xff]
    %v1274 = vld [vmem:[#allocation7 + $0x7a0] sm:$0xff]
    %v1275 = vld [vmem:[#allocation7 + $0x7a8] sm:$0xff]
    %v1276 = vld [vmem:[#allocation7 + $0x7b0] sm:$0xff]
    %v1277 = vld [vmem:[#allocation7 + $0x7b8] sm:$0xff]
    %v1278 = vld [vmem:[#allocation7 + $0x7c0] sm:$0xff]
    %v1279 = vld [vmem:[#allocation7 + $0x7c8] sm:$0xff]
    %v1280 = vld [vmem:[#allocation7 + $0x7d0] sm:$0xff]
    %v1281 = vld [vmem:[#allocation7 + $0x7d8] sm:$0xff]
    %v1282 = vld [vmem:[#allocation7 + $0x7e0] sm:$0xff]
    %v1283 = vld [vmem:[#allocation7 + $0x7e8] sm:$0xff]
    %v1284 = vld [vmem:[#allocation7 + $0x7f0] sm:$0xff]
    %v1285 = vld [vmem:[#allocation7 + $0x7f8] sm:$0xff]
    %v1286 = vld [vmem:[#allocation7 + $0x800] sm:$0xff]
    %v1287 = vld [vmem:[#allocation7 + $0x808] sm:$0xff]
    %v1288 = vld [vmem:[#allocation7 + $0x810] sm:$0xff]
    %v1289 = vld [vmem:[#allocation7 + $0x818] sm:$0xff]
    %v1290 = vld [vmem:[#allocation7 + $0x820] sm:$0xff]
    %v1291 = vld [vmem:[#allocation7 + $0x828] sm:$0xff]
    %v1292 = vld [vmem:[#allocation7 + $0x830] sm:$0xff]
    %v1293 = vld [vmem:[#allocation7 + $0x838] sm:$0xff]
    %v1294 = vld [vmem:[#allocation7 + $0x840] sm:$0xff]
    %v1295 = vld [vmem:[#allocation7 + $0x848] sm:$0xff]
    %v1296 = vld [vmem:[#allocation7 + $0x850] sm:$0xff]
    %v1297 = vld [vmem:[#allocation7 + $0x858] sm:$0xff]
    %v1298 = vld [vmem:[#allocation7 + $0x860] sm:$0xff]
    %v1299 = vld [vmem:[#allocation7 + $0x868] sm:$0xff]
    %v1300 = vld [vmem:[#allocation7 + $0x870] sm:$0xff]
    %v1301 = vld [vmem:[#allocation7 + $0x878] sm:$0xff]
    %v1302 = vld [vmem:[#allocation7 + $0x880] sm:$0xff]
    %v1303 = vld [vmem:[#allocation7 + $0x888] sm:$0xff]
    %v1304 = vld [vmem:[#allocation7 + $0x890] sm:$0xff]
    %v1305 = vld [vmem:[#allocation7 + $0x898] sm:$0xff]
    %v1306 = vld [vmem:[#allocation7 + $0x8a0] sm:$0xff]
    %v1307 = vld [vmem:[#allocation7 + $0x8a8] sm:$0xff]
    %v1308 = vld [vmem:[#allocation7 + $0x8b0] sm:$0xff]
    %v1309 = vld [vmem:[#allocation7 + $0x8b8] sm:$0xff]
    %v1310 = vld [vmem:[#allocation7 + $0x8c0] sm:$0xff]
    %v1311 = vld [vmem:[#allocation7 + $0x8c8] sm:$0xff]
    %v1312 = vld [vmem:[#allocation7 + $0x8d0] sm:$0xff]
    %v1313 = vld [vmem:[#allocation7 + $0x8d8] sm:$0xff]
    %v1314 = vld [vmem:[#allocation7 + $0x8e0] sm:$0xff]
    %v1315 = vld [vmem:[#allocation7 + $0x8e8] sm:$0xff]
    %v1316 = vld [vmem:[#allocation7 + $0x8f0] sm:$0xff]
    %v1317 = vld [vmem:[#allocation7 + $0x8f8] sm:$0xff]
    %v1318 = vld [vmem:[#allocation7 + $0x900] sm:$0xff]
    %v1319 = vld [vmem:[#allocation7 + $0x908] sm:$0xff]
    %v1320 = vld [vmem:[#allocation7 + $0x910] sm:$0xff]
    %v1321 = vld [vmem:[#allocation7 + $0x918] sm:$0xff]
    %v1322 = vld [vmem:[#allocation7 + $0x920] sm:$0xff]
    %v1323 = vld [vmem:[#allocation7 + $0x928] sm:$0xff]
    %v1324 = vld [vmem:[#allocation7 + $0x930] sm:$0xff]
    %v1325 = vld [vmem:[#allocation7 + $0x938] sm:$0xff]
    %v1326 = vld [vmem:[#allocation7 + $0x940] sm:$0xff]
    %v1327 = vld [vmem:[#allocation7 + $0x948] sm:$0xff]
    %v1328 = vld [vmem:[#allocation7 + $0x950] sm:$0xff]
    %v1329 = vld [vmem:[#allocation7 + $0x958] sm:$0xff]
    %v1330 = vld [vmem:[#allocation7 + $0x960] sm:$0xff]
    %v1331 = vld [vmem:[#allocation7 + $0x968] sm:$0xff]
    %v1332 = vld [vmem:[#allocation7 + $0x970] sm:$0xff]
    %v1333 = vld [vmem:[#allocation7 + $0x978] sm:$0xff]
    %v1334 = vld [vmem:[#allocation7 + $0x980] sm:$0xff]
    %v1335 = vld [vmem:[#allocation7 + $0x988] sm:$0xff]
    %v1336 = vld [vmem:[#allocation7 + $0x990] sm:$0xff]
    %v1337 = vld [vmem:[#allocation7 + $0x998] sm:$0xff]
    %v1338 = vld [vmem:[#allocation7 + $0x9a0] sm:$0xff]
    %v1339 = vld [vmem:[#allocation7 + $0x9a8] sm:$0xff]
    %v1340 = vld [vmem:[#allocation7 + $0x9b0] sm:$0xff]
    %v1341 = vld [vmem:[#allocation7 + $0x9b8] sm:$0xff]
    %v1342 = vld [vmem:[#allocation7 + $0x9c0] sm:$0xff]
    %v1343 = vld [vmem:[#allocation7 + $0x9c8] sm:$0xff]
    %v1344 = vld [vmem:[#allocation7 + $0x9d0] sm:$0xff]
    %v1345 = vld [vmem:[#allocation7 + $0x9d8] sm:$0xff]
    %v1346 = vld [vmem:[#allocation7 + $0x9e0] sm:$0xff]
    %v1347 = vld [vmem:[#allocation7 + $0x9e8] sm:$0xff]
    %v1348 = vld [vmem:[#allocation7 + $0x9f0] sm:$0xff]
    %v1349 = vld [vmem:[#allocation7 + $0x9f8] sm:$0xff]
    %v1350 = vld [vmem:[#allocation7 + $0xa00] sm:$0xff]
    %v1351 = vld [vmem:[#allocation7 + $0xa08] sm:$0xff]
    %v1352 = vld [vmem:[#allocation7 + $0xa10] sm:$0xff]
    %v1353 = vld [vmem:[#allocation7 + $0xa18] sm:$0xff]
    %v1354 = vld [vmem:[#allocation7 + $0xa20] sm:$0xff]
    %v1355 = vld [vmem:[#allocation7 + $0xa28] sm:$0xff]
    %v1356 = vld [vmem:[#allocation7 + $0xa30] sm:$0xff]
    %v1357 = vld [vmem:[#allocation7 + $0xa38] sm:$0xff]
    %v1358 = vld [vmem:[#allocation7 + $0xa40] sm:$0xff]
    %v1359 = vld [vmem:[#allocation7 + $0xa48] sm:$0xff]
    %v1360 = vld [vmem:[#allocation7 + $0xa50] sm:$0xff]
    %v1361 = vld [vmem:[#allocation7 + $0xa58] sm:$0xff]
    %v1362 = vld [vmem:[#allocation7 + $0xa60] sm:$0xff]
    %v1363 = vld [vmem:[#allocation7 + $0xa68] sm:$0xff]
    %v1364 = vld [vmem:[#allocation7 + $0xa70] sm:$0xff]
    %v1365 = vld [vmem:[#allocation7 + $0xa78] sm:$0xff]
    %v1366 = vld [vmem:[#allocation7 + $0xa80] sm:$0xff]
    %v1367 = vld [vmem:[#allocation7 + $0xa88] sm:$0xff]
    %v1368 = vld [vmem:[#allocation7 + $0xa90] sm:$0xff]
    %v1369 = vld [vmem:[#allocation7 + $0xa98] sm:$0xff]
    %v1370 = vld [vmem:[#allocation7 + $0xaa0] sm:$0xff]
    %v1371 = vld [vmem:[#allocation7 + $0xaa8] sm:$0xff]
    %v1372 = vld [vmem:[#allocation7 + $0xab0] sm:$0xff]
    %v1373 = vld [vmem:[#allocation7 + $0xab8] sm:$0xff]
    %v1374 = vld [vmem:[#allocation7 + $0xac0] sm:$0xff]
    %v1375 = vld [vmem:[#allocation7 + $0xac8] sm:$0xff]
    %v1376 = vld [vmem:[#allocation7 + $0xad0] sm:$0xff]
    %v1377 = vld [vmem:[#allocation7 + $0xad8] sm:$0xff]
    %v1378 = vld [vmem:[#allocation7 + $0xae0] sm:$0xff]
    %v1379 = vld [vmem:[#allocation7 + $0xae8] sm:$0xff]
    %v1380 = vld [vmem:[#allocation7 + $0xaf0] sm:$0xff]
    %v1381 = vld [vmem:[#allocation7 + $0xaf8] sm:$0xff]
    %v1382 = vld [vmem:[#allocation7 + $0xb00] sm:$0xff]
    %v1383 = vld [vmem:[#allocation7 + $0xb08] sm:$0xff]
    %v1384 = vld [vmem:[#allocation7 + $0xb10] sm:$0xff]
    %v1385 = vld [vmem:[#allocation7 + $0xb18] sm:$0xff]
    %v1386 = vld [vmem:[#allocation7 + $0xb20] sm:$0xff]
    %v1387 = vld [vmem:[#allocation7 + $0xb28] sm:$0xff]
    %v1388 = vld [vmem:[#allocation7 + $0xb30] sm:$0xff]
    %v1389 = vld [vmem:[#allocation7 + $0xb38] sm:$0xff]
    %v1390 = vld [vmem:[#allocation7 + $0xb40] sm:$0xff]
    %v1391 = vld [vmem:[#allocation7 + $0xb48] sm:$0xff]
    %v1392 = vld [vmem:[#allocation7 + $0xb50] sm:$0xff]
    %v1393 = vld [vmem:[#allocation7 + $0xb58] sm:$0xff]
    %v1394 = vld [vmem:[#allocation7 + $0xb60] sm:$0xff]
    %v1395 = vld [vmem:[#allocation7 + $0xb68] sm:$0xff]
    %v1396 = vld [vmem:[#allocation7 + $0xb70] sm:$0xff]
    %v1397 = vld [vmem:[#allocation7 + $0xb78] sm:$0xff]
    %v1398 = vld [vmem:[#allocation7 + $0xb80] sm:$0xff]
    %v1399 = vld [vmem:[#allocation7 + $0xb88] sm:$0xff]
    %v1400 = vld [vmem:[#allocation7 + $0xb90] sm:$0xff]
    %v1401 = vld [vmem:[#allocation7 + $0xb98] sm:$0xff]
    %v1402 = vld [vmem:[#allocation7 + $0xba0] sm:$0xff]
    %v1403 = vld [vmem:[#allocation7 + $0xba8] sm:$0xff]
    %v1404 = vld [vmem:[#allocation7 + $0xbb0] sm:$0xff]
    %v1405 = vld [vmem:[#allocation7 + $0xbb8] sm:$0xff]
    %v1406 = vld [vmem:[#allocation7 + $0xbc0] sm:$0xff]
    %v1407 = vld [vmem:[#allocation7 + $0xbc8] sm:$0xff]
    %v1408 = vld [vmem:[#allocation7 + $0xbd0] sm:$0xff]
    %v1409 = vld [vmem:[#allocation7 + $0xbd8] sm:$0xff]
    %v1410 = vld [vmem:[#allocation7 + $0xbe0] sm:$0xff]
    %v1411 = vld [vmem:[#allocation7 + $0xbe8] sm:$0xff]
    %v1412 = vld [vmem:[#allocation7 + $0xbf0] sm:$0xff]
    %v1413 = vld [vmem:[#allocation7 + $0xbf8] sm:$0xff]
    %v1414 = vld [vmem:[#allocation7 + $0xc00] sm:$0xff]
    %v1415 = vld [vmem:[#allocation7 + $0xc08] sm:$0xff]
    %v1416 = vld [vmem:[#allocation7 + $0xc10] sm:$0xff]
    %v1417 = vld [vmem:[#allocation7 + $0xc18] sm:$0xff]
    %v1418 = vld [vmem:[#allocation7 + $0xc20] sm:$0xff]
    %v1419 = vld [vmem:[#allocation7 + $0xc28] sm:$0xff]
    %v1420 = vld [vmem:[#allocation7 + $0xc30] sm:$0xff]
    %v1421 = vld [vmem:[#allocation7 + $0xc38] sm:$0xff]
    %v1422 = vld [vmem:[#allocation7 + $0xc40] sm:$0xff]
    %v1423 = vld [vmem:[#allocation7 + $0xc48] sm:$0xff]
    %v1424 = vld [vmem:[#allocation7 + $0xc50] sm:$0xff]
    %v1425 = vld [vmem:[#allocation7 + $0xc58] sm:$0xff]
    %v1426 = vld [vmem:[#allocation7 + $0xc60] sm:$0xff]
    %v1427 = vld [vmem:[#allocation7 + $0xc68] sm:$0xff]
    %v1428 = vld [vmem:[#allocation7 + $0xc70] sm:$0xff]
    %v1429 = vld [vmem:[#allocation7 + $0xc78] sm:$0xff]
    %v1430 = vld [vmem:[#allocation7 + $0xc80] sm:$0xff]
    %v1431 = vld [vmem:[#allocation7 + $0xc88] sm:$0xff]
    %v1432 = vld [vmem:[#allocation7 + $0xc90] sm:$0xff]
    %v1433 = vld [vmem:[#allocation7 + $0xc98] sm:$0xff]
    %v1434 = vld [vmem:[#allocation7 + $0xca0] sm:$0xff]
    %v1435 = vld [vmem:[#allocation7 + $0xca8] sm:$0xff]
    %v1436 = vld [vmem:[#allocation7 + $0xcb0] sm:$0xff]
    %v1437 = vld [vmem:[#allocation7 + $0xcb8] sm:$0xff]
    %v1438 = vld [vmem:[#allocation7 + $0xcc0] sm:$0xff]
    %v1439 = vld [vmem:[#allocation7 + $0xcc8] sm:$0xff]
    %v1440 = vld [vmem:[#allocation7 + $0xcd0] sm:$0xff]
    %v1441 = vld [vmem:[#allocation7 + $0xcd8] sm:$0xff]
    %v1442 = vld [vmem:[#allocation7 + $0xce0] sm:$0xff]
    %v1443 = vld [vmem:[#allocation7 + $0xce8] sm:$0xff]
    %v1444 = vld [vmem:[#allocation7 + $0xcf0] sm:$0xff]
    %v1445 = vld [vmem:[#allocation7 + $0xcf8] sm:$0xff]
    %v1446 = vld [vmem:[#allocation7 + $0xd00] sm:$0xff]
    %v1447 = vld [vmem:[#allocation7 + $0xd08] sm:$0xff]
    %v1448 = vld [vmem:[#allocation7 + $0xd10] sm:$0xff]
    %v1449 = vld [vmem:[#allocation7 + $0xd18] sm:$0xff]
    %v1450 = vld [vmem:[#allocation7 + $0xd20] sm:$0xff]
    %v1451 = vld [vmem:[#allocation7 + $0xd28] sm:$0xff]
    %v1452 = vld [vmem:[#allocation7 + $0xd30] sm:$0xff]
    %v1453 = vld [vmem:[#allocation7 + $0xd38] sm:$0xff]
    %v1454 = vld [vmem:[#allocation7 + $0xd40] sm:$0xff]
    %v1455 = vld [vmem:[#allocation7 + $0xd48] sm:$0xff]
    %v1456 = vld [vmem:[#allocation7 + $0xd50] sm:$0xff]
    %v1457 = vld [vmem:[#allocation7 + $0xd58] sm:$0xff]
    %v1458 = vld [vmem:[#allocation7 + $0xd60] sm:$0xff]
    %v1459 = vld [vmem:[#allocation7 + $0xd68] sm:$0xff]
    %v1460 = vld [vmem:[#allocation7 + $0xd70] sm:$0xff]
    %v1461 = vld [vmem:[#allocation7 + $0xd78] sm:$0xff]
    %v1462 = vld [vmem:[#allocation7 + $0xd80] sm:$0xff]
    %v1463 = vld [vmem:[#allocation7 + $0xd88] sm:$0xff]
    %v1464 = vld [vmem:[#allocation7 + $0xd90] sm:$0xff]
    %v1465 = vld [vmem:[#allocation7 + $0xd98] sm:$0xff]
    %v1466 = vld [vmem:[#allocation7 + $0xda0] sm:$0xff]
    %v1467 = vld [vmem:[#allocation7 + $0xda8] sm:$0xff]
    %v1468 = vld [vmem:[#allocation7 + $0xdb0] sm:$0xff]
    %v1469 = vld [vmem:[#allocation7 + $0xdb8] sm:$0xff]
    %v1470 = vld [vmem:[#allocation7 + $0xdc0] sm:$0xff]
    %v1471 = vld [vmem:[#allocation7 + $0xdc8] sm:$0xff]
    %v1472 = vld [vmem:[#allocation7 + $0xdd0] sm:$0xff]
    %v1473 = vld [vmem:[#allocation7 + $0xdd8] sm:$0xff]
    %v1474 = vld [vmem:[#allocation7 + $0xde0] sm:$0xff]
    %v1475 = vld [vmem:[#allocation7 + $0xde8] sm:$0xff]
    %v1476 = vld [vmem:[#allocation7 + $0xdf0] sm:$0xff]
    %v1477 = vld [vmem:[#allocation7 + $0xdf8] sm:$0xff]
    %v1478 = vld [vmem:[#allocation7 + $0xe00] sm:$0xff]
    %v1479 = vld [vmem:[#allocation7 + $0xe08] sm:$0xff]
    %v1480 = vld [vmem:[#allocation7 + $0xe10] sm:$0xff]
    %v1481 = vld [vmem:[#allocation7 + $0xe18] sm:$0xff]
    %v1482 = vld [vmem:[#allocation7 + $0xe20] sm:$0xff]
    %v1483 = vld [vmem:[#allocation7 + $0xe28] sm:$0xff]
    %v1484 = vld [vmem:[#allocation7 + $0xe30] sm:$0xff]
    %v1485 = vld [vmem:[#allocation7 + $0xe38] sm:$0xff]
    %v1486 = vld [vmem:[#allocation7 + $0xe40] sm:$0xff]
    %v1487 = vld [vmem:[#allocation7 + $0xe48] sm:$0xff]
    %v1488 = vld [vmem:[#allocation7 + $0xe50] sm:$0xff]
    %v1489 = vld [vmem:[#allocation7 + $0xe58] sm:$0xff]
    %v1490 = vld [vmem:[#allocation7 + $0xe60] sm:$0xff]
    %v1491 = vld [vmem:[#allocation7 + $0xe68] sm:$0xff]
    %v1492 = vld [vmem:[#allocation7 + $0xe70] sm:$0xff]
    %v1493 = vld [vmem:[#allocation7 + $0xe78] sm:$0xff]
    %v1494 = vld [vmem:[#allocation7 + $0xe80] sm:$0xff]
    %v1495 = vld [vmem:[#allocation7 + $0xe88] sm:$0xff]
    %v1496 = vld [vmem:[#allocation7 + $0xe90] sm:$0xff]
    %v1497 = vld [vmem:[#allocation7 + $0xe98] sm:$0xff]
    %v1498 = vld [vmem:[#allocation7 + $0xea0] sm:$0xff]
    %v1499 = vld [vmem:[#allocation7 + $0xea8] sm:$0xff]
    %v1500 = vld [vmem:[#allocation7 + $0xeb0] sm:$0xff]
    %v1501 = vld [vmem:[#allocation7 + $0xeb8] sm:$0xff]
    %v1502 = vld [vmem:[#allocation7 + $0xec0] sm:$0xff]
    %v1503 = vld [vmem:[#allocation7 + $0xec8] sm:$0xff]
    %v1504 = vld [vmem:[#allocation7 + $0xed0] sm:$0xff]
    %v1505 = vld [vmem:[#allocation7 + $0xed8] sm:$0xff]
    %v1506 = vld [vmem:[#allocation7 + $0xee0] sm:$0xff]
    %v1507 = vld [vmem:[#allocation7 + $0xee8] sm:$0xff]
    %v1508 = vld [vmem:[#allocation7 + $0xef0] sm:$0xff]
    %v1509 = vld [vmem:[#allocation7 + $0xef8] sm:$0xff]
    %v1510 = vld [vmem:[#allocation7 + $0xf00] sm:$0xff]
    %v1511 = vld [vmem:[#allocation7 + $0xf08] sm:$0xff]
    %v1512 = vld [vmem:[#allocation7 + $0xf10] sm:$0xff]
    %v1513 = vld [vmem:[#allocation7 + $0xf18] sm:$0xff]
    %v1514 = vld [vmem:[#allocation7 + $0xf20] sm:$0xff]
    %v1515 = vld [vmem:[#allocation7 + $0xf28] sm:$0xff]
    %v1516 = vld [vmem:[#allocation7 + $0xf30] sm:$0xff]
    %v1517 = vld [vmem:[#allocation7 + $0xf38] sm:$0xff]
    %v1518 = vld [vmem:[#allocation7 + $0xf40] sm:$0xff]
    %v1519 = vld [vmem:[#allocation7 + $0xf48] sm:$0xff]
    %v1520 = vld [vmem:[#allocation7 + $0xf50] sm:$0xff]
    %v1521 = vld [vmem:[#allocation7 + $0xf58] sm:$0xff]
    %v1522 = vld [vmem:[#allocation7 + $0xf60] sm:$0xff]
    %v1523 = vld [vmem:[#allocation7 + $0xf68] sm:$0xff]
    %v1524 = vld [vmem:[#allocation7 + $0xf70] sm:$0xff]
    %v1525 = vld [vmem:[#allocation7 + $0xf78] sm:$0xff]
    %v1526 = vld [vmem:[#allocation7 + $0xf80] sm:$0xff]
    %v1527 = vld [vmem:[#allocation7 + $0xf88] sm:$0xff]
    %v1528 = vld [vmem:[#allocation7 + $0xf90] sm:$0xff]
    %v1529 = vld [vmem:[#allocation7 + $0xf98] sm:$0xff]
    %v1530 = vld [vmem:[#allocation7 + $0xfa0] sm:$0xff]
    %v1531 = vld [vmem:[#allocation7 + $0xfa8] sm:$0xff]
    %v1532 = vld [vmem:[#allocation7 + $0xfb0] sm:$0xff]
    %v1533 = vld [vmem:[#allocation7 + $0xfb8] sm:$0xff]
    %v1534 = vld [vmem:[#allocation7 + $0xfc0] sm:$0xff]
    %v1535 = vld [vmem:[#allocation7 + $0xfc8] sm:$0xff]
    %v1536 = vld [vmem:[#allocation7 + $0xfd0] sm:$0xff]
    %v1537 = vld [vmem:[#allocation7 + $0xfd8] sm:$0xff]
    %v1538 = vld [vmem:[#allocation7 + $0xfe0] sm:$0xff]
    %v1539 = vld [vmem:[#allocation7 + $0xfe8] sm:$0xff]
    %v1540 = vld [vmem:[#allocation7 + $0xff0] sm:$0xff]
    %v1541 = vld [vmem:[#allocation7 + $0xff8] sm:$0xff]
    %v1542 = vld [vmem:[#allocation8] sm:$0xf]
    %v1544 = vperm.slane %v1542, 0
    %v1545 = vperm.slane %v1542, 1
    %v1546 = vperm.slane %v1542, 2
    %v1547 = vperm.slane %v1542, 3
    %v2064 = vunpack.c.l.b16 %v1030
    %v2065 = vunpack.c.h.b16 %v1030
    %v2066 = vunpack.c.l.b16 %v1031
    %v2067 = vunpack.c.h.b16 %v1031
    %v2068 = vunpack.c.l.b16 %v1032
    %v2069 = vunpack.c.h.b16 %v1032
    %v2070 = vunpack.c.l.b16 %v1033
    %v2071 = vunpack.c.h.b16 %v1033
    %v2072 = vunpack.c.l.b16 %v1034
    %v2073 = vunpack.c.h.b16 %v1034
    %v2074 = vunpack.c.l.b16 %v1035
    %v2075 = vunpack.c.h.b16 %v1035
    %v2076 = vunpack.c.l.b16 %v1036
    %v2077 = vunpack.c.h.b16 %v1036
    %v2078 = vunpack.c.l.b16 %v1037
    %v2079 = vunpack.c.h.b16 %v1037
    %v2080 = vunpack.c.l.b16 %v1038
    %v2081 = vunpack.c.h.b16 %v1038
    %v2082 = vunpack.c.l.b16 %v1039
    %v2083 = vunpack.c.h.b16 %v1039
    %v2084 = vunpack.c.l.b16 %v1040
    %v2085 = vunpack.c.h.b16 %v1040
    %v2086 = vunpack.c.l.b16 %v1041
    %v2087 = vunpack.c.h.b16 %v1041
    %v2088 = vunpack.c.l.b16 %v1042
    %v2089 = vunpack.c.h.b16 %v1042
    %v2090 = vunpack.c.l.b16 %v1043
    %v2091 = vunpack.c.h.b16 %v1043
    %v2092 = vunpack.c.l.b16 %v1044
    %v2093 = vunpack.c.h.b16 %v1044
    %v2094 = vunpack.c.l.b16 %v1045
    %v2095 = vunpack.c.h.b16 %v1045
    %v2096 = vunpack.c.l.b16 %v1046
    %v2097 = vunpack.c.h.b16 %v1046
    %v2098 = vunpack.c.l.b16 %v1047
    %v2099 = vunpack.c.h.b16 %v1047
    %v2100 = vunpack.c.l.b16 %v1048
    %v2101 = vunpack.c.h.b16 %v1048
    %v2102 = vunpack.c.l.b16 %v1049
    %v2103 = vunpack.c.h.b16 %v1049
    %v2104 = vunpack.c.l.b16 %v1050
    %v2105 = vunpack.c.h.b16 %v1050
    %v2106 = vunpack.c.l.b16 %v1051
    %v2107 = vunpack.c.h.b16 %v1051
    %v2108 = vunpack.c.l.b16 %v1052
    %v2109 = vunpack.c.h.b16 %v1052
    %v2110 = vunpack.c.l.b16 %v1053
    %v2111 = vunpack.c.h.b16 %v1053
    %v2112 = vunpack.c.l.b16 %v1054
    %v2113 = vunpack.c.h.b16 %v1054
    %v2114 = vunpack.c.l.b16 %v1055
    %v2115 = vunpack.c.h.b16 %v1055
    %v2116 = vunpack.c.l.b16 %v1056
    %v2117 = vunpack.c.h.b16 %v1056
    %v2118 = vunpack.c.l.b16 %v1057
    %v2119 = vunpack.c.h.b16 %v1057
    %v2120 = vunpack.c.l.b16 %v1058
    %v2121 = vunpack.c.h.b16 %v1058
    %v2122 = vunpack.c.l.b16 %v1059
    %v2123 = vunpack.c.h.b16 %v1059
    %v2124 = vunpack.c.l.b16 %v1060
    %v2125 = vunpack.c.h.b16 %v1060
    %v2126 = vunpack.c.l.b16 %v1061
    %v2127 = vunpack.c.h.b16 %v1061
    %v2128 = vunpack.c.l.b16 %v1062
    %v2129 = vunpack.c.h.b16 %v1062
    %v2130 = vunpack.c.l.b16 %v1063
    %v2131 = vunpack.c.h.b16 %v1063
    %v2132 = vunpack.c.l.b16 %v1064
    %v2133 = vunpack.c.h.b16 %v1064
    %v2134 = vunpack.c.l.b16 %v1065
    %v2135 = vunpack.c.h.b16 %v1065
    %v2136 = vunpack.c.l.b16 %v1066
    %v2137 = vunpack.c.h.b16 %v1066
    %v2138 = vunpack.c.l.b16 %v1067
    %v2139 = vunpack.c.h.b16 %v1067
    %v2140 = vunpack.c.l.b16 %v1068
    %v2141 = vunpack.c.h.b16 %v1068
    %v2142 = vunpack.c.l.b16 %v1069
    %v2143 = vunpack.c.h.b16 %v1069
    %v2144 = vunpack.c.l.b16 %v1070
    %v2145 = vunpack.c.h.b16 %v1070
    %v2146 = vunpack.c.l.b16 %v1071
    %v2147 = vunpack.c.h.b16 %v1071
    %v2148 = vunpack.c.l.b16 %v1072
    %v2149 = vunpack.c.h.b16 %v1072
    %v2150 = vunpack.c.l.b16 %v1073
    %v2151 = vunpack.c.h.b16 %v1073
    %v2152 = vunpack.c.l.b16 %v1074
    %v2153 = vunpack.c.h.b16 %v1074
    %v2154 = vunpack.c.l.b16 %v1075
    %v2155 = vunpack.c.h.b16 %v1075
    %v2156 = vunpack.c.l.b16 %v1076
    %v2157 = vunpack.c.h.b16 %v1076
    %v2158 = vunpack.c.l.b16 %v1077
    %v2159 = vunpack.c.h.b16 %v1077
    %v2160 = vunpack.c.l.b16 %v1078
    %v2161 = vunpack.c.h.b16 %v1078
    %v2162 = vunpack.c.l.b16 %v1079
    %v2163 = vunpack.c.h.b16 %v1079
    %v2164 = vunpack.c.l.b16 %v1080
    %v2165 = vunpack.c.h.b16 %v1080
    %v2166 = vunpack.c.l.b16 %v1081
    %v2167 = vunpack.c.h.b16 %v1081
    %v2168 = vunpack.c.l.b16 %v1082
    %v2169 = vunpack.c.h.b16 %v1082
    %v2170 = vunpack.c.l.b16 %v1083
    %v2171 = vunpack.c.h.b16 %v1083
    %v2172 = vunpack.c.l.b16 %v1084
    %v2173 = vunpack.c.h.b16 %v1084
    %v2174 = vunpack.c.l.b16 %v1085
    %v2175 = vunpack.c.h.b16 %v1085
    %v2176 = vunpack.c.l.b16 %v1086
    %v2177 = vunpack.c.h.b16 %v1086
    %v2178 = vunpack.c.l.b16 %v1087
    %v2179 = vunpack.c.h.b16 %v1087
    %v2180 = vunpack.c.l.b16 %v1088
    %v2181 = vunpack.c.h.b16 %v1088
    %v2182 = vunpack.c.l.b16 %v1089
    %v2183 = vunpack.c.h.b16 %v1089
    %v2184 = vunpack.c.l.b16 %v1090
    %v2185 = vunpack.c.h.b16 %v1090
    %v2186 = vunpack.c.l.b16 %v1091
    %v2187 = vunpack.c.h.b16 %v1091
    %v2188 = vunpack.c.l.b16 %v1092
    %v2189 = vunpack.c.h.b16 %v1092
    %v2190 = vunpack.c.l.b16 %v1093
    %v2191 = vunpack.c.h.b16 %v1093
    %v2192 = vunpack.c.l.b16 %v1094
    %v2193 = vunpack.c.h.b16 %v1094
    %v2194 = vunpack.c.l.b16 %v1095
    %v2195 = vunpack.c.h.b16 %v1095
    %v2196 = vunpack.c.l.b16 %v1096
    %v2197 = vunpack.c.h.b16 %v1096
    %v2198 = vunpack.c.l.b16 %v1097
    %v2199 = vunpack.c.h.b16 %v1097
    %v2200 = vunpack.c.l.b16 %v1098
    %v2201 = vunpack.c.h.b16 %v1098
    %v2202 = vunpack.c.l.b16 %v1099
    %v2203 = vunpack.c.h.b16 %v1099
    %v2204 = vunpack.c.l.b16 %v1100
    %v2205 = vunpack.c.h.b16 %v1100
    %v2206 = vunpack.c.l.b16 %v1101
    %v2207 = vunpack.c.h.b16 %v1101
    %v2208 = vunpack.c.l.b16 %v1102
    %v2209 = vunpack.c.h.b16 %v1102
    %v2210 = vunpack.c.l.b16 %v1103
    %v2211 = vunpack.c.h.b16 %v1103
    %v2212 = vunpack.c.l.b16 %v1104
    %v2213 = vunpack.c.h.b16 %v1104
    %v2214 = vunpack.c.l.b16 %v1105
    %v2215 = vunpack.c.h.b16 %v1105
    %v2216 = vunpack.c.l.b16 %v1106
    %v2217 = vunpack.c.h.b16 %v1106
    %v2218 = vunpack.c.l.b16 %v1107
    %v2219 = vunpack.c.h.b16 %v1107
    %v2220 = vunpack.c.l.b16 %v1108
    %v2221 = vunpack.c.h.b16 %v1108
    %v2222 = vunpack.c.l.b16 %v1109
    %v2223 = vunpack.c.h.b16 %v1109
    %v2224 = vunpack.c.l.b16 %v1110
    %v2225 = vunpack.c.h.b16 %v1110
    %v2226 = vunpack.c.l.b16 %v1111
    %v2227 = vunpack.c.h.b16 %v1111
    %v2228 = vunpack.c.l.b16 %v1112
    %v2229 = vunpack.c.h.b16 %v1112
    %v2230 = vunpack.c.l.b16 %v1113
    %v2231 = vunpack.c.h.b16 %v1113
    %v2232 = vunpack.c.l.b16 %v1114
    %v2233 = vunpack.c.h.b16 %v1114
    %v2234 = vunpack.c.l.b16 %v1115
    %v2235 = vunpack.c.h.b16 %v1115
    %v2236 = vunpack.c.l.b16 %v1116
    %v2237 = vunpack.c.h.b16 %v1116
    %v2238 = vunpack.c.l.b16 %v1117
    %v2239 = vunpack.c.h.b16 %v1117
    %v2240 = vunpack.c.l.b16 %v1118
    %v2241 = vunpack.c.h.b16 %v1118
    %v2242 = vunpack.c.l.b16 %v1119
    %v2243 = vunpack.c.h.b16 %v1119
    %v2244 = vunpack.c.l.b16 %v1120
    %v2245 = vunpack.c.h.b16 %v1120
    %v2246 = vunpack.c.l.b16 %v1121
    %v2247 = vunpack.c.h.b16 %v1121
    %v2248 = vunpack.c.l.b16 %v1122
    %v2249 = vunpack.c.h.b16 %v1122
    %v2250 = vunpack.c.l.b16 %v1123
    %v2251 = vunpack.c.h.b16 %v1123
    %v2252 = vunpack.c.l.b16 %v1124
    %v2253 = vunpack.c.h.b16 %v1124
    %v2254 = vunpack.c.l.b16 %v1125
    %v2255 = vunpack.c.h.b16 %v1125
    %v2256 = vunpack.c.l.b16 %v1126
    %v2257 = vunpack.c.h.b16 %v1126
    %v2258 = vunpack.c.l.b16 %v1127
    %v2259 = vunpack.c.h.b16 %v1127
    %v2260 = vunpack.c.l.b16 %v1128
    %v2261 = vunpack.c.h.b16 %v1128
    %v2262 = vunpack.c.l.b16 %v1129
    %v2263 = vunpack.c.h.b16 %v1129
    %v2264 = vunpack.c.l.b16 %v1130
    %v2265 = vunpack.c.h.b16 %v1130
    %v2266 = vunpack.c.l.b16 %v1131
    %v2267 = vunpack.c.h.b16 %v1131
    %v2268 = vunpack.c.l.b16 %v1132
    %v2269 = vunpack.c.h.b16 %v1132
    %v2270 = vunpack.c.l.b16 %v1133
    %v2271 = vunpack.c.h.b16 %v1133
    %v2272 = vunpack.c.l.b16 %v1134
    %v2273 = vunpack.c.h.b16 %v1134
    %v2274 = vunpack.c.l.b16 %v1135
    %v2275 = vunpack.c.h.b16 %v1135
    %v2276 = vunpack.c.l.b16 %v1136
    %v2277 = vunpack.c.h.b16 %v1136
    %v2278 = vunpack.c.l.b16 %v1137
    %v2279 = vunpack.c.h.b16 %v1137
    %v2280 = vunpack.c.l.b16 %v1138
    %v2281 = vunpack.c.h.b16 %v1138
    %v2282 = vunpack.c.l.b16 %v1139
    %v2283 = vunpack.c.h.b16 %v1139
    %v2284 = vunpack.c.l.b16 %v1140
    %v2285 = vunpack.c.h.b16 %v1140
    %v2286 = vunpack.c.l.b16 %v1141
    %v2287 = vunpack.c.h.b16 %v1141
    %v2288 = vunpack.c.l.b16 %v1142
    %v2289 = vunpack.c.h.b16 %v1142
    %v2290 = vunpack.c.l.b16 %v1143
    %v2291 = vunpack.c.h.b16 %v1143
    %v2292 = vunpack.c.l.b16 %v1144
    %v2293 = vunpack.c.h.b16 %v1144
    %v2294 = vunpack.c.l.b16 %v1145
    %v2295 = vunpack.c.h.b16 %v1145
    %v2296 = vunpack.c.l.b16 %v1146
    %v2297 = vunpack.c.h.b16 %v1146
    %v2298 = vunpack.c.l.b16 %v1147
    %v2299 = vunpack.c.h.b16 %v1147
    %v2300 = vunpack.c.l.b16 %v1148
    %v2301 = vunpack.c.h.b16 %v1148
    %v2302 = vunpack.c.l.b16 %v1149
    %v2303 = vunpack.c.h.b16 %v1149
    %v2304 = vunpack.c.l.b16 %v1150
    %v2305 = vunpack.c.h.b16 %v1150
    %v2306 = vunpack.c.l.b16 %v1151
    %v2307 = vunpack.c.h.b16 %v1151
    %v2308 = vunpack.c.l.b16 %v1152
    %v2309 = vunpack.c.h.b16 %v1152
    %v2310 = vunpack.c.l.b16 %v1153
    %v2311 = vunpack.c.h.b16 %v1153
    %v2312 = vunpack.c.l.b16 %v1154
    %v2313 = vunpack.c.h.b16 %v1154
    %v2314 = vunpack.c.l.b16 %v1155
    %v2315 = vunpack.c.h.b16 %v1155
    %v2316 = vunpack.c.l.b16 %v1156
    %v2317 = vunpack.c.h.b16 %v1156
    %v2318 = vunpack.c.l.b16 %v1157
    %v2319 = vunpack.c.h.b16 %v1157
    %v2320 = vunpack.c.l.b16 %v1158
    %v2321 = vunpack.c.h.b16 %v1158
    %v2322 = vunpack.c.l.b16 %v1159
    %v2323 = vunpack.c.h.b16 %v1159
    %v2324 = vunpack.c.l.b16 %v1160
    %v2325 = vunpack.c.h.b16 %v1160
    %v2326 = vunpack.c.l.b16 %v1161
    %v2327 = vunpack.c.h.b16 %v1161
    %v2328 = vunpack.c.l.b16 %v1162
    %v2329 = vunpack.c.h.b16 %v1162
    %v2330 = vunpack.c.l.b16 %v1163
    %v2331 = vunpack.c.h.b16 %v1163
    %v2332 = vunpack.c.l.b16 %v1164
    %v2333 = vunpack.c.h.b16 %v1164
    %v2334 = vunpack.c.l.b16 %v1165
    %v2335 = vunpack.c.h.b16 %v1165
    %v2336 = vunpack.c.l.b16 %v1166
    %v2337 = vunpack.c.h.b16 %v1166
    %v2338 = vunpack.c.l.b16 %v1167
    %v2339 = vunpack.c.h.b16 %v1167
    %v2340 = vunpack.c.l.b16 %v1168
    %v2341 = vunpack.c.h.b16 %v1168
    %v2342 = vunpack.c.l.b16 %v1169
    %v2343 = vunpack.c.h.b16 %v1169
    %v2344 = vunpack.c.l.b16 %v1170
    %v2345 = vunpack.c.h.b16 %v1170
    %v2346 = vunpack.c.l.b16 %v1171
    %v2347 = vunpack.c.h.b16 %v1171
    %v2348 = vunpack.c.l.b16 %v1172
    %v2349 = vunpack.c.h.b16 %v1172
    %v2350 = vunpack.c.l.b16 %v1173
    %v2351 = vunpack.c.h.b16 %v1173
    %v2352 = vunpack.c.l.b16 %v1174
    %v2353 = vunpack.c.h.b16 %v1174
    %v2354 = vunpack.c.l.b16 %v1175
    %v2355 = vunpack.c.h.b16 %v1175
    %v2356 = vunpack.c.l.b16 %v1176
    %v2357 = vunpack.c.h.b16 %v1176
    %v2358 = vunpack.c.l.b16 %v1177
    %v2359 = vunpack.c.h.b16 %v1177
    %v2360 = vunpack.c.l.b16 %v1178
    %v2361 = vunpack.c.h.b16 %v1178
    %v2362 = vunpack.c.l.b16 %v1179
    %v2363 = vunpack.c.h.b16 %v1179
    %v2364 = vunpack.c.l.b16 %v1180
    %v2365 = vunpack.c.h.b16 %v1180
    %v2366 = vunpack.c.l.b16 %v1181
    %v2367 = vunpack.c.h.b16 %v1181
    %v2368 = vunpack.c.l.b16 %v1182
    %v2369 = vunpack.c.h.b16 %v1182
    %v2370 = vunpack.c.l.b16 %v1183
    %v2371 = vunpack.c.h.b16 %v1183
    %v2372 = vunpack.c.l.b16 %v1184
    %v2373 = vunpack.c.h.b16 %v1184
    %v2374 = vunpack.c.l.b16 %v1185
    %v2375 = vunpack.c.h.b16 %v1185
    %v2376 = vunpack.c.l.b16 %v1186
    %v2377 = vunpack.c.h.b16 %v1186
    %v2378 = vunpack.c.l.b16 %v1187
    %v2379 = vunpack.c.h.b16 %v1187
    %v2380 = vunpack.c.l.b16 %v1188
    %v2381 = vunpack.c.h.b16 %v1188
    %v2382 = vunpack.c.l.b16 %v1189
    %v2383 = vunpack.c.h.b16 %v1189
    %v2384 = vunpack.c.l.b16 %v1190
    %v2385 = vunpack.c.h.b16 %v1190
    %v2386 = vunpack.c.l.b16 %v1191
    %v2387 = vunpack.c.h.b16 %v1191
    %v2388 = vunpack.c.l.b16 %v1192
    %v2389 = vunpack.c.h.b16 %v1192
    %v2390 = vunpack.c.l.b16 %v1193
    %v2391 = vunpack.c.h.b16 %v1193
    %v2392 = vunpack.c.l.b16 %v1194
    %v2393 = vunpack.c.h.b16 %v1194
    %v2394 = vunpack.c.l.b16 %v1195
    %v2395 = vunpack.c.h.b16 %v1195
    %v2396 = vunpack.c.l.b16 %v1196
    %v2397 = vunpack.c.h.b16 %v1196
    %v2398 = vunpack.c.l.b16 %v1197
    %v2399 = vunpack.c.h.b16 %v1197
    %v2400 = vunpack.c.l.b16 %v1198
    %v2401 = vunpack.c.h.b16 %v1198
    %v2402 = vunpack.c.l.b16 %v1199
    %v2403 = vunpack.c.h.b16 %v1199
    %v2404 = vunpack.c.l.b16 %v1200
    %v2405 = vunpack.c.h.b16 %v1200
    %v2406 = vunpack.c.l.b16 %v1201
    %v2407 = vunpack.c.h.b16 %v1201
    %v2408 = vunpack.c.l.b16 %v1202
    %v2409 = vunpack.c.h.b16 %v1202
    %v2410 = vunpack.c.l.b16 %v1203
    %v2411 = vunpack.c.h.b16 %v1203
    %v2412 = vunpack.c.l.b16 %v1204
    %v2413 = vunpack.c.h.b16 %v1204
    %v2414 = vunpack.c.l.b16 %v1205
    %v2415 = vunpack.c.h.b16 %v1205
    %v2416 = vunpack.c.l.b16 %v1206
    %v2417 = vunpack.c.h.b16 %v1206
    %v2418 = vunpack.c.l.b16 %v1207
    %v2419 = vunpack.c.h.b16 %v1207
    %v2420 = vunpack.c.l.b16 %v1208
    %v2421 = vunpack.c.h.b16 %v1208
    %v2422 = vunpack.c.l.b16 %v1209
    %v2423 = vunpack.c.h.b16 %v1209
    %v2424 = vunpack.c.l.b16 %v1210
    %v2425 = vunpack.c.h.b16 %v1210
    %v2426 = vunpack.c.l.b16 %v1211
    %v2427 = vunpack.c.h.b16 %v1211
    %v2428 = vunpack.c.l.b16 %v1212
    %v2429 = vunpack.c.h.b16 %v1212
    %v2430 = vunpack.c.l.b16 %v1213
    %v2431 = vunpack.c.h.b16 %v1213
    %v2432 = vunpack.c.l.b16 %v1214
    %v2433 = vunpack.c.h.b16 %v1214
    %v2434 = vunpack.c.l.b16 %v1215
    %v2435 = vunpack.c.h.b16 %v1215
    %v2436 = vunpack.c.l.b16 %v1216
    %v2437 = vunpack.c.h.b16 %v1216
    %v2438 = vunpack.c.l.b16 %v1217
    %v2439 = vunpack.c.h.b16 %v1217
    %v2440 = vunpack.c.l.b16 %v1218
    %v2441 = vunpack.c.h.b16 %v1218
    %v2442 = vunpack.c.l.b16 %v1219
    %v2443 = vunpack.c.h.b16 %v1219
    %v2444 = vunpack.c.l.b16 %v1220
    %v2445 = vunpack.c.h.b16 %v1220
    %v2446 = vunpack.c.l.b16 %v1221
    %v2447 = vunpack.c.h.b16 %v1221
    %v2448 = vunpack.c.l.b16 %v1222
    %v2449 = vunpack.c.h.b16 %v1222
    %v2450 = vunpack.c.l.b16 %v1223
    %v2451 = vunpack.c.h.b16 %v1223
    %v2452 = vunpack.c.l.b16 %v1224
    %v2453 = vunpack.c.h.b16 %v1224
    %v2454 = vunpack.c.l.b16 %v1225
    %v2455 = vunpack.c.h.b16 %v1225
    %v2456 = vunpack.c.l.b16 %v1226
    %v2457 = vunpack.c.h.b16 %v1226
    %v2458 = vunpack.c.l.b16 %v1227
    %v2459 = vunpack.c.h.b16 %v1227
    %v2460 = vunpack.c.l.b16 %v1228
    %v2461 = vunpack.c.h.b16 %v1228
    %v2462 = vunpack.c.l.b16 %v1229
    %v2463 = vunpack.c.h.b16 %v1229
    %v2464 = vunpack.c.l.b16 %v1230
    %v2465 = vunpack.c.h.b16 %v1230
    %v2466 = vunpack.c.l.b16 %v1231
    %v2467 = vunpack.c.h.b16 %v1231
    %v2468 = vunpack.c.l.b16 %v1232
    %v2469 = vunpack.c.h.b16 %v1232
    %v2470 = vunpack.c.l.b16 %v1233
    %v2471 = vunpack.c.h.b16 %v1233
    %v2472 = vunpack.c.l.b16 %v1234
    %v2473 = vunpack.c.h.b16 %v1234
    %v2474 = vunpack.c.l.b16 %v1235
    %v2475 = vunpack.c.h.b16 %v1235
    %v2476 = vunpack.c.l.b16 %v1236
    %v2477 = vunpack.c.h.b16 %v1236
    %v2478 = vunpack.c.l.b16 %v1237
    %v2479 = vunpack.c.h.b16 %v1237
    %v2480 = vunpack.c.l.b16 %v1238
    %v2481 = vunpack.c.h.b16 %v1238
    %v2482 = vunpack.c.l.b16 %v1239
    %v2483 = vunpack.c.h.b16 %v1239
    %v2484 = vunpack.c.l.b16 %v1240
    %v2485 = vunpack.c.h.b16 %v1240
    %v2486 = vunpack.c.l.b16 %v1241
    %v2487 = vunpack.c.h.b16 %v1241
    %v2488 = vunpack.c.l.b16 %v1242
    %v2489 = vunpack.c.h.b16 %v1242
    %v2490 = vunpack.c.l.b16 %v1243
    %v2491 = vunpack.c.h.b16 %v1243
    %v2492 = vunpack.c.l.b16 %v1244
    %v2493 = vunpack.c.h.b16 %v1244
    %v2494 = vunpack.c.l.b16 %v1245
    %v2495 = vunpack.c.h.b16 %v1245
    %v2496 = vunpack.c.l.b16 %v1246
    %v2497 = vunpack.c.h.b16 %v1246
    %v2498 = vunpack.c.l.b16 %v1247
    %v2499 = vunpack.c.h.b16 %v1247
    %v2500 = vunpack.c.l.b16 %v1248
    %v2501 = vunpack.c.h.b16 %v1248
    %v2502 = vunpack.c.l.b16 %v1249
    %v2503 = vunpack.c.h.b16 %v1249
    %v2504 = vunpack.c.l.b16 %v1250
    %v2505 = vunpack.c.h.b16 %v1250
    %v2506 = vunpack.c.l.b16 %v1251
    %v2507 = vunpack.c.h.b16 %v1251
    %v2508 = vunpack.c.l.b16 %v1252
    %v2509 = vunpack.c.h.b16 %v1252
    %v2510 = vunpack.c.l.b16 %v1253
    %v2511 = vunpack.c.h.b16 %v1253
    %v2512 = vunpack.c.l.b16 %v1254
    %v2513 = vunpack.c.h.b16 %v1254
    %v2514 = vunpack.c.l.b16 %v1255
    %v2515 = vunpack.c.h.b16 %v1255
    %v2516 = vunpack.c.l.b16 %v1256
    %v2517 = vunpack.c.h.b16 %v1256
    %v2518 = vunpack.c.l.b16 %v1257
    %v2519 = vunpack.c.h.b16 %v1257
    %v2520 = vunpack.c.l.b16 %v1258
    %v2521 = vunpack.c.h.b16 %v1258
    %v2522 = vunpack.c.l.b16 %v1259
    %v2523 = vunpack.c.h.b16 %v1259
    %v2524 = vunpack.c.l.b16 %v1260
    %v2525 = vunpack.c.h.b16 %v1260
    %v2526 = vunpack.c.l.b16 %v1261
    %v2527 = vunpack.c.h.b16 %v1261
    %v2528 = vunpack.c.l.b16 %v1262
    %v2529 = vunpack.c.h.b16 %v1262
    %v2530 = vunpack.c.l.b16 %v1263
    %v2531 = vunpack.c.h.b16 %v1263
    %v2532 = vunpack.c.l.b16 %v1264
    %v2533 = vunpack.c.h.b16 %v1264
    %v2534 = vunpack.c.l.b16 %v1265
    %v2535 = vunpack.c.h.b16 %v1265
    %v2536 = vunpack.c.l.b16 %v1266
    %v2537 = vunpack.c.h.b16 %v1266
    %v2538 = vunpack.c.l.b16 %v1267
    %v2539 = vunpack.c.h.b16 %v1267
    %v2540 = vunpack.c.l.b16 %v1268
    %v2541 = vunpack.c.h.b16 %v1268
    %v2542 = vunpack.c.l.b16 %v1269
    %v2543 = vunpack.c.h.b16 %v1269
    %v2544 = vunpack.c.l.b16 %v1270
    %v2545 = vunpack.c.h.b16 %v1270
    %v2546 = vunpack.c.l.b16 %v1271
    %v2547 = vunpack.c.h.b16 %v1271
    %v2548 = vunpack.c.l.b16 %v1272
    %v2549 = vunpack.c.h.b16 %v1272
    %v2550 = vunpack.c.l.b16 %v1273
    %v2551 = vunpack.c.h.b16 %v1273
    %v2552 = vunpack.c.l.b16 %v1274
    %v2553 = vunpack.c.h.b16 %v1274
    %v2554 = vunpack.c.l.b16 %v1275
    %v2555 = vunpack.c.h.b16 %v1275
    %v2556 = vunpack.c.l.b16 %v1276
    %v2557 = vunpack.c.h.b16 %v1276
    %v2558 = vunpack.c.l.b16 %v1277
    %v2559 = vunpack.c.h.b16 %v1277
    %v2560 = vunpack.c.l.b16 %v1278
    %v2561 = vunpack.c.h.b16 %v1278
    %v2562 = vunpack.c.l.b16 %v1279
    %v2563 = vunpack.c.h.b16 %v1279
    %v2564 = vunpack.c.l.b16 %v1280
    %v2565 = vunpack.c.h.b16 %v1280
    %v2566 = vunpack.c.l.b16 %v1281
    %v2567 = vunpack.c.h.b16 %v1281
    %v2568 = vunpack.c.l.b16 %v1282
    %v2569 = vunpack.c.h.b16 %v1282
    %v2570 = vunpack.c.l.b16 %v1283
    %v2571 = vunpack.c.h.b16 %v1283
    %v2572 = vunpack.c.l.b16 %v1284
    %v2573 = vunpack.c.h.b16 %v1284
    %v2574 = vunpack.c.l.b16 %v1285
    %v2575 = vunpack.c.h.b16 %v1285
    %v2576 = vunpack.c.l.b16 %v1286
    %v2577 = vunpack.c.h.b16 %v1286
    %v2578 = vunpack.c.l.b16 %v1287
    %v2579 = vunpack.c.h.b16 %v1287
    %v2580 = vunpack.c.l.b16 %v1288
    %v2581 = vunpack.c.h.b16 %v1288
    %v2582 = vunpack.c.l.b16 %v1289
    %v2583 = vunpack.c.h.b16 %v1289
    %v2584 = vunpack.c.l.b16 %v1290
    %v2585 = vunpack.c.h.b16 %v1290
    %v2586 = vunpack.c.l.b16 %v1291
    %v2587 = vunpack.c.h.b16 %v1291
    %v2588 = vunpack.c.l.b16 %v1292
    %v2589 = vunpack.c.h.b16 %v1292
    %v2590 = vunpack.c.l.b16 %v1293
    %v2591 = vunpack.c.h.b16 %v1293
    %v2592 = vunpack.c.l.b16 %v1294
    %v2593 = vunpack.c.h.b16 %v1294
    %v2594 = vunpack.c.l.b16 %v1295
    %v2595 = vunpack.c.h.b16 %v1295
    %v2596 = vunpack.c.l.b16 %v1296
    %v2597 = vunpack.c.h.b16 %v1296
    %v2598 = vunpack.c.l.b16 %v1297
    %v2599 = vunpack.c.h.b16 %v1297
    %v2600 = vunpack.c.l.b16 %v1298
    %v2601 = vunpack.c.h.b16 %v1298
    %v2602 = vunpack.c.l.b16 %v1299
    %v2603 = vunpack.c.h.b16 %v1299
    %v2604 = vunpack.c.l.b16 %v1300
    %v2605 = vunpack.c.h.b16 %v1300
    %v2606 = vunpack.c.l.b16 %v1301
    %v2607 = vunpack.c.h.b16 %v1301
    %v2608 = vunpack.c.l.b16 %v1302
    %v2609 = vunpack.c.h.b16 %v1302
    %v2610 = vunpack.c.l.b16 %v1303
    %v2611 = vunpack.c.h.b16 %v1303
    %v2612 = vunpack.c.l.b16 %v1304
    %v2613 = vunpack.c.h.b16 %v1304
    %v2614 = vunpack.c.l.b16 %v1305
    %v2615 = vunpack.c.h.b16 %v1305
    %v2616 = vunpack.c.l.b16 %v1306
    %v2617 = vunpack.c.h.b16 %v1306
    %v2618 = vunpack.c.l.b16 %v1307
    %v2619 = vunpack.c.h.b16 %v1307
    %v2620 = vunpack.c.l.b16 %v1308
    %v2621 = vunpack.c.h.b16 %v1308
    %v2622 = vunpack.c.l.b16 %v1309
    %v2623 = vunpack.c.h.b16 %v1309
    %v2624 = vunpack.c.l.b16 %v1310
    %v2625 = vunpack.c.h.b16 %v1310
    %v2626 = vunpack.c.l.b16 %v1311
    %v2627 = vunpack.c.h.b16 %v1311
    %v2628 = vunpack.c.l.b16 %v1312
    %v2629 = vunpack.c.h.b16 %v1312
    %v2630 = vunpack.c.l.b16 %v1313
    %v2631 = vunpack.c.h.b16 %v1313
    %v2632 = vunpack.c.l.b16 %v1314
    %v2633 = vunpack.c.h.b16 %v1314
    %v2634 = vunpack.c.l.b16 %v1315
    %v2635 = vunpack.c.h.b16 %v1315
    %v2636 = vunpack.c.l.b16 %v1316
    %v2637 = vunpack.c.h.b16 %v1316
    %v2638 = vunpack.c.l.b16 %v1317
    %v2639 = vunpack.c.h.b16 %v1317
    %v2640 = vunpack.c.l.b16 %v1318
    %v2641 = vunpack.c.h.b16 %v1318
    %v2642 = vunpack.c.l.b16 %v1319
    %v2643 = vunpack.c.h.b16 %v1319
    %v2644 = vunpack.c.l.b16 %v1320
    %v2645 = vunpack.c.h.b16 %v1320
    %v2646 = vunpack.c.l.b16 %v1321
    %v2647 = vunpack.c.h.b16 %v1321
    %v2648 = vunpack.c.l.b16 %v1322
    %v2649 = vunpack.c.h.b16 %v1322
    %v2650 = vunpack.c.l.b16 %v1323
    %v2651 = vunpack.c.h.b16 %v1323
    %v2652 = vunpack.c.l.b16 %v1324
    %v2653 = vunpack.c.h.b16 %v1324
    %v2654 = vunpack.c.l.b16 %v1325
    %v2655 = vunpack.c.h.b16 %v1325
    %v2656 = vunpack.c.l.b16 %v1326
    %v2657 = vunpack.c.h.b16 %v1326
    %v2658 = vunpack.c.l.b16 %v1327
    %v2659 = vunpack.c.h.b16 %v1327
    %v2660 = vunpack.c.l.b16 %v1328
    %v2661 = vunpack.c.h.b16 %v1328
    %v2662 = vunpack.c.l.b16 %v1329
    %v2663 = vunpack.c.h.b16 %v1329
    %v2664 = vunpack.c.l.b16 %v1330
    %v2665 = vunpack.c.h.b16 %v1330
    %v2666 = vunpack.c.l.b16 %v1331
    %v2667 = vunpack.c.h.b16 %v1331
    %v2668 = vunpack.c.l.b16 %v1332
    %v2669 = vunpack.c.h.b16 %v1332
    %v2670 = vunpack.c.l.b16 %v1333
    %v2671 = vunpack.c.h.b16 %v1333
    %v2672 = vunpack.c.l.b16 %v1334
    %v2673 = vunpack.c.h.b16 %v1334
    %v2674 = vunpack.c.l.b16 %v1335
    %v2675 = vunpack.c.h.b16 %v1335
    %v2676 = vunpack.c.l.b16 %v1336
    %v2677 = vunpack.c.h.b16 %v1336
    %v2678 = vunpack.c.l.b16 %v1337
    %v2679 = vunpack.c.h.b16 %v1337
    %v2680 = vunpack.c.l.b16 %v1338
    %v2681 = vunpack.c.h.b16 %v1338
    %v2682 = vunpack.c.l.b16 %v1339
    %v2683 = vunpack.c.h.b16 %v1339
    %v2684 = vunpack.c.l.b16 %v1340
    %v2685 = vunpack.c.h.b16 %v1340
    %v2686 = vunpack.c.l.b16 %v1341
    %v2687 = vunpack.c.h.b16 %v1341
    %v2688 = vunpack.c.l.b16 %v1342
    %v2689 = vunpack.c.h.b16 %v1342
    %v2690 = vunpack.c.l.b16 %v1343
    %v2691 = vunpack.c.h.b16 %v1343
    %v2692 = vunpack.c.l.b16 %v1344
    %v2693 = vunpack.c.h.b16 %v1344
    %v2694 = vunpack.c.l.b16 %v1345
    %v2695 = vunpack.c.h.b16 %v1345
    %v2696 = vunpack.c.l.b16 %v1346
    %v2697 = vunpack.c.h.b16 %v1346
    %v2698 = vunpack.c.l.b16 %v1347
    %v2699 = vunpack.c.h.b16 %v1347
    %v2700 = vunpack.c.l.b16 %v1348
    %v2701 = vunpack.c.h.b16 %v1348
    %v2702 = vunpack.c.l.b16 %v1349
    %v2703 = vunpack.c.h.b16 %v1349
    %v2704 = vunpack.c.l.b16 %v1350
    %v2705 = vunpack.c.h.b16 %v1350
    %v2706 = vunpack.c.l.b16 %v1351
    %v2707 = vunpack.c.h.b16 %v1351
    %v2708 = vunpack.c.l.b16 %v1352
    %v2709 = vunpack.c.h.b16 %v1352
    %v2710 = vunpack.c.l.b16 %v1353
    %v2711 = vunpack.c.h.b16 %v1353
    %v2712 = vunpack.c.l.b16 %v1354
    %v2713 = vunpack.c.h.b16 %v1354
    %v2714 = vunpack.c.l.b16 %v1355
    %v2715 = vunpack.c.h.b16 %v1355
    %v2716 = vunpack.c.l.b16 %v1356
    %v2717 = vunpack.c.h.b16 %v1356
    %v2718 = vunpack.c.l.b16 %v1357
    %v2719 = vunpack.c.h.b16 %v1357
    %v2720 = vunpack.c.l.b16 %v1358
    %v2721 = vunpack.c.h.b16 %v1358
    %v2722 = vunpack.c.l.b16 %v1359
    %v2723 = vunpack.c.h.b16 %v1359
    %v2724 = vunpack.c.l.b16 %v1360
    %v2725 = vunpack.c.h.b16 %v1360
    %v2726 = vunpack.c.l.b16 %v1361
    %v2727 = vunpack.c.h.b16 %v1361
    %v2728 = vunpack.c.l.b16 %v1362
    %v2729 = vunpack.c.h.b16 %v1362
    %v2730 = vunpack.c.l.b16 %v1363
    %v2731 = vunpack.c.h.b16 %v1363
    %v2732 = vunpack.c.l.b16 %v1364
    %v2733 = vunpack.c.h.b16 %v1364
    %v2734 = vunpack.c.l.b16 %v1365
    %v2735 = vunpack.c.h.b16 %v1365
    %v2736 = vunpack.c.l.b16 %v1366
    %v2737 = vunpack.c.h.b16 %v1366
    %v2738 = vunpack.c.l.b16 %v1367
    %v2739 = vunpack.c.h.b16 %v1367
    %v2740 = vunpack.c.l.b16 %v1368
    %v2741 = vunpack.c.h.b16 %v1368
    %v2742 = vunpack.c.l.b16 %v1369
    %v2743 = vunpack.c.h.b16 %v1369
    %v2744 = vunpack.c.l.b16 %v1370
    %v2745 = vunpack.c.h.b16 %v1370
    %v2746 = vunpack.c.l.b16 %v1371
    %v2747 = vunpack.c.h.b16 %v1371
    %v2748 = vunpack.c.l.b16 %v1372
    %v2749 = vunpack.c.h.b16 %v1372
    %v2750 = vunpack.c.l.b16 %v1373
    %v2751 = vunpack.c.h.b16 %v1373
    %v2752 = vunpack.c.l.b16 %v1374
    %v2753 = vunpack.c.h.b16 %v1374
    %v2754 = vunpack.c.l.b16 %v1375
    %v2755 = vunpack.c.h.b16 %v1375
    %v2756 = vunpack.c.l.b16 %v1376
    %v2757 = vunpack.c.h.b16 %v1376
    %v2758 = vunpack.c.l.b16 %v1377
    %v2759 = vunpack.c.h.b16 %v1377
    %v2760 = vunpack.c.l.b16 %v1378
    %v2761 = vunpack.c.h.b16 %v1378
    %v2762 = vunpack.c.l.b16 %v1379
    %v2763 = vunpack.c.h.b16 %v1379
    %v2764 = vunpack.c.l.b16 %v1380
    %v2765 = vunpack.c.h.b16 %v1380
    %v2766 = vunpack.c.l.b16 %v1381
    %v2767 = vunpack.c.h.b16 %v1381
    %v2768 = vunpack.c.l.b16 %v1382
    %v2769 = vunpack.c.h.b16 %v1382
    %v2770 = vunpack.c.l.b16 %v1383
    %v2771 = vunpack.c.h.b16 %v1383
    %v2772 = vunpack.c.l.b16 %v1384
    %v2773 = vunpack.c.h.b16 %v1384
    %v2774 = vunpack.c.l.b16 %v1385
    %v2775 = vunpack.c.h.b16 %v1385
    %v2776 = vunpack.c.l.b16 %v1386
    %v2777 = vunpack.c.h.b16 %v1386
    %v2778 = vunpack.c.l.b16 %v1387
    %v2779 = vunpack.c.h.b16 %v1387
    %v2780 = vunpack.c.l.b16 %v1388
    %v2781 = vunpack.c.h.b16 %v1388
    %v2782 = vunpack.c.l.b16 %v1389
    %v2783 = vunpack.c.h.b16 %v1389
    %v2784 = vunpack.c.l.b16 %v1390
    %v2785 = vunpack.c.h.b16 %v1390
    %v2786 = vunpack.c.l.b16 %v1391
    %v2787 = vunpack.c.h.b16 %v1391
    %v2788 = vunpack.c.l.b16 %v1392
    %v2789 = vunpack.c.h.b16 %v1392
    %v2790 = vunpack.c.l.b16 %v1393
    %v2791 = vunpack.c.h.b16 %v1393
    %v2792 = vunpack.c.l.b16 %v1394
    %v2793 = vunpack.c.h.b16 %v1394
    %v2794 = vunpack.c.l.b16 %v1395
    %v2795 = vunpack.c.h.b16 %v1395
    %v2796 = vunpack.c.l.b16 %v1396
    %v2797 = vunpack.c.h.b16 %v1396
    %v2798 = vunpack.c.l.b16 %v1397
    %v2799 = vunpack.c.h.b16 %v1397
    %v2800 = vunpack.c.l.b16 %v1398
    %v2801 = vunpack.c.h.b16 %v1398
    %v2802 = vunpack.c.l.b16 %v1399
    %v2803 = vunpack.c.h.b16 %v1399
    %v2804 = vunpack.c.l.b16 %v1400
    %v2805 = vunpack.c.h.b16 %v1400
    %v2806 = vunpack.c.l.b16 %v1401
    %v2807 = vunpack.c.h.b16 %v1401
    %v2808 = vunpack.c.l.b16 %v1402
    %v2809 = vunpack.c.h.b16 %v1402
    %v2810 = vunpack.c.l.b16 %v1403
    %v2811 = vunpack.c.h.b16 %v1403
    %v2812 = vunpack.c.l.b16 %v1404
    %v2813 = vunpack.c.h.b16 %v1404
    %v2814 = vunpack.c.l.b16 %v1405
    %v2815 = vunpack.c.h.b16 %v1405
    %v2816 = vunpack.c.l.b16 %v1406
    %v2817 = vunpack.c.h.b16 %v1406
    %v2818 = vunpack.c.l.b16 %v1407
    %v2819 = vunpack.c.h.b16 %v1407
    %v2820 = vunpack.c.l.b16 %v1408
    %v2821 = vunpack.c.h.b16 %v1408
    %v2822 = vunpack.c.l.b16 %v1409
    %v2823 = vunpack.c.h.b16 %v1409
    %v2824 = vunpack.c.l.b16 %v1410
    %v2825 = vunpack.c.h.b16 %v1410
    %v2826 = vunpack.c.l.b16 %v1411
    %v2827 = vunpack.c.h.b16 %v1411
    %v2828 = vunpack.c.l.b16 %v1412
    %v2829 = vunpack.c.h.b16 %v1412
    %v2830 = vunpack.c.l.b16 %v1413
    %v2831 = vunpack.c.h.b16 %v1413
    %v2832 = vunpack.c.l.b16 %v1414
    %v2833 = vunpack.c.h.b16 %v1414
    %v2834 = vunpack.c.l.b16 %v1415
    %v2835 = vunpack.c.h.b16 %v1415
    %v2836 = vunpack.c.l.b16 %v1416
    %v2837 = vunpack.c.h.b16 %v1416
    %v2838 = vunpack.c.l.b16 %v1417
    %v2839 = vunpack.c.h.b16 %v1417
    %v2840 = vunpack.c.l.b16 %v1418
    %v2841 = vunpack.c.h.b16 %v1418
    %v2842 = vunpack.c.l.b16 %v1419
    %v2843 = vunpack.c.h.b16 %v1419
    %v2844 = vunpack.c.l.b16 %v1420
    %v2845 = vunpack.c.h.b16 %v1420
    %v2846 = vunpack.c.l.b16 %v1421
    %v2847 = vunpack.c.h.b16 %v1421
    %v2848 = vunpack.c.l.b16 %v1422
    %v2849 = vunpack.c.h.b16 %v1422
    %v2850 = vunpack.c.l.b16 %v1423
    %v2851 = vunpack.c.h.b16 %v1423
    %v2852 = vunpack.c.l.b16 %v1424
    %v2853 = vunpack.c.h.b16 %v1424
    %v2854 = vunpack.c.l.b16 %v1425
    %v2855 = vunpack.c.h.b16 %v1425
    %v2856 = vunpack.c.l.b16 %v1426
    %v2857 = vunpack.c.h.b16 %v1426
    %v2858 = vunpack.c.l.b16 %v1427
    %v2859 = vunpack.c.h.b16 %v1427
    %v2860 = vunpack.c.l.b16 %v1428
    %v2861 = vunpack.c.h.b16 %v1428
    %v2862 = vunpack.c.l.b16 %v1429
    %v2863 = vunpack.c.h.b16 %v1429
    %v2864 = vunpack.c.l.b16 %v1430
    %v2865 = vunpack.c.h.b16 %v1430
    %v2866 = vunpack.c.l.b16 %v1431
    %v2867 = vunpack.c.h.b16 %v1431
    %v2868 = vunpack.c.l.b16 %v1432
    %v2869 = vunpack.c.h.b16 %v1432
    %v2870 = vunpack.c.l.b16 %v1433
    %v2871 = vunpack.c.h.b16 %v1433
    %v2872 = vunpack.c.l.b16 %v1434
    %v2873 = vunpack.c.h.b16 %v1434
    %v2874 = vunpack.c.l.b16 %v1435
    %v2875 = vunpack.c.h.b16 %v1435
    %v2876 = vunpack.c.l.b16 %v1436
    %v2877 = vunpack.c.h.b16 %v1436
    %v2878 = vunpack.c.l.b16 %v1437
    %v2879 = vunpack.c.h.b16 %v1437
    %v2880 = vunpack.c.l.b16 %v1438
    %v2881 = vunpack.c.h.b16 %v1438
    %v2882 = vunpack.c.l.b16 %v1439
    %v2883 = vunpack.c.h.b16 %v1439
    %v2884 = vunpack.c.l.b16 %v1440
    %v2885 = vunpack.c.h.b16 %v1440
    %v2886 = vunpack.c.l.b16 %v1441
    %v2887 = vunpack.c.h.b16 %v1441
    %v2888 = vunpack.c.l.b16 %v1442
    %v2889 = vunpack.c.h.b16 %v1442
    %v2890 = vunpack.c.l.b16 %v1443
    %v2891 = vunpack.c.h.b16 %v1443
    %v2892 = vunpack.c.l.b16 %v1444
    %v2893 = vunpack.c.h.b16 %v1444
    %v2894 = vunpack.c.l.b16 %v1445
    %v2895 = vunpack.c.h.b16 %v1445
    %v2896 = vunpack.c.l.b16 %v1446
    %v2897 = vunpack.c.h.b16 %v1446
    %v2898 = vunpack.c.l.b16 %v1447
    %v2899 = vunpack.c.h.b16 %v1447
    %v2900 = vunpack.c.l.b16 %v1448
    %v2901 = vunpack.c.h.b16 %v1448
    %v2902 = vunpack.c.l.b16 %v1449
    %v2903 = vunpack.c.h.b16 %v1449
    %v2904 = vunpack.c.l.b16 %v1450
    %v2905 = vunpack.c.h.b16 %v1450
    %v2906 = vunpack.c.l.b16 %v1451
    %v2907 = vunpack.c.h.b16 %v1451
    %v2908 = vunpack.c.l.b16 %v1452
    %v2909 = vunpack.c.h.b16 %v1452
    %v2910 = vunpack.c.l.b16 %v1453
    %v2911 = vunpack.c.h.b16 %v1453
    %v2912 = vunpack.c.l.b16 %v1454
    %v2913 = vunpack.c.h.b16 %v1454
    %v2914 = vunpack.c.l.b16 %v1455
    %v2915 = vunpack.c.h.b16 %v1455
    %v2916 = vunpack.c.l.b16 %v1456
    %v2917 = vunpack.c.h.b16 %v1456
    %v2918 = vunpack.c.l.b16 %v1457
    %v2919 = vunpack.c.h.b16 %v1457
    %v2920 = vunpack.c.l.b16 %v1458
    %v2921 = vunpack.c.h.b16 %v1458
    %v2922 = vunpack.c.l.b16 %v1459
    %v2923 = vunpack.c.h.b16 %v1459
    %v2924 = vunpack.c.l.b16 %v1460
    %v2925 = vunpack.c.h.b16 %v1460
    %v2926 = vunpack.c.l.b16 %v1461
    %v2927 = vunpack.c.h.b16 %v1461
    %v2928 = vunpack.c.l.b16 %v1462
    %v2929 = vunpack.c.h.b16 %v1462
    %v2930 = vunpack.c.l.b16 %v1463
    %v2931 = vunpack.c.h.b16 %v1463
    %v2932 = vunpack.c.l.b16 %v1464
    %v2933 = vunpack.c.h.b16 %v1464
    %v2934 = vunpack.c.l.b16 %v1465
    %v2935 = vunpack.c.h.b16 %v1465
    %v2936 = vunpack.c.l.b16 %v1466
    %v2937 = vunpack.c.h.b16 %v1466
    %v2938 = vunpack.c.l.b16 %v1467
    %v2939 = vunpack.c.h.b16 %v1467
    %v2940 = vunpack.c.l.b16 %v1468
    %v2941 = vunpack.c.h.b16 %v1468
    %v2942 = vunpack.c.l.b16 %v1469
    %v2943 = vunpack.c.h.b16 %v1469
    %v2944 = vunpack.c.l.b16 %v1470
    %v2945 = vunpack.c.h.b16 %v1470
    %v2946 = vunpack.c.l.b16 %v1471
    %v2947 = vunpack.c.h.b16 %v1471
    %v2948 = vunpack.c.l.b16 %v1472
    %v2949 = vunpack.c.h.b16 %v1472
    %v2950 = vunpack.c.l.b16 %v1473
    %v2951 = vunpack.c.h.b16 %v1473
    %v2952 = vunpack.c.l.b16 %v1474
    %v2953 = vunpack.c.h.b16 %v1474
    %v2954 = vunpack.c.l.b16 %v1475
    %v2955 = vunpack.c.h.b16 %v1475
    %v2956 = vunpack.c.l.b16 %v1476
    %v2957 = vunpack.c.h.b16 %v1476
    %v2958 = vunpack.c.l.b16 %v1477
    %v2959 = vunpack.c.h.b16 %v1477
    %v2960 = vunpack.c.l.b16 %v1478
    %v2961 = vunpack.c.h.b16 %v1478
    %v2962 = vunpack.c.l.b16 %v1479
    %v2963 = vunpack.c.h.b16 %v1479
    %v2964 = vunpack.c.l.b16 %v1480
    %v2965 = vunpack.c.h.b16 %v1480
    %v2966 = vunpack.c.l.b16 %v1481
    %v2967 = vunpack.c.h.b16 %v1481
    %v2968 = vunpack.c.l.b16 %v1482
    %v2969 = vunpack.c.h.b16 %v1482
    %v2970 = vunpack.c.l.b16 %v1483
    %v2971 = vunpack.c.h.b16 %v1483
    %v2972 = vunpack.c.l.b16 %v1484
    %v2973 = vunpack.c.h.b16 %v1484
    %v2974 = vunpack.c.l.b16 %v1485
    %v2975 = vunpack.c.h.b16 %v1485
    %v2976 = vunpack.c.l.b16 %v1486
    %v2977 = vunpack.c.h.b16 %v1486
    %v2978 = vunpack.c.l.b16 %v1487
    %v2979 = vunpack.c.h.b16 %v1487
    %v2980 = vunpack.c.l.b16 %v1488
    %v2981 = vunpack.c.h.b16 %v1488
    %v2982 = vunpack.c.l.b16 %v1489
    %v2983 = vunpack.c.h.b16 %v1489
    %v2984 = vunpack.c.l.b16 %v1490
    %v2985 = vunpack.c.h.b16 %v1490
    %v2986 = vunpack.c.l.b16 %v1491
    %v2987 = vunpack.c.h.b16 %v1491
    %v2988 = vunpack.c.l.b16 %v1492
    %v2989 = vunpack.c.h.b16 %v1492
    %v2990 = vunpack.c.l.b16 %v1493
    %v2991 = vunpack.c.h.b16 %v1493
    %v2992 = vunpack.c.l.b16 %v1494
    %v2993 = vunpack.c.h.b16 %v1494
    %v2994 = vunpack.c.l.b16 %v1495
    %v2995 = vunpack.c.h.b16 %v1495
    %v2996 = vunpack.c.l.b16 %v1496
    %v2997 = vunpack.c.h.b16 %v1496
    %v2998 = vunpack.c.l.b16 %v1497
    %v2999 = vunpack.c.h.b16 %v1497
    %v3000 = vunpack.c.l.b16 %v1498
    %v3001 = vunpack.c.h.b16 %v1498
    %v3002 = vunpack.c.l.b16 %v1499
    %v3003 = vunpack.c.h.b16 %v1499
    %v3004 = vunpack.c.l.b16 %v1500
    %v3005 = vunpack.c.h.b16 %v1500
    %v3006 = vunpack.c.l.b16 %v1501
    %v3007 = vunpack.c.h.b16 %v1501
    %v3008 = vunpack.c.l.b16 %v1502
    %v3009 = vunpack.c.h.b16 %v1502
    %v3010 = vunpack.c.l.b16 %v1503
    %v3011 = vunpack.c.h.b16 %v1503
    %v3012 = vunpack.c.l.b16 %v1504
    %v3013 = vunpack.c.h.b16 %v1504
    %v3014 = vunpack.c.l.b16 %v1505
    %v3015 = vunpack.c.h.b16 %v1505
    %v3016 = vunpack.c.l.b16 %v1506
    %v3017 = vunpack.c.h.b16 %v1506
    %v3018 = vunpack.c.l.b16 %v1507
    %v3019 = vunpack.c.h.b16 %v1507
    %v3020 = vunpack.c.l.b16 %v1508
    %v3021 = vunpack.c.h.b16 %v1508
    %v3022 = vunpack.c.l.b16 %v1509
    %v3023 = vunpack.c.h.b16 %v1509
    %v3024 = vunpack.c.l.b16 %v1510
    %v3025 = vunpack.c.h.b16 %v1510
    %v3026 = vunpack.c.l.b16 %v1511
    %v3027 = vunpack.c.h.b16 %v1511
    %v3028 = vunpack.c.l.b16 %v1512
    %v3029 = vunpack.c.h.b16 %v1512
    %v3030 = vunpack.c.l.b16 %v1513
    %v3031 = vunpack.c.h.b16 %v1513
    %v3032 = vunpack.c.l.b16 %v1514
    %v3033 = vunpack.c.h.b16 %v1514
    %v3034 = vunpack.c.l.b16 %v1515
    %v3035 = vunpack.c.h.b16 %v1515
    %v3036 = vunpack.c.l.b16 %v1516
    %v3037 = vunpack.c.h.b16 %v1516
    %v3038 = vunpack.c.l.b16 %v1517
    %v3039 = vunpack.c.h.b16 %v1517
    %v3040 = vunpack.c.l.b16 %v1518
    %v3041 = vunpack.c.h.b16 %v1518
    %v3042 = vunpack.c.l.b16 %v1519
    %v3043 = vunpack.c.h.b16 %v1519
    %v3044 = vunpack.c.l.b16 %v1520
    %v3045 = vunpack.c.h.b16 %v1520
    %v3046 = vunpack.c.l.b16 %v1521
    %v3047 = vunpack.c.h.b16 %v1521
    %v3048 = vunpack.c.l.b16 %v1522
    %v3049 = vunpack.c.h.b16 %v1522
    %v3050 = vunpack.c.l.b16 %v1523
    %v3051 = vunpack.c.h.b16 %v1523
    %v3052 = vunpack.c.l.b16 %v1524
    %v3053 = vunpack.c.h.b16 %v1524
    %v3054 = vunpack.c.l.b16 %v1525
    %v3055 = vunpack.c.h.b16 %v1525
    %v3056 = vunpack.c.l.b16 %v1526
    %v3057 = vunpack.c.h.b16 %v1526
    %v3058 = vunpack.c.l.b16 %v1527
    %v3059 = vunpack.c.h.b16 %v1527
    %v3060 = vunpack.c.l.b16 %v1528
    %v3061 = vunpack.c.h.b16 %v1528
    %v3062 = vunpack.c.l.b16 %v1529
    %v3063 = vunpack.c.h.b16 %v1529
    %v3064 = vunpack.c.l.b16 %v1530
    %v3065 = vunpack.c.h.b16 %v1530
    %v3066 = vunpack.c.l.b16 %v1531
    %v3067 = vunpack.c.h.b16 %v1531
    %v3068 = vunpack.c.l.b16 %v1532
    %v3069 = vunpack.c.h.b16 %v1532
    %v3070 = vunpack.c.l.b16 %v1533
    %v3071 = vunpack.c.h.b16 %v1533
    %v3072 = vunpack.c.l.b16 %v1534
    %v3073 = vunpack.c.h.b16 %v1534
    %v3074 = vunpack.c.l.b16 %v1535
    %v3075 = vunpack.c.h.b16 %v1535
    %v3076 = vunpack.c.l.b16 %v1536
    %v3077 = vunpack.c.h.b16 %v1536
    %v3078 = vunpack.c.l.b16 %v1537
    %v3079 = vunpack.c.h.b16 %v1537
    %v3080 = vunpack.c.l.b16 %v1538
    %v3081 = vunpack.c.h.b16 %v1538
    %v3082 = vunpack.c.l.b16 %v1539
    %v3083 = vunpack.c.h.b16 %v1539
    %v3084 = vunpack.c.l.b16 %v1540
    %v3085 = vunpack.c.h.b16 %v1540
    %v3086 = vunpack.c.l.b16 %v1541
    %v3087 = vunpack.c.h.b16 %v1541
    %v3088 = vpack.c.b16 %v2068, %v2064
    %v3089 = vpack.c.b16 %v2069, %v2065
    %v3090 = vpack.c.b16 %v2070, %v2066
    %v3091 = vpack.c.b16 %v2071, %v2067
    %v3092 = vpack.c.b16 %v2076, %v2072
    %v3093 = vpack.c.b16 %v2077, %v2073
    %v3094 = vpack.c.b16 %v2078, %v2074
    %v3095 = vpack.c.b16 %v2079, %v2075
    %v3096 = vpack.c.b16 %v2084, %v2080
    %v3097 = vpack.c.b16 %v2085, %v2081
    %v3098 = vpack.c.b16 %v2086, %v2082
    %v3099 = vpack.c.b16 %v2087, %v2083
    %v3100 = vpack.c.b16 %v2092, %v2088
    %v3101 = vpack.c.b16 %v2093, %v2089
    %v3102 = vpack.c.b16 %v2094, %v2090
    %v3103 = vpack.c.b16 %v2095, %v2091
    %v3104 = vpack.c.b16 %v2100, %v2096
    %v3105 = vpack.c.b16 %v2101, %v2097
    %v3106 = vpack.c.b16 %v2102, %v2098
    %v3107 = vpack.c.b16 %v2103, %v2099
    %v3108 = vpack.c.b16 %v2108, %v2104
    %v3109 = vpack.c.b16 %v2109, %v2105
    %v3110 = vpack.c.b16 %v2110, %v2106
    %v3111 = vpack.c.b16 %v2111, %v2107
    %v3112 = vpack.c.b16 %v2116, %v2112
    %v3113 = vpack.c.b16 %v2117, %v2113
    %v3114 = vpack.c.b16 %v2118, %v2114
    %v3115 = vpack.c.b16 %v2119, %v2115
    %v3116 = vpack.c.b16 %v2124, %v2120
    %v3117 = vpack.c.b16 %v2125, %v2121
    %v3118 = vpack.c.b16 %v2126, %v2122
    %v3119 = vpack.c.b16 %v2127, %v2123
    %v3120 = vpack.c.b16 %v2132, %v2128
    %v3121 = vpack.c.b16 %v2133, %v2129
    %v3122 = vpack.c.b16 %v2134, %v2130
    %v3123 = vpack.c.b16 %v2135, %v2131
    %v3124 = vpack.c.b16 %v2140, %v2136
    %v3125 = vpack.c.b16 %v2141, %v2137
    %v3126 = vpack.c.b16 %v2142, %v2138
    %v3127 = vpack.c.b16 %v2143, %v2139
    %v3128 = vpack.c.b16 %v2148, %v2144
    %v3129 = vpack.c.b16 %v2149, %v2145
    %v3130 = vpack.c.b16 %v2150, %v2146
    %v3131 = vpack.c.b16 %v2151, %v2147
    %v3132 = vpack.c.b16 %v2156, %v2152
    %v3133 = vpack.c.b16 %v2157, %v2153
    %v3134 = vpack.c.b16 %v2158, %v2154
    %v3135 = vpack.c.b16 %v2159, %v2155
    %v3136 = vpack.c.b16 %v2164, %v2160
    %v3137 = vpack.c.b16 %v2165, %v2161
    %v3138 = vpack.c.b16 %v2166, %v2162
    %v3139 = vpack.c.b16 %v2167, %v2163
    %v3140 = vpack.c.b16 %v2172, %v2168
    %v3141 = vpack.c.b16 %v2173, %v2169
    %v3142 = vpack.c.b16 %v2174, %v2170
    %v3143 = vpack.c.b16 %v2175, %v2171
    %v3144 = vpack.c.b16 %v2180, %v2176
    %v3145 = vpack.c.b16 %v2181, %v2177
    %v3146 = vpack.c.b16 %v2182, %v2178
    %v3147 = vpack.c.b16 %v2183, %v2179
    %v3148 = vpack.c.b16 %v2188, %v2184
    %v3149 = vpack.c.b16 %v2189, %v2185
    %v3150 = vpack.c.b16 %v2190, %v2186
    %v3151 = vpack.c.b16 %v2191, %v2187
    %v3152 = vpack.c.b16 %v2196, %v2192
    %v3153 = vpack.c.b16 %v2197, %v2193
    %v3154 = vpack.c.b16 %v2198, %v2194
    %v3155 = vpack.c.b16 %v2199, %v2195
    %v3156 = vpack.c.b16 %v2204, %v2200
    %v3157 = vpack.c.b16 %v2205, %v2201
    %v3158 = vpack.c.b16 %v2206, %v2202
    %v3159 = vpack.c.b16 %v2207, %v2203
    %v3160 = vpack.c.b16 %v2212, %v2208
    %v3161 = vpack.c.b16 %v2213, %v2209
    %v3162 = vpack.c.b16 %v2214, %v2210
    %v3163 = vpack.c.b16 %v2215, %v2211
    %v3164 = vpack.c.b16 %v2220, %v2216
    %v3165 = vpack.c.b16 %v2221, %v2217
    %v3166 = vpack.c.b16 %v2222, %v2218
    %v3167 = vpack.c.b16 %v2223, %v2219
    %v3168 = vpack.c.b16 %v2228, %v2224
    %v3169 = vpack.c.b16 %v2229, %v2225
    %v3170 = vpack.c.b16 %v2230, %v2226
    %v3171 = vpack.c.b16 %v2231, %v2227
    %v3172 = vpack.c.b16 %v2236, %v2232
    %v3173 = vpack.c.b16 %v2237, %v2233
    %v3174 = vpack.c.b16 %v2238, %v2234
    %v3175 = vpack.c.b16 %v2239, %v2235
    %v3176 = vpack.c.b16 %v2244, %v2240
    %v3177 = vpack.c.b16 %v2245, %v2241
    %v3178 = vpack.c.b16 %v2246, %v2242
    %v3179 = vpack.c.b16 %v2247, %v2243
    %v3180 = vpack.c.b16 %v2252, %v2248
    %v3181 = vpack.c.b16 %v2253, %v2249
    %v3182 = vpack.c.b16 %v2254, %v2250
    %v3183 = vpack.c.b16 %v2255, %v2251
    %v3184 = vpack.c.b16 %v2260, %v2256
    %v3185 = vpack.c.b16 %v2261, %v2257
    %v3186 = vpack.c.b16 %v2262, %v2258
    %v3187 = vpack.c.b16 %v2263, %v2259
    %v3188 = vpack.c.b16 %v2268, %v2264
    %v3189 = vpack.c.b16 %v2269, %v2265
    %v3190 = vpack.c.b16 %v2270, %v2266
    %v3191 = vpack.c.b16 %v2271, %v2267
    %v3192 = vpack.c.b16 %v2276, %v2272
    %v3193 = vpack.c.b16 %v2277, %v2273
    %v3194 = vpack.c.b16 %v2278, %v2274
    %v3195 = vpack.c.b16 %v2279, %v2275
    %v3196 = vpack.c.b16 %v2284, %v2280
    %v3197 = vpack.c.b16 %v2285, %v2281
    %v3198 = vpack.c.b16 %v2286, %v2282
    %v3199 = vpack.c.b16 %v2287, %v2283
    %v3200 = vpack.c.b16 %v2292, %v2288
    %v3201 = vpack.c.b16 %v2293, %v2289
    %v3202 = vpack.c.b16 %v2294, %v2290
    %v3203 = vpack.c.b16 %v2295, %v2291
    %v3204 = vpack.c.b16 %v2300, %v2296
    %v3205 = vpack.c.b16 %v2301, %v2297
    %v3206 = vpack.c.b16 %v2302, %v2298
    %v3207 = vpack.c.b16 %v2303, %v2299
    %v3208 = vpack.c.b16 %v2308, %v2304
    %v3209 = vpack.c.b16 %v2309, %v2305
    %v3210 = vpack.c.b16 %v2310, %v2306
    %v3211 = vpack.c.b16 %v2311, %v2307
    %v3212 = vpack.c.b16 %v2316, %v2312
    %v3213 = vpack.c.b16 %v2317, %v2313
    %v3214 = vpack.c.b16 %v2318, %v2314
    %v3215 = vpack.c.b16 %v2319, %v2315
    %v3216 = vpack.c.b16 %v2324, %v2320
    %v3217 = vpack.c.b16 %v2325, %v2321
    %v3218 = vpack.c.b16 %v2326, %v2322
    %v3219 = vpack.c.b16 %v2327, %v2323
    %v3220 = vpack.c.b16 %v2332, %v2328
    %v3221 = vpack.c.b16 %v2333, %v2329
    %v3222 = vpack.c.b16 %v2334, %v2330
    %v3223 = vpack.c.b16 %v2335, %v2331
    %v3224 = vpack.c.b16 %v2340, %v2336
    %v3225 = vpack.c.b16 %v2341, %v2337
    %v3226 = vpack.c.b16 %v2342, %v2338
    %v3227 = vpack.c.b16 %v2343, %v2339
    %v3228 = vpack.c.b16 %v2348, %v2344
    %v3229 = vpack.c.b16 %v2349, %v2345
    %v3230 = vpack.c.b16 %v2350, %v2346
    %v3231 = vpack.c.b16 %v2351, %v2347
    %v3232 = vpack.c.b16 %v2356, %v2352
    %v3233 = vpack.c.b16 %v2357, %v2353
    %v3234 = vpack.c.b16 %v2358, %v2354
    %v3235 = vpack.c.b16 %v2359, %v2355
    %v3236 = vpack.c.b16 %v2364, %v2360
    %v3237 = vpack.c.b16 %v2365, %v2361
    %v3238 = vpack.c.b16 %v2366, %v2362
    %v3239 = vpack.c.b16 %v2367, %v2363
    %v3240 = vpack.c.b16 %v2372, %v2368
    %v3241 = vpack.c.b16 %v2373, %v2369
    %v3242 = vpack.c.b16 %v2374, %v2370
    %v3243 = vpack.c.b16 %v2375, %v2371
    %v3244 = vpack.c.b16 %v2380, %v2376
    %v3245 = vpack.c.b16 %v2381, %v2377
    %v3246 = vpack.c.b16 %v2382, %v2378
    %v3247 = vpack.c.b16 %v2383, %v2379
    %v3248 = vpack.c.b16 %v2388, %v2384
    %v3249 = vpack.c.b16 %v2389, %v2385
    %v3250 = vpack.c.b16 %v2390, %v2386
    %v3251 = vpack.c.b16 %v2391, %v2387
    %v3252 = vpack.c.b16 %v2396, %v2392
    %v3253 = vpack.c.b16 %v2397, %v2393
    %v3254 = vpack.c.b16 %v2398, %v2394
    %v3255 = vpack.c.b16 %v2399, %v2395
    %v3256 = vpack.c.b16 %v2404, %v2400
    %v3257 = vpack.c.b16 %v2405, %v2401
    %v3258 = vpack.c.b16 %v2406, %v2402
    %v3259 = vpack.c.b16 %v2407, %v2403
    %v3260 = vpack.c.b16 %v2412, %v2408
    %v3261 = vpack.c.b16 %v2413, %v2409
    %v3262 = vpack.c.b16 %v2414, %v2410
    %v3263 = vpack.c.b16 %v2415, %v2411
    %v3264 = vpack.c.b16 %v2420, %v2416
    %v3265 = vpack.c.b16 %v2421, %v2417
    %v3266 = vpack.c.b16 %v2422, %v2418
    %v3267 = vpack.c.b16 %v2423, %v2419
    %v3268 = vpack.c.b16 %v2428, %v2424
    %v3269 = vpack.c.b16 %v2429, %v2425
    %v3270 = vpack.c.b16 %v2430, %v2426
    %v3271 = vpack.c.b16 %v2431, %v2427
    %v3272 = vpack.c.b16 %v2436, %v2432
    %v3273 = vpack.c.b16 %v2437, %v2433
    %v3274 = vpack.c.b16 %v2438, %v2434
    %v3275 = vpack.c.b16 %v2439, %v2435
    %v3276 = vpack.c.b16 %v2444, %v2440
    %v3277 = vpack.c.b16 %v2445, %v2441
    %v3278 = vpack.c.b16 %v2446, %v2442
    %v3279 = vpack.c.b16 %v2447, %v2443
    %v3280 = vpack.c.b16 %v2452, %v2448
    %v3281 = vpack.c.b16 %v2453, %v2449
    %v3282 = vpack.c.b16 %v2454, %v2450
    %v3283 = vpack.c.b16 %v2455, %v2451
    %v3284 = vpack.c.b16 %v2460, %v2456
    %v3285 = vpack.c.b16 %v2461, %v2457
    %v3286 = vpack.c.b16 %v2462, %v2458
    %v3287 = vpack.c.b16 %v2463, %v2459
    %v3288 = vpack.c.b16 %v2468, %v2464
    %v3289 = vpack.c.b16 %v2469, %v2465
    %v3290 = vpack.c.b16 %v2470, %v2466
    %v3291 = vpack.c.b16 %v2471, %v2467
    %v3292 = vpack.c.b16 %v2476, %v2472
    %v3293 = vpack.c.b16 %v2477, %v2473
    %v3294 = vpack.c.b16 %v2478, %v2474
    %v3295 = vpack.c.b16 %v2479, %v2475
    %v3296 = vpack.c.b16 %v2484, %v2480
    %v3297 = vpack.c.b16 %v2485, %v2481
    %v3298 = vpack.c.b16 %v2486, %v2482
    %v3299 = vpack.c.b16 %v2487, %v2483
    %v3300 = vpack.c.b16 %v2492, %v2488
    %v3301 = vpack.c.b16 %v2493, %v2489
    %v3302 = vpack.c.b16 %v2494, %v2490
    %v3303 = vpack.c.b16 %v2495, %v2491
    %v3304 = vpack.c.b16 %v2500, %v2496
    %v3305 = vpack.c.b16 %v2501, %v2497
    %v3306 = vpack.c.b16 %v2502, %v2498
    %v3307 = vpack.c.b16 %v2503, %v2499
    %v3308 = vpack.c.b16 %v2508, %v2504
    %v3309 = vpack.c.b16 %v2509, %v2505
    %v3310 = vpack.c.b16 %v2510, %v2506
    %v3311 = vpack.c.b16 %v2511, %v2507
    %v3312 = vpack.c.b16 %v2516, %v2512
    %v3313 = vpack.c.b16 %v2517, %v2513
    %v3314 = vpack.c.b16 %v2518, %v2514
    %v3315 = vpack.c.b16 %v2519, %v2515
    %v3316 = vpack.c.b16 %v2524, %v2520
    %v3317 = vpack.c.b16 %v2525, %v2521
    %v3318 = vpack.c.b16 %v2526, %v2522
    %v3319 = vpack.c.b16 %v2527, %v2523
    %v3320 = vpack.c.b16 %v2532, %v2528
    %v3321 = vpack.c.b16 %v2533, %v2529
    %v3322 = vpack.c.b16 %v2534, %v2530
    %v3323 = vpack.c.b16 %v2535, %v2531
    %v3324 = vpack.c.b16 %v2540, %v2536
    %v3325 = vpack.c.b16 %v2541, %v2537
    %v3326 = vpack.c.b16 %v2542, %v2538
    %v3327 = vpack.c.b16 %v2543, %v2539
    %v3328 = vpack.c.b16 %v2548, %v2544
    %v3329 = vpack.c.b16 %v2549, %v2545
    %v3330 = vpack.c.b16 %v2550, %v2546
    %v3331 = vpack.c.b16 %v2551, %v2547
    %v3332 = vpack.c.b16 %v2556, %v2552
    %v3333 = vpack.c.b16 %v2557, %v2553
    %v3334 = vpack.c.b16 %v2558, %v2554
    %v3335 = vpack.c.b16 %v2559, %v2555
    %v3336 = vpack.c.b16 %v2564, %v2560
    %v3337 = vpack.c.b16 %v2565, %v2561
    %v3338 = vpack.c.b16 %v2566, %v2562
    %v3339 = vpack.c.b16 %v2567, %v2563
    %v3340 = vpack.c.b16 %v2572, %v2568
    %v3341 = vpack.c.b16 %v2573, %v2569
    %v3342 = vpack.c.b16 %v2574, %v2570
    %v3343 = vpack.c.b16 %v2575, %v2571
    %v3344 = vpack.c.b16 %v2580, %v2576
    %v3345 = vpack.c.b16 %v2581, %v2577
    %v3346 = vpack.c.b16 %v2582, %v2578
    %v3347 = vpack.c.b16 %v2583, %v2579
    %v3348 = vpack.c.b16 %v2588, %v2584
    %v3349 = vpack.c.b16 %v2589, %v2585
    %v3350 = vpack.c.b16 %v2590, %v2586
    %v3351 = vpack.c.b16 %v2591, %v2587
    %v3352 = vpack.c.b16 %v2596, %v2592
    %v3353 = vpack.c.b16 %v2597, %v2593
    %v3354 = vpack.c.b16 %v2598, %v2594
    %v3355 = vpack.c.b16 %v2599, %v2595
    %v3356 = vpack.c.b16 %v2604, %v2600
    %v3357 = vpack.c.b16 %v2605, %v2601
    %v3358 = vpack.c.b16 %v2606, %v2602
    %v3359 = vpack.c.b16 %v2607, %v2603
    %v3360 = vpack.c.b16 %v2612, %v2608
    %v3361 = vpack.c.b16 %v2613, %v2609
    %v3362 = vpack.c.b16 %v2614, %v2610
    %v3363 = vpack.c.b16 %v2615, %v2611
    %v3364 = vpack.c.b16 %v2620, %v2616
    %v3365 = vpack.c.b16 %v2621, %v2617
    %v3366 = vpack.c.b16 %v2622, %v2618
    %v3367 = vpack.c.b16 %v2623, %v2619
    %v3368 = vpack.c.b16 %v2628, %v2624
    %v3369 = vpack.c.b16 %v2629, %v2625
    %v3370 = vpack.c.b16 %v2630, %v2626
    %v3371 = vpack.c.b16 %v2631, %v2627
    %v3372 = vpack.c.b16 %v2636, %v2632
    %v3373 = vpack.c.b16 %v2637, %v2633
    %v3374 = vpack.c.b16 %v2638, %v2634
    %v3375 = vpack.c.b16 %v2639, %v2635
    %v3376 = vpack.c.b16 %v2644, %v2640
    %v3377 = vpack.c.b16 %v2645, %v2641
    %v3378 = vpack.c.b16 %v2646, %v2642
    %v3379 = vpack.c.b16 %v2647, %v2643
    %v3380 = vpack.c.b16 %v2652, %v2648
    %v3381 = vpack.c.b16 %v2653, %v2649
    %v3382 = vpack.c.b16 %v2654, %v2650
    %v3383 = vpack.c.b16 %v2655, %v2651
    %v3384 = vpack.c.b16 %v2660, %v2656
    %v3385 = vpack.c.b16 %v2661, %v2657
    %v3386 = vpack.c.b16 %v2662, %v2658
    %v3387 = vpack.c.b16 %v2663, %v2659
    %v3388 = vpack.c.b16 %v2668, %v2664
    %v3389 = vpack.c.b16 %v2669, %v2665
    %v3390 = vpack.c.b16 %v2670, %v2666
    %v3391 = vpack.c.b16 %v2671, %v2667
    %v3392 = vpack.c.b16 %v2676, %v2672
    %v3393 = vpack.c.b16 %v2677, %v2673
    %v3394 = vpack.c.b16 %v2678, %v2674
    %v3395 = vpack.c.b16 %v2679, %v2675
    %v3396 = vpack.c.b16 %v2684, %v2680
    %v3397 = vpack.c.b16 %v2685, %v2681
    %v3398 = vpack.c.b16 %v2686, %v2682
    %v3399 = vpack.c.b16 %v2687, %v2683
    %v3400 = vpack.c.b16 %v2692, %v2688
    %v3401 = vpack.c.b16 %v2693, %v2689
    %v3402 = vpack.c.b16 %v2694, %v2690
    %v3403 = vpack.c.b16 %v2695, %v2691
    %v3404 = vpack.c.b16 %v2700, %v2696
    %v3405 = vpack.c.b16 %v2701, %v2697
    %v3406 = vpack.c.b16 %v2702, %v2698
    %v3407 = vpack.c.b16 %v2703, %v2699
    %v3408 = vpack.c.b16 %v2708, %v2704
    %v3409 = vpack.c.b16 %v2709, %v2705
    %v3410 = vpack.c.b16 %v2710, %v2706
    %v3411 = vpack.c.b16 %v2711, %v2707
    %v3412 = vpack.c.b16 %v2716, %v2712
    %v3413 = vpack.c.b16 %v2717, %v2713
    %v3414 = vpack.c.b16 %v2718, %v2714
    %v3415 = vpack.c.b16 %v2719, %v2715
    %v3416 = vpack.c.b16 %v2724, %v2720
    %v3417 = vpack.c.b16 %v2725, %v2721
    %v3418 = vpack.c.b16 %v2726, %v2722
    %v3419 = vpack.c.b16 %v2727, %v2723
    %v3420 = vpack.c.b16 %v2732, %v2728
    %v3421 = vpack.c.b16 %v2733, %v2729
    %v3422 = vpack.c.b16 %v2734, %v2730
    %v3423 = vpack.c.b16 %v2735, %v2731
    %v3424 = vpack.c.b16 %v2740, %v2736
    %v3425 = vpack.c.b16 %v2741, %v2737
    %v3426 = vpack.c.b16 %v2742, %v2738
    %v3427 = vpack.c.b16 %v2743, %v2739
    %v3428 = vpack.c.b16 %v2748, %v2744
    %v3429 = vpack.c.b16 %v2749, %v2745
    %v3430 = vpack.c.b16 %v2750, %v2746
    %v3431 = vpack.c.b16 %v2751, %v2747
    %v3432 = vpack.c.b16 %v2756, %v2752
    %v3433 = vpack.c.b16 %v2757, %v2753
    %v3434 = vpack.c.b16 %v2758, %v2754
    %v3435 = vpack.c.b16 %v2759, %v2755
    %v3436 = vpack.c.b16 %v2764, %v2760
    %v3437 = vpack.c.b16 %v2765, %v2761
    %v3438 = vpack.c.b16 %v2766, %v2762
    %v3439 = vpack.c.b16 %v2767, %v2763
    %v3440 = vpack.c.b16 %v2772, %v2768
    %v3441 = vpack.c.b16 %v2773, %v2769
    %v3442 = vpack.c.b16 %v2774, %v2770
    %v3443 = vpack.c.b16 %v2775, %v2771
    %v3444 = vpack.c.b16 %v2780, %v2776
    %v3445 = vpack.c.b16 %v2781, %v2777
    %v3446 = vpack.c.b16 %v2782, %v2778
    %v3447 = vpack.c.b16 %v2783, %v2779
    %v3448 = vpack.c.b16 %v2788, %v2784
    %v3449 = vpack.c.b16 %v2789, %v2785
    %v3450 = vpack.c.b16 %v2790, %v2786
    %v3451 = vpack.c.b16 %v2791, %v2787
    %v3452 = vpack.c.b16 %v2796, %v2792
    %v3453 = vpack.c.b16 %v2797, %v2793
    %v3454 = vpack.c.b16 %v2798, %v2794
    %v3455 = vpack.c.b16 %v2799, %v2795
    %v3456 = vpack.c.b16 %v2804, %v2800
    %v3457 = vpack.c.b16 %v2805, %v2801
    %v3458 = vpack.c.b16 %v2806, %v2802
    %v3459 = vpack.c.b16 %v2807, %v2803
    %v3460 = vpack.c.b16 %v2812, %v2808
    %v3461 = vpack.c.b16 %v2813, %v2809
    %v3462 = vpack.c.b16 %v2814, %v2810
    %v3463 = vpack.c.b16 %v2815, %v2811
    %v3464 = vpack.c.b16 %v2820, %v2816
    %v3465 = vpack.c.b16 %v2821, %v2817
    %v3466 = vpack.c.b16 %v2822, %v2818
    %v3467 = vpack.c.b16 %v2823, %v2819
    %v3468 = vpack.c.b16 %v2828, %v2824
    %v3469 = vpack.c.b16 %v2829, %v2825
    %v3470 = vpack.c.b16 %v2830, %v2826
    %v3471 = vpack.c.b16 %v2831, %v2827
    %v3472 = vpack.c.b16 %v2836, %v2832
    %v3473 = vpack.c.b16 %v2837, %v2833
    %v3474 = vpack.c.b16 %v2838, %v2834
    %v3475 = vpack.c.b16 %v2839, %v2835
    %v3476 = vpack.c.b16 %v2844, %v2840
    %v3477 = vpack.c.b16 %v2845, %v2841
    %v3478 = vpack.c.b16 %v2846, %v2842
    %v3479 = vpack.c.b16 %v2847, %v2843
    %v3480 = vpack.c.b16 %v2852, %v2848
    %v3481 = vpack.c.b16 %v2853, %v2849
    %v3482 = vpack.c.b16 %v2854, %v2850
    %v3483 = vpack.c.b16 %v2855, %v2851
    %v3484 = vpack.c.b16 %v2860, %v2856
    %v3485 = vpack.c.b16 %v2861, %v2857
    %v3486 = vpack.c.b16 %v2862, %v2858
    %v3487 = vpack.c.b16 %v2863, %v2859
    %v3488 = vpack.c.b16 %v2868, %v2864
    %v3489 = vpack.c.b16 %v2869, %v2865
    %v3490 = vpack.c.b16 %v2870, %v2866
    %v3491 = vpack.c.b16 %v2871, %v2867
    %v3492 = vpack.c.b16 %v2876, %v2872
    %v3493 = vpack.c.b16 %v2877, %v2873
    %v3494 = vpack.c.b16 %v2878, %v2874
    %v3495 = vpack.c.b16 %v2879, %v2875
    %v3496 = vpack.c.b16 %v2884, %v2880
    %v3497 = vpack.c.b16 %v2885, %v2881
    %v3498 = vpack.c.b16 %v2886, %v2882
    %v3499 = vpack.c.b16 %v2887, %v2883
    %v3500 = vpack.c.b16 %v2892, %v2888
    %v3501 = vpack.c.b16 %v2893, %v2889
    %v3502 = vpack.c.b16 %v2894, %v2890
    %v3503 = vpack.c.b16 %v2895, %v2891
    %v3504 = vpack.c.b16 %v2900, %v2896
    %v3505 = vpack.c.b16 %v2901, %v2897
    %v3506 = vpack.c.b16 %v2902, %v2898
    %v3507 = vpack.c.b16 %v2903, %v2899
    %v3508 = vpack.c.b16 %v2908, %v2904
    %v3509 = vpack.c.b16 %v2909, %v2905
    %v3510 = vpack.c.b16 %v2910, %v2906
    %v3511 = vpack.c.b16 %v2911, %v2907
    %v3512 = vpack.c.b16 %v2916, %v2912
    %v3513 = vpack.c.b16 %v2917, %v2913
    %v3514 = vpack.c.b16 %v2918, %v2914
    %v3515 = vpack.c.b16 %v2919, %v2915
    %v3516 = vpack.c.b16 %v2924, %v2920
    %v3517 = vpack.c.b16 %v2925, %v2921
    %v3518 = vpack.c.b16 %v2926, %v2922
    %v3519 = vpack.c.b16 %v2927, %v2923
    %v3520 = vpack.c.b16 %v2932, %v2928
    %v3521 = vpack.c.b16 %v2933, %v2929
    %v3522 = vpack.c.b16 %v2934, %v2930
    %v3523 = vpack.c.b16 %v2935, %v2931
    %v3524 = vpack.c.b16 %v2940, %v2936
    %v3525 = vpack.c.b16 %v2941, %v2937
    %v3526 = vpack.c.b16 %v2942, %v2938
    %v3527 = vpack.c.b16 %v2943, %v2939
    %v3528 = vpack.c.b16 %v2948, %v2944
    %v3529 = vpack.c.b16 %v2949, %v2945
    %v3530 = vpack.c.b16 %v2950, %v2946
    %v3531 = vpack.c.b16 %v2951, %v2947
    %v3532 = vpack.c.b16 %v2956, %v2952
    %v3533 = vpack.c.b16 %v2957, %v2953
    %v3534 = vpack.c.b16 %v2958, %v2954
    %v3535 = vpack.c.b16 %v2959, %v2955
    %v3536 = vpack.c.b16 %v2964, %v2960
    %v3537 = vpack.c.b16 %v2965, %v2961
    %v3538 = vpack.c.b16 %v2966, %v2962
    %v3539 = vpack.c.b16 %v2967, %v2963
    %v3540 = vpack.c.b16 %v2972, %v2968
    %v3541 = vpack.c.b16 %v2973, %v2969
    %v3542 = vpack.c.b16 %v2974, %v2970
    %v3543 = vpack.c.b16 %v2975, %v2971
    %v3544 = vpack.c.b16 %v2980, %v2976
    %v3545 = vpack.c.b16 %v2981, %v2977
    %v3546 = vpack.c.b16 %v2982, %v2978
    %v3547 = vpack.c.b16 %v2983, %v2979
    %v3548 = vpack.c.b16 %v2988, %v2984
    %v3549 = vpack.c.b16 %v2989, %v2985
    %v3550 = vpack.c.b16 %v2990, %v2986
    %v3551 = vpack.c.b16 %v2991, %v2987
    %v3552 = vpack.c.b16 %v2996, %v2992
    %v3553 = vpack.c.b16 %v2997, %v2993
    %v3554 = vpack.c.b16 %v2998, %v2994
    %v3555 = vpack.c.b16 %v2999, %v2995
    %v3556 = vpack.c.b16 %v3004, %v3000
    %v3557 = vpack.c.b16 %v3005, %v3001
    %v3558 = vpack.c.b16 %v3006, %v3002
    %v3559 = vpack.c.b16 %v3007, %v3003
    %v3560 = vpack.c.b16 %v3012, %v3008
    %v3561 = vpack.c.b16 %v3013, %v3009
    %v3562 = vpack.c.b16 %v3014, %v3010
    %v3563 = vpack.c.b16 %v3015, %v3011
    %v3564 = vpack.c.b16 %v3020, %v3016
    %v3565 = vpack.c.b16 %v3021, %v3017
    %v3566 = vpack.c.b16 %v3022, %v3018
    %v3567 = vpack.c.b16 %v3023, %v3019
    %v3568 = vpack.c.b16 %v3028, %v3024
    %v3569 = vpack.c.b16 %v3029, %v3025
    %v3570 = vpack.c.b16 %v3030, %v3026
    %v3571 = vpack.c.b16 %v3031, %v3027
    %v3572 = vpack.c.b16 %v3036, %v3032
    %v3573 = vpack.c.b16 %v3037, %v3033
    %v3574 = vpack.c.b16 %v3038, %v3034
    %v3575 = vpack.c.b16 %v3039, %v3035
    %v3576 = vpack.c.b16 %v3044, %v3040
    %v3577 = vpack.c.b16 %v3045, %v3041
    %v3578 = vpack.c.b16 %v3046, %v3042
    %v3579 = vpack.c.b16 %v3047, %v3043
    %v3580 = vpack.c.b16 %v3052, %v3048
    %v3581 = vpack.c.b16 %v3053, %v3049
    %v3582 = vpack.c.b16 %v3054, %v3050
    %v3583 = vpack.c.b16 %v3055, %v3051
    %v3584 = vpack.c.b16 %v3060, %v3056
    %v3585 = vpack.c.b16 %v3061, %v3057
    %v3586 = vpack.c.b16 %v3062, %v3058
    %v3587 = vpack.c.b16 %v3063, %v3059
    %v3588 = vpack.c.b16 %v3068, %v3064
    %v3589 = vpack.c.b16 %v3069, %v3065
    %v3590 = vpack.c.b16 %v3070, %v3066
    %v3591 = vpack.c.b16 %v3071, %v3067
    %v3592 = vpack.c.b16 %v3076, %v3072
    %v3593 = vpack.c.b16 %v3077, %v3073
    %v3594 = vpack.c.b16 %v3078, %v3074
    %v3595 = vpack.c.b16 %v3079, %v3075
    %v3596 = vpack.c.b16 %v3084, %v3080
    %v3597 = vpack.c.b16 %v3085, %v3081
    %v3598 = vpack.c.b16 %v3086, %v3082
    %v3599 = vpack.c.b16 %v3087, %v3083
    %4112 = vmatpush.bf16.msra.mxu0 %v3116
    %4113 = vmatpush.bf16.msra.mxu0 %v3112
    %4114 = vmatpush.bf16.msra.mxu0 %v3108
    %4115 = vmatpush.bf16.msra.mxu0 %v3104
    %4116 = vmatpush.bf16.msra.mxu0 %v3100
    %4117 = vmatpush.bf16.msra.mxu0 %v3096
    %4118 = vmatpush.bf16.msra.mxu0 %v3092
    %4119 = vmatpush.bf16.msra.mxu0 %v3088
    %4120 = vmatmul.bf16.gmra.mxu0 %v1014
    %v4121 = vpop.f32.mrf.mxu0
    %v4122 = vadd.f32 %v1544, %v4121
    %v4123 = vpop.f32.mrf.mxu0
    %4124 = vdwg.mxu0
    %4125 = vmatpush.bf16.msra.mxu0 %v3148
    %4126 = vmatpush.bf16.msra.mxu0 %v3144
    %4127 = vmatpush.bf16.msra.mxu0 %v3140
    %4128 = vmatpush.bf16.msra.mxu0 %v3136
    %4129 = vmatpush.bf16.msra.mxu0 %v3132
    %4130 = vmatpush.bf16.msra.mxu0 %v3128
    %4131 = vmatpush.bf16.msra.mxu0 %v3124
    %4132 = vmatpush.bf16.msra.mxu0 %v3120
    %4133 = vmatmul.bf16.gmra.mxu0 %v1015
    %v4134 = vpop.f32.mrf.mxu0
    %v4135 = vadd.f32 %v4122, %v4134
    %v4136 = vpop.f32.mrf.mxu0
    %4137 = vdwg.mxu0
    %4138 = vmatpush.bf16.msra.mxu0 %v3180
    %4139 = vmatpush.bf16.msra.mxu0 %v3176
    %4140 = vmatpush.bf16.msra.mxu0 %v3172
    %4141 = vmatpush.bf16.msra.mxu0 %v3168
    %4142 = vmatpush.bf16.msra.mxu0 %v3164
    %4143 = vmatpush.bf16.msra.mxu0 %v3160
    %4144 = vmatpush.bf16.msra.mxu0 %v3156
    %4145 = vmatpush.bf16.msra.mxu0 %v3152
    %4146 = vmatmul.bf16.gmra.mxu0 %v1016
    %v4147 = vpop.f32.mrf.mxu0
    %v4148 = vadd.f32 %v4135, %v4147
    %v4149 = vpop.f32.mrf.mxu0
    %4150 = vdwg.mxu0
    %4151 = vmatpush.bf16.msra.mxu0 %v3212
    %4152 = vmatpush.bf16.msra.mxu0 %v3208
    %4153 = vmatpush.bf16.msra.mxu0 %v3204
    %4154 = vmatpush.bf16.msra.mxu0 %v3200
    %4155 = vmatpush.bf16.msra.mxu0 %v3196
    %4156 = vmatpush.bf16.msra.mxu0 %v3192
    %4157 = vmatpush.bf16.msra.mxu0 %v3188
    %4158 = vmatpush.bf16.msra.mxu0 %v3184
    %4159 = vmatmul.bf16.gmra.mxu0 %v1017
    %v4160 = vpop.f32.mrf.mxu0
    %v4161 = vadd.f32 %v4148, %v4160
    %v4162 = vpop.f32.mrf.mxu0
    %4163 = vdwg.mxu0
    %4164 = vmatpush.bf16.msra.mxu0 %v3244
    %4165 = vmatpush.bf16.msra.mxu0 %v3240
    %4166 = vmatpush.bf16.msra.mxu0 %v3236
    %4167 = vmatpush.bf16.msra.mxu0 %v3232
    %4168 = vmatpush.bf16.msra.mxu0 %v3228
    %4169 = vmatpush.bf16.msra.mxu0 %v3224
    %4170 = vmatpush.bf16.msra.mxu0 %v3220
    %4171 = vmatpush.bf16.msra.mxu0 %v3216
    %4172 = vmatmul.bf16.gmra.mxu0 %v1018
    %v4173 = vpop.f32.mrf.mxu0
    %v4174 = vadd.f32 %v4161, %v4173
    %v4175 = vpop.f32.mrf.mxu0
    %4176 = vdwg.mxu0
    %4177 = vmatpush.bf16.msra.mxu0 %v3276
    %4178 = vmatpush.bf16.msra.mxu0 %v3272
    %4179 = vmatpush.bf16.msra.mxu0 %v3268
    %4180 = vmatpush.bf16.msra.mxu0 %v3264
    %4181 = vmatpush.bf16.msra.mxu0 %v3260
    %4182 = vmatpush.bf16.msra.mxu0 %v3256
    %4183 = vmatpush.bf16.msra.mxu0 %v3252
    %4184 = vmatpush.bf16.msra.mxu0 %v3248
    %4185 = vmatmul.bf16.gmra.mxu0 %v1019
    %v4186 = vpop.f32.mrf.mxu0
    %v4187 = vadd.f32 %v4174, %v4186
    %v4188 = vpop.f32.mrf.mxu0
    %4189 = vdwg.mxu0
    %4190 = vmatpush.bf16.msra.mxu0 %v3308
    %4191 = vmatpush.bf16.msra.mxu0 %v3304
    %4192 = vmatpush.bf16.msra.mxu0 %v3300
    %4193 = vmatpush.bf16.msra.mxu0 %v3296
    %4194 = vmatpush.bf16.msra.mxu0 %v3292
    %4195 = vmatpush.bf16.msra.mxu0 %v3288
    %4196 = vmatpush.bf16.msra.mxu0 %v3284
    %4197 = vmatpush.bf16.msra.mxu0 %v3280
    %4198 = vmatmul.bf16.gmra.mxu0 %v1020
    %v4199 = vpop.f32.mrf.mxu0
    %v4200 = vadd.f32 %v4187, %v4199
    %v4201 = vpop.f32.mrf.mxu0
    %4202 = vdwg.mxu0
    %4203 = vmatpush.bf16.msra.mxu0 %v3340
    %4204 = vmatpush.bf16.msra.mxu0 %v3336
    %4205 = vmatpush.bf16.msra.mxu0 %v3332
    %4206 = vmatpush.bf16.msra.mxu0 %v3328
    %4207 = vmatpush.bf16.msra.mxu0 %v3324
    %4208 = vmatpush.bf16.msra.mxu0 %v3320
    %4209 = vmatpush.bf16.msra.mxu0 %v3316
    %4210 = vmatpush.bf16.msra.mxu0 %v3312
    %4211 = vmatmul.bf16.gmra.mxu0 %v1021
    %v4212 = vpop.f32.mrf.mxu0
    %v4213 = vadd.f32 %v4200, %v4212
    %v4214 = vpop.f32.mrf.mxu0
    %4215 = vdwg.mxu0
    %4216 = vmatpush.bf16.msra.mxu0 %v3372
    %4217 = vmatpush.bf16.msra.mxu0 %v3368
    %4218 = vmatpush.bf16.msra.mxu0 %v3364
    %4219 = vmatpush.bf16.msra.mxu0 %v3360
    %4220 = vmatpush.bf16.msra.mxu0 %v3356
    %4221 = vmatpush.bf16.msra.mxu0 %v3352
    %4222 = vmatpush.bf16.msra.mxu0 %v3348
    %4223 = vmatpush.bf16.msra.mxu0 %v3344
    %4224 = vmatmul.bf16.gmra.mxu0 %v1022
    %v4225 = vpop.f32.mrf.mxu0
    %v4226 = vadd.f32 %v4213, %v4225
    %v4227 = vpop.f32.mrf.mxu0
    %4228 = vdwg.mxu0
    %4229 = vmatpush.bf16.msra.mxu0 %v3404
    %4230 = vmatpush.bf16.msra.mxu0 %v3400
    %4231 = vmatpush.bf16.msra.mxu0 %v3396
    %4232 = vmatpush.bf16.msra.mxu0 %v3392
    %4233 = vmatpush.bf16.msra.mxu0 %v3388
    %4234 = vmatpush.bf16.msra.mxu0 %v3384
    %4235 = vmatpush.bf16.msra.mxu0 %v3380
    %4236 = vmatpush.bf16.msra.mxu0 %v3376
    %4237 = vmatmul.bf16.gmra.mxu0 %v1023
    %v4238 = vpop.f32.mrf.mxu0
    %v4239 = vadd.f32 %v4226, %v4238
    %v4240 = vpop.f32.mrf.mxu0
    %4241 = vdwg.mxu0
    %4242 = vmatpush.bf16.msra.mxu0 %v3436
    %4243 = vmatpush.bf16.msra.mxu0 %v3432
    %4244 = vmatpush.bf16.msra.mxu0 %v3428
    %4245 = vmatpush.bf16.msra.mxu0 %v3424
    %4246 = vmatpush.bf16.msra.mxu0 %v3420
    %4247 = vmatpush.bf16.msra.mxu0 %v3416
    %4248 = vmatpush.bf16.msra.mxu0 %v3412
    %4249 = vmatpush.bf16.msra.mxu0 %v3408
    %4250 = vmatmul.bf16.gmra.mxu0 %v1024
    %v4251 = vpop.f32.mrf.mxu0
    %v4252 = vadd.f32 %v4239, %v4251
    %v4253 = vpop.f32.mrf.mxu0
    %4254 = vdwg.mxu0
    %4255 = vmatpush.bf16.msra.mxu0 %v3468
    %4256 = vmatpush.bf16.msra.mxu0 %v3464
    %4257 = vmatpush.bf16.msra.mxu0 %v3460
    %4258 = vmatpush.bf16.msra.mxu0 %v3456
    %4259 = vmatpush.bf16.msra.mxu0 %v3452
    %4260 = vmatpush.bf16.msra.mxu0 %v3448
    %4261 = vmatpush.bf16.msra.mxu0 %v3444
    %4262 = vmatpush.bf16.msra.mxu0 %v3440
    %4263 = vmatmul.bf16.gmra.mxu0 %v1025
    %v4264 = vpop.f32.mrf.mxu0
    %v4265 = vadd.f32 %v4252, %v4264
    %v4266 = vpop.f32.mrf.mxu0
    %4267 = vdwg.mxu0
    %4268 = vmatpush.bf16.msra.mxu0 %v3500
    %4269 = vmatpush.bf16.msra.mxu0 %v3496
    %4270 = vmatpush.bf16.msra.mxu0 %v3492
    %4271 = vmatpush.bf16.msra.mxu0 %v3488
    %4272 = vmatpush.bf16.msra.mxu0 %v3484
    %4273 = vmatpush.bf16.msra.mxu0 %v3480
    %4274 = vmatpush.bf16.msra.mxu0 %v3476
    %4275 = vmatpush.bf16.msra.mxu0 %v3472
    %4276 = vmatmul.bf16.gmra.mxu0 %v1026
    %v4277 = vpop.f32.mrf.mxu0
    %v4278 = vadd.f32 %v4265, %v4277
    %v4279 = vpop.f32.mrf.mxu0
    %4280 = vdwg.mxu0
    %4281 = vmatpush.bf16.msra.mxu0 %v3532
    %4282 = vmatpush.bf16.msra.mxu0 %v3528
    %4283 = vmatpush.bf16.msra.mxu0 %v3524
    %4284 = vmatpush.bf16.msra.mxu0 %v3520
    %4285 = vmatpush.bf16.msra.mxu0 %v3516
    %4286 = vmatpush.bf16.msra.mxu0 %v3512
    %4287 = vmatpush.bf16.msra.mxu0 %v3508
    %4288 = vmatpush.bf16.msra.mxu0 %v3504
    %4289 = vmatmul.bf16.gmra.mxu0 %v1027
    %v4290 = vpop.f32.mrf.mxu0
    %v4291 = vadd.f32 %v4278, %v4290
    %v4292 = vpop.f32.mrf.mxu0
    %4293 = vdwg.mxu0
    %4294 = vmatpush.bf16.msra.mxu0 %v3564
    %4295 = vmatpush.bf16.msra.mxu0 %v3560
    %4296 = vmatpush.bf16.msra.mxu0 %v3556
    %4297 = vmatpush.bf16.msra.mxu0 %v3552
    %4298 = vmatpush.bf16.msra.mxu0 %v3548
    %4299 = vmatpush.bf16.msra.mxu0 %v3544
    %4300 = vmatpush.bf16.msra.mxu0 %v3540
    %4301 = vmatpush.bf16.msra.mxu0 %v3536
    %4302 = vmatmul.bf16.gmra.mxu0 %v1028
    %v4303 = vpop.f32.mrf.mxu0
    %v4304 = vadd.f32 %v4291, %v4303
    %v4305 = vpop.f32.mrf.mxu0
    %4306 = vdwg.mxu0
    %4307 = vmatpush.bf16.msra.mxu0 %v3596
    %4308 = vmatpush.bf16.msra.mxu0 %v3592
    %4309 = vmatpush.bf16.msra.mxu0 %v3588
    %4310 = vmatpush.bf16.msra.mxu0 %v3584
    %4311 = vmatpush.bf16.msra.mxu0 %v3580
    %4312 = vmatpush.bf16.msra.mxu0 %v3576
    %4313 = vmatpush.bf16.msra.mxu0 %v3572
    %4314 = vmatpush.bf16.msra.mxu0 %v3568
    %4315 = vmatmul.bf16.gmra.mxu0 %v1029
    %v4316 = vpop.f32.mrf.mxu0
    %v4317 = vadd.f32 %v4304, %v4316
    %v4318 = vpop.f32.mrf.mxu0
    %4319 = vdwg.mxu0
    %4320 = vmatpush.bf16.msra.mxu0 %v3117
    %4321 = vmatpush.bf16.msra.mxu0 %v3113
    %4322 = vmatpush.bf16.msra.mxu0 %v3109
    %4323 = vmatpush.bf16.msra.mxu0 %v3105
    %4324 = vmatpush.bf16.msra.mxu0 %v3101
    %4325 = vmatpush.bf16.msra.mxu0 %v3097
    %4326 = vmatpush.bf16.msra.mxu0 %v3093
    %4327 = vmatpush.bf16.msra.mxu0 %v3089
    %4328 = vmatmul.bf16.gmra.mxu0 %v1014
    %v4329 = vpop.f32.mrf.mxu0
    %v4330 = vadd.f32 %v1545, %v4329
    %v4331 = vpop.f32.mrf.mxu0
    %4332 = vdwg.mxu0
    %4333 = vmatpush.bf16.msra.mxu0 %v3149
    %4334 = vmatpush.bf16.msra.mxu0 %v3145
    %4335 = vmatpush.bf16.msra.mxu0 %v3141
    %4336 = vmatpush.bf16.msra.mxu0 %v3137
    %4337 = vmatpush.bf16.msra.mxu0 %v3133
    %4338 = vmatpush.bf16.msra.mxu0 %v3129
    %4339 = vmatpush.bf16.msra.mxu0 %v3125
    %4340 = vmatpush.bf16.msra.mxu0 %v3121
    %4341 = vmatmul.bf16.gmra.mxu0 %v1015
    %v4342 = vpop.f32.mrf.mxu0
    %v4343 = vadd.f32 %v4330, %v4342
    %v4344 = vpop.f32.mrf.mxu0
    %4345 = vdwg.mxu0
    %4346 = vmatpush.bf16.msra.mxu0 %v3181
    %4347 = vmatpush.bf16.msra.mxu0 %v3177
    %4348 = vmatpush.bf16.msra.mxu0 %v3173
    %4349 = vmatpush.bf16.msra.mxu0 %v3169
    %4350 = vmatpush.bf16.msra.mxu0 %v3165
    %4351 = vmatpush.bf16.msra.mxu0 %v3161
    %4352 = vmatpush.bf16.msra.mxu0 %v3157
    %4353 = vmatpush.bf16.msra.mxu0 %v3153
    %4354 = vmatmul.bf16.gmra.mxu0 %v1016
    %v4355 = vpop.f32.mrf.mxu0
    %v4356 = vadd.f32 %v4343, %v4355
    %v4357 = vpop.f32.mrf.mxu0
    %4358 = vdwg.mxu0
    %4359 = vmatpush.bf16.msra.mxu0 %v3213
    %4360 = vmatpush.bf16.msra.mxu0 %v3209
    %4361 = vmatpush.bf16.msra.mxu0 %v3205
    %4362 = vmatpush.bf16.msra.mxu0 %v3201
    %4363 = vmatpush.bf16.msra.mxu0 %v3197
    %4364 = vmatpush.bf16.msra.mxu0 %v3193
    %4365 = vmatpush.bf16.msra.mxu0 %v3189
    %4366 = vmatpush.bf16.msra.mxu0 %v3185
    %4367 = vmatmul.bf16.gmra.mxu0 %v1017
    %v4368 = vpop.f32.mrf.mxu0
    %v4369 = vadd.f32 %v4356, %v4368
    %v4370 = vpop.f32.mrf.mxu0
    %4371 = vdwg.mxu0
    %4372 = vmatpush.bf16.msra.mxu0 %v3245
    %4373 = vmatpush.bf16.msra.mxu0 %v3241
    %4374 = vmatpush.bf16.msra.mxu0 %v3237
    %4375 = vmatpush.bf16.msra.mxu0 %v3233
    %4376 = vmatpush.bf16.msra.mxu0 %v3229
    %4377 = vmatpush.bf16.msra.mxu0 %v3225
    %4378 = vmatpush.bf16.msra.mxu0 %v3221
    %4379 = vmatpush.bf16.msra.mxu0 %v3217
    %4380 = vmatmul.bf16.gmra.mxu0 %v1018
    %v4381 = vpop.f32.mrf.mxu0
    %v4382 = vadd.f32 %v4369, %v4381
    %v4383 = vpop.f32.mrf.mxu0
    %4384 = vdwg.mxu0
    %4385 = vmatpush.bf16.msra.mxu0 %v3277
    %4386 = vmatpush.bf16.msra.mxu0 %v3273
    %4387 = vmatpush.bf16.msra.mxu0 %v3269
    %4388 = vmatpush.bf16.msra.mxu0 %v3265
    %4389 = vmatpush.bf16.msra.mxu0 %v3261
    %4390 = vmatpush.bf16.msra.mxu0 %v3257
    %4391 = vmatpush.bf16.msra.mxu0 %v3253
    %4392 = vmatpush.bf16.msra.mxu0 %v3249
    %4393 = vmatmul.bf16.gmra.mxu0 %v1019
    %v4394 = vpop.f32.mrf.mxu0
    %v4395 = vadd.f32 %v4382, %v4394
    %v4396 = vpop.f32.mrf.mxu0
    %4397 = vdwg.mxu0
    %4398 = vmatpush.bf16.msra.mxu0 %v3309
    %4399 = vmatpush.bf16.msra.mxu0 %v3305
    %4400 = vmatpush.bf16.msra.mxu0 %v3301
    %4401 = vmatpush.bf16.msra.mxu0 %v3297
    %4402 = vmatpush.bf16.msra.mxu0 %v3293
    %4403 = vmatpush.bf16.msra.mxu0 %v3289
    %4404 = vmatpush.bf16.msra.mxu0 %v3285
    %4405 = vmatpush.bf16.msra.mxu0 %v3281
    %4406 = vmatmul.bf16.gmra.mxu0 %v1020
    %v4407 = vpop.f32.mrf.mxu0
    %v4408 = vadd.f32 %v4395, %v4407
    %v4409 = vpop.f32.mrf.mxu0
    %4410 = vdwg.mxu0
    %4411 = vmatpush.bf16.msra.mxu0 %v3341
    %4412 = vmatpush.bf16.msra.mxu0 %v3337
    %4413 = vmatpush.bf16.msra.mxu0 %v3333
    %4414 = vmatpush.bf16.msra.mxu0 %v3329
    %4415 = vmatpush.bf16.msra.mxu0 %v3325
    %4416 = vmatpush.bf16.msra.mxu0 %v3321
    %4417 = vmatpush.bf16.msra.mxu0 %v3317
    %4418 = vmatpush.bf16.msra.mxu0 %v3313
    %4419 = vmatmul.bf16.gmra.mxu0 %v1021
    %v4420 = vpop.f32.mrf.mxu0
    %v4421 = vadd.f32 %v4408, %v4420
    %v4422 = vpop.f32.mrf.mxu0
    %4423 = vdwg.mxu0
    %4424 = vmatpush.bf16.msra.mxu0 %v3373
    %4425 = vmatpush.bf16.msra.mxu0 %v3369
    %4426 = vmatpush.bf16.msra.mxu0 %v3365
    %4427 = vmatpush.bf16.msra.mxu0 %v3361
    %4428 = vmatpush.bf16.msra.mxu0 %v3357
    %4429 = vmatpush.bf16.msra.mxu0 %v3353
    %4430 = vmatpush.bf16.msra.mxu0 %v3349
    %4431 = vmatpush.bf16.msra.mxu0 %v3345
    %4432 = vmatmul.bf16.gmra.mxu0 %v1022
    %v4433 = vpop.f32.mrf.mxu0
    %v4434 = vadd.f32 %v4421, %v4433
    %v4435 = vpop.f32.mrf.mxu0
    %4436 = vdwg.mxu0
    %4437 = vmatpush.bf16.msra.mxu0 %v3405
    %4438 = vmatpush.bf16.msra.mxu0 %v3401
    %4439 = vmatpush.bf16.msra.mxu0 %v3397
    %4440 = vmatpush.bf16.msra.mxu0 %v3393
    %4441 = vmatpush.bf16.msra.mxu0 %v3389
    %4442 = vmatpush.bf16.msra.mxu0 %v3385
    %4443 = vmatpush.bf16.msra.mxu0 %v3381
    %4444 = vmatpush.bf16.msra.mxu0 %v3377
    %4445 = vmatmul.bf16.gmra.mxu0 %v1023
    %v4446 = vpop.f32.mrf.mxu0
    %v4447 = vadd.f32 %v4434, %v4446
    %v4448 = vpop.f32.mrf.mxu0
    %4449 = vdwg.mxu0
    %4450 = vmatpush.bf16.msra.mxu0 %v3437
    %4451 = vmatpush.bf16.msra.mxu0 %v3433
    %4452 = vmatpush.bf16.msra.mxu0 %v3429
    %4453 = vmatpush.bf16.msra.mxu0 %v3425
    %4454 = vmatpush.bf16.msra.mxu0 %v3421
    %4455 = vmatpush.bf16.msra.mxu0 %v3417
    %4456 = vmatpush.bf16.msra.mxu0 %v3413
    %4457 = vmatpush.bf16.msra.mxu0 %v3409
    %4458 = vmatmul.bf16.gmra.mxu0 %v1024
    %v4459 = vpop.f32.mrf.mxu0
    %v4460 = vadd.f32 %v4447, %v4459
    %v4461 = vpop.f32.mrf.mxu0
    %4462 = vdwg.mxu0
    %4463 = vmatpush.bf16.msra.mxu0 %v3469
    %4464 = vmatpush.bf16.msra.mxu0 %v3465
    %4465 = vmatpush.bf16.msra.mxu0 %v3461
    %4466 = vmatpush.bf16.msra.mxu0 %v3457
    %4467 = vmatpush.bf16.msra.mxu0 %v3453
    %4468 = vmatpush.bf16.msra.mxu0 %v3449
    %4469 = vmatpush.bf16.msra.mxu0 %v3445
    %4470 = vmatpush.bf16.msra.mxu0 %v3441
    %4471 = vmatmul.bf16.gmra.mxu0 %v1025
    %v4472 = vpop.f32.mrf.mxu0
    %v4473 = vadd.f32 %v4460, %v4472
    %v4474 = vpop.f32.mrf.mxu0
    %4475 = vdwg.mxu0
    %4476 = vmatpush.bf16.msra.mxu0 %v3501
    %4477 = vmatpush.bf16.msra.mxu0 %v3497
    %4478 = vmatpush.bf16.msra.mxu0 %v3493
    %4479 = vmatpush.bf16.msra.mxu0 %v3489
    %4480 = vmatpush.bf16.msra.mxu0 %v3485
    %4481 = vmatpush.bf16.msra.mxu0 %v3481
    %4482 = vmatpush.bf16.msra.mxu0 %v3477
    %4483 = vmatpush.bf16.msra.mxu0 %v3473
    %4484 = vmatmul.bf16.gmra.mxu0 %v1026
    %v4485 = vpop.f32.mrf.mxu0
    %v4486 = vadd.f32 %v4473, %v4485
    %v4487 = vpop.f32.mrf.mxu0
    %4488 = vdwg.mxu0
    %4489 = vmatpush.bf16.msra.mxu0 %v3533
    %4490 = vmatpush.bf16.msra.mxu0 %v3529
    %4491 = vmatpush.bf16.msra.mxu0 %v3525
    %4492 = vmatpush.bf16.msra.mxu0 %v3521
    %4493 = vmatpush.bf16.msra.mxu0 %v3517
    %4494 = vmatpush.bf16.msra.mxu0 %v3513
    %4495 = vmatpush.bf16.msra.mxu0 %v3509
    %4496 = vmatpush.bf16.msra.mxu0 %v3505
    %4497 = vmatmul.bf16.gmra.mxu0 %v1027
    %v4498 = vpop.f32.mrf.mxu0
    %v4499 = vadd.f32 %v4486, %v4498
    %v4500 = vpop.f32.mrf.mxu0
    %4501 = vdwg.mxu0
    %4502 = vmatpush.bf16.msra.mxu0 %v3565
    %4503 = vmatpush.bf16.msra.mxu0 %v3561
    %4504 = vmatpush.bf16.msra.mxu0 %v3557
    %4505 = vmatpush.bf16.msra.mxu0 %v3553
    %4506 = vmatpush.bf16.msra.mxu0 %v3549
    %4507 = vmatpush.bf16.msra.mxu0 %v3545
    %4508 = vmatpush.bf16.msra.mxu0 %v3541
    %4509 = vmatpush.bf16.msra.mxu0 %v3537
    %4510 = vmatmul.bf16.gmra.mxu0 %v1028
    %v4511 = vpop.f32.mrf.mxu0
    %v4512 = vadd.f32 %v4499, %v4511
    %v4513 = vpop.f32.mrf.mxu0
    %4514 = vdwg.mxu0
    %4515 = vmatpush.bf16.msra.mxu0 %v3597
    %4516 = vmatpush.bf16.msra.mxu0 %v3593
    %4517 = vmatpush.bf16.msra.mxu0 %v3589
    %4518 = vmatpush.bf16.msra.mxu0 %v3585
    %4519 = vmatpush.bf16.msra.mxu0 %v3581
    %4520 = vmatpush.bf16.msra.mxu0 %v3577
    %4521 = vmatpush.bf16.msra.mxu0 %v3573
    %4522 = vmatpush.bf16.msra.mxu0 %v3569
    %4523 = vmatmul.bf16.gmra.mxu0 %v1029
    %v4524 = vpop.f32.mrf.mxu0
    %v4525 = vadd.f32 %v4512, %v4524
    %v4526 = vpop.f32.mrf.mxu0
    %4527 = vdwg.mxu0
    %4528 = vmatpush.bf16.msra.mxu0 %v3118
    %4529 = vmatpush.bf16.msra.mxu0 %v3114
    %4530 = vmatpush.bf16.msra.mxu0 %v3110
    %4531 = vmatpush.bf16.msra.mxu0 %v3106
    %4532 = vmatpush.bf16.msra.mxu0 %v3102
    %4533 = vmatpush.bf16.msra.mxu0 %v3098
    %4534 = vmatpush.bf16.msra.mxu0 %v3094
    %4535 = vmatpush.bf16.msra.mxu0 %v3090
    %4536 = vmatmul.bf16.gmra.mxu0 %v1014
    %v4537 = vpop.f32.mrf.mxu0
    %v4538 = vadd.f32 %v1546, %v4537
    %v4539 = vpop.f32.mrf.mxu0
    %4540 = vdwg.mxu0
    %4541 = vmatpush.bf16.msra.mxu0 %v3150
    %4542 = vmatpush.bf16.msra.mxu0 %v3146
    %4543 = vmatpush.bf16.msra.mxu0 %v3142
    %4544 = vmatpush.bf16.msra.mxu0 %v3138
    %4545 = vmatpush.bf16.msra.mxu0 %v3134
    %4546 = vmatpush.bf16.msra.mxu0 %v3130
    %4547 = vmatpush.bf16.msra.mxu0 %v3126
    %4548 = vmatpush.bf16.msra.mxu0 %v3122
    %4549 = vmatmul.bf16.gmra.mxu0 %v1015
    %v4550 = vpop.f32.mrf.mxu0
    %v4551 = vadd.f32 %v4538, %v4550
    %v4552 = vpop.f32.mrf.mxu0
    %4553 = vdwg.mxu0
    %4554 = vmatpush.bf16.msra.mxu0 %v3182
    %4555 = vmatpush.bf16.msra.mxu0 %v3178
    %4556 = vmatpush.bf16.msra.mxu0 %v3174
    %4557 = vmatpush.bf16.msra.mxu0 %v3170
    %4558 = vmatpush.bf16.msra.mxu0 %v3166
    %4559 = vmatpush.bf16.msra.mxu0 %v3162
    %4560 = vmatpush.bf16.msra.mxu0 %v3158
    %4561 = vmatpush.bf16.msra.mxu0 %v3154
    %4562 = vmatmul.bf16.gmra.mxu0 %v1016
    %v4563 = vpop.f32.mrf.mxu0
    %v4564 = vadd.f32 %v4551, %v4563
    %v4565 = vpop.f32.mrf.mxu0
    %4566 = vdwg.mxu0
    %4567 = vmatpush.bf16.msra.mxu0 %v3214
    %4568 = vmatpush.bf16.msra.mxu0 %v3210
    %4569 = vmatpush.bf16.msra.mxu0 %v3206
    %4570 = vmatpush.bf16.msra.mxu0 %v3202
    %4571 = vmatpush.bf16.msra.mxu0 %v3198
    %4572 = vmatpush.bf16.msra.mxu0 %v3194
    %4573 = vmatpush.bf16.msra.mxu0 %v3190
    %4574 = vmatpush.bf16.msra.mxu0 %v3186
    %4575 = vmatmul.bf16.gmra.mxu0 %v1017
    %v4576 = vpop.f32.mrf.mxu0
    %v4577 = vadd.f32 %v4564, %v4576
    %v4578 = vpop.f32.mrf.mxu0
    %4579 = vdwg.mxu0
    %4580 = vmatpush.bf16.msra.mxu0 %v3246
    %4581 = vmatpush.bf16.msra.mxu0 %v3242
    %4582 = vmatpush.bf16.msra.mxu0 %v3238
    %4583 = vmatpush.bf16.msra.mxu0 %v3234
    %4584 = vmatpush.bf16.msra.mxu0 %v3230
    %4585 = vmatpush.bf16.msra.mxu0 %v3226
    %4586 = vmatpush.bf16.msra.mxu0 %v3222
    %4587 = vmatpush.bf16.msra.mxu0 %v3218
    %4588 = vmatmul.bf16.gmra.mxu0 %v1018
    %v4589 = vpop.f32.mrf.mxu0
    %v4590 = vadd.f32 %v4577, %v4589
    %v4591 = vpop.f32.mrf.mxu0
    %4592 = vdwg.mxu0
    %4593 = vmatpush.bf16.msra.mxu0 %v3278
    %4594 = vmatpush.bf16.msra.mxu0 %v3274
    %4595 = vmatpush.bf16.msra.mxu0 %v3270
    %4596 = vmatpush.bf16.msra.mxu0 %v3266
    %4597 = vmatpush.bf16.msra.mxu0 %v3262
    %4598 = vmatpush.bf16.msra.mxu0 %v3258
    %4599 = vmatpush.bf16.msra.mxu0 %v3254
    %4600 = vmatpush.bf16.msra.mxu0 %v3250
    %4601 = vmatmul.bf16.gmra.mxu0 %v1019
    %v4602 = vpop.f32.mrf.mxu0
    %v4603 = vadd.f32 %v4590, %v4602
    %v4604 = vpop.f32.mrf.mxu0
    %4605 = vdwg.mxu0
    %4606 = vmatpush.bf16.msra.mxu0 %v3310
    %4607 = vmatpush.bf16.msra.mxu0 %v3306
    %4608 = vmatpush.bf16.msra.mxu0 %v3302
    %4609 = vmatpush.bf16.msra.mxu0 %v3298
    %4610 = vmatpush.bf16.msra.mxu0 %v3294
    %4611 = vmatpush.bf16.msra.mxu0 %v3290
    %4612 = vmatpush.bf16.msra.mxu0 %v3286
    %4613 = vmatpush.bf16.msra.mxu0 %v3282
    %4614 = vmatmul.bf16.gmra.mxu0 %v1020
    %v4615 = vpop.f32.mrf.mxu0
    %v4616 = vadd.f32 %v4603, %v4615
    %v4617 = vpop.f32.mrf.mxu0
    %4618 = vdwg.mxu0
    %4619 = vmatpush.bf16.msra.mxu0 %v3342
    %4620 = vmatpush.bf16.msra.mxu0 %v3338
    %4621 = vmatpush.bf16.msra.mxu0 %v3334
    %4622 = vmatpush.bf16.msra.mxu0 %v3330
    %4623 = vmatpush.bf16.msra.mxu0 %v3326
    %4624 = vmatpush.bf16.msra.mxu0 %v3322
    %4625 = vmatpush.bf16.msra.mxu0 %v3318
    %4626 = vmatpush.bf16.msra.mxu0 %v3314
    %4627 = vmatmul.bf16.gmra.mxu0 %v1021
    %v4628 = vpop.f32.mrf.mxu0
    %v4629 = vadd.f32 %v4616, %v4628
    %v4630 = vpop.f32.mrf.mxu0
    %4631 = vdwg.mxu0
    %4632 = vmatpush.bf16.msra.mxu0 %v3374
    %4633 = vmatpush.bf16.msra.mxu0 %v3370
    %4634 = vmatpush.bf16.msra.mxu0 %v3366
    %4635 = vmatpush.bf16.msra.mxu0 %v3362
    %4636 = vmatpush.bf16.msra.mxu0 %v3358
    %4637 = vmatpush.bf16.msra.mxu0 %v3354
    %4638 = vmatpush.bf16.msra.mxu0 %v3350
    %4639 = vmatpush.bf16.msra.mxu0 %v3346
    %4640 = vmatmul.bf16.gmra.mxu0 %v1022
    %v4641 = vpop.f32.mrf.mxu0
    %v4642 = vadd.f32 %v4629, %v4641
    %v4643 = vpop.f32.mrf.mxu0
    %4644 = vdwg.mxu0
    %4645 = vmatpush.bf16.msra.mxu0 %v3406
    %4646 = vmatpush.bf16.msra.mxu0 %v3402
    %4647 = vmatpush.bf16.msra.mxu0 %v3398
    %4648 = vmatpush.bf16.msra.mxu0 %v3394
    %4649 = vmatpush.bf16.msra.mxu0 %v3390
    %4650 = vmatpush.bf16.msra.mxu0 %v3386
    %4651 = vmatpush.bf16.msra.mxu0 %v3382
    %4652 = vmatpush.bf16.msra.mxu0 %v3378
    %4653 = vmatmul.bf16.gmra.mxu0 %v1023
    %v4654 = vpop.f32.mrf.mxu0
    %v4655 = vadd.f32 %v4642, %v4654
    %v4656 = vpop.f32.mrf.mxu0
    %4657 = vdwg.mxu0
    %4658 = vmatpush.bf16.msra.mxu0 %v3438
    %4659 = vmatpush.bf16.msra.mxu0 %v3434
    %4660 = vmatpush.bf16.msra.mxu0 %v3430
    %4661 = vmatpush.bf16.msra.mxu0 %v3426
    %4662 = vmatpush.bf16.msra.mxu0 %v3422
    %4663 = vmatpush.bf16.msra.mxu0 %v3418
    %4664 = vmatpush.bf16.msra.mxu0 %v3414
    %4665 = vmatpush.bf16.msra.mxu0 %v3410
    %4666 = vmatmul.bf16.gmra.mxu0 %v1024
    %v4667 = vpop.f32.mrf.mxu0
    %v4668 = vadd.f32 %v4655, %v4667
    %v4669 = vpop.f32.mrf.mxu0
    %4670 = vdwg.mxu0
    %4671 = vmatpush.bf16.msra.mxu0 %v3470
    %4672 = vmatpush.bf16.msra.mxu0 %v3466
    %4673 = vmatpush.bf16.msra.mxu0 %v3462
    %4674 = vmatpush.bf16.msra.mxu0 %v3458
    %4675 = vmatpush.bf16.msra.mxu0 %v3454
    %4676 = vmatpush.bf16.msra.mxu0 %v3450
    %4677 = vmatpush.bf16.msra.mxu0 %v3446
    %4678 = vmatpush.bf16.msra.mxu0 %v3442
    %4679 = vmatmul.bf16.gmra.mxu0 %v1025
    %v4680 = vpop.f32.mrf.mxu0
    %v4681 = vadd.f32 %v4668, %v4680
    %v4682 = vpop.f32.mrf.mxu0
    %4683 = vdwg.mxu0
    %4684 = vmatpush.bf16.msra.mxu0 %v3502
    %4685 = vmatpush.bf16.msra.mxu0 %v3498
    %4686 = vmatpush.bf16.msra.mxu0 %v3494
    %4687 = vmatpush.bf16.msra.mxu0 %v3490
    %4688 = vmatpush.bf16.msra.mxu0 %v3486
    %4689 = vmatpush.bf16.msra.mxu0 %v3482
    %4690 = vmatpush.bf16.msra.mxu0 %v3478
    %4691 = vmatpush.bf16.msra.mxu0 %v3474
    %4692 = vmatmul.bf16.gmra.mxu0 %v1026
    %v4693 = vpop.f32.mrf.mxu0
    %v4694 = vadd.f32 %v4681, %v4693
    %v4695 = vpop.f32.mrf.mxu0
    %4696 = vdwg.mxu0
    %4697 = vmatpush.bf16.msra.mxu0 %v3534
    %4698 = vmatpush.bf16.msra.mxu0 %v3530
    %4699 = vmatpush.bf16.msra.mxu0 %v3526
    %4700 = vmatpush.bf16.msra.mxu0 %v3522
    %4701 = vmatpush.bf16.msra.mxu0 %v3518
    %4702 = vmatpush.bf16.msra.mxu0 %v3514
    %4703 = vmatpush.bf16.msra.mxu0 %v3510
    %4704 = vmatpush.bf16.msra.mxu0 %v3506
    %4705 = vmatmul.bf16.gmra.mxu0 %v1027
    %v4706 = vpop.f32.mrf.mxu0
    %v4707 = vadd.f32 %v4694, %v4706
    %v4708 = vpop.f32.mrf.mxu0
    %4709 = vdwg.mxu0
    %4710 = vmatpush.bf16.msra.mxu0 %v3566
    %4711 = vmatpush.bf16.msra.mxu0 %v3562
    %4712 = vmatpush.bf16.msra.mxu0 %v3558
    %4713 = vmatpush.bf16.msra.mxu0 %v3554
    %4714 = vmatpush.bf16.msra.mxu0 %v3550
    %4715 = vmatpush.bf16.msra.mxu0 %v3546
    %4716 = vmatpush.bf16.msra.mxu0 %v3542
    %4717 = vmatpush.bf16.msra.mxu0 %v3538
    %4718 = vmatmul.bf16.gmra.mxu0 %v1028
    %v4719 = vpop.f32.mrf.mxu0
    %v4720 = vadd.f32 %v4707, %v4719
    %v4721 = vpop.f32.mrf.mxu0
    %4722 = vdwg.mxu0
    %4723 = vmatpush.bf16.msra.mxu0 %v3598
    %4724 = vmatpush.bf16.msra.mxu0 %v3594
    %4725 = vmatpush.bf16.msra.mxu0 %v3590
    %4726 = vmatpush.bf16.msra.mxu0 %v3586
    %4727 = vmatpush.bf16.msra.mxu0 %v3582
    %4728 = vmatpush.bf16.msra.mxu0 %v3578
    %4729 = vmatpush.bf16.msra.mxu0 %v3574
    %4730 = vmatpush.bf16.msra.mxu0 %v3570
    %4731 = vmatmul.bf16.gmra.mxu0 %v1029
    %v4732 = vpop.f32.mrf.mxu0
    %v4733 = vadd.f32 %v4720, %v4732
    %v4734 = vpop.f32.mrf.mxu0
    %4735 = vdwg.mxu0
    %4736 = vmatpush.bf16.msra.mxu0 %v3119
    %4737 = vmatpush.bf16.msra.mxu0 %v3115
    %4738 = vmatpush.bf16.msra.mxu0 %v3111
    %4739 = vmatpush.bf16.msra.mxu0 %v3107
    %4740 = vmatpush.bf16.msra.mxu0 %v3103
    %4741 = vmatpush.bf16.msra.mxu0 %v3099
    %4742 = vmatpush.bf16.msra.mxu0 %v3095
    %4743 = vmatpush.bf16.msra.mxu0 %v3091
    %4744 = vmatmul.bf16.gmra.mxu0 %v1014
    %v4745 = vpop.f32.mrf.mxu0
    %v4746 = vadd.f32 %v1547, %v4745
    %v4747 = vpop.f32.mrf.mxu0
    %4748 = vdwg.mxu0
    %4749 = vmatpush.bf16.msra.mxu0 %v3151
    %4750 = vmatpush.bf16.msra.mxu0 %v3147
    %4751 = vmatpush.bf16.msra.mxu0 %v3143
    %4752 = vmatpush.bf16.msra.mxu0 %v3139
    %4753 = vmatpush.bf16.msra.mxu0 %v3135
    %4754 = vmatpush.bf16.msra.mxu0 %v3131
    %4755 = vmatpush.bf16.msra.mxu0 %v3127
    %4756 = vmatpush.bf16.msra.mxu0 %v3123
    %4757 = vmatmul.bf16.gmra.mxu0 %v1015
    %v4758 = vpop.f32.mrf.mxu0
    %v4759 = vadd.f32 %v4746, %v4758
    %v4760 = vpop.f32.mrf.mxu0
    %4761 = vdwg.mxu0
    %4762 = vmatpush.bf16.msra.mxu0 %v3183
    %4763 = vmatpush.bf16.msra.mxu0 %v3179
    %4764 = vmatpush.bf16.msra.mxu0 %v3175
    %4765 = vmatpush.bf16.msra.mxu0 %v3171
    %4766 = vmatpush.bf16.msra.mxu0 %v3167
    %4767 = vmatpush.bf16.msra.mxu0 %v3163
    %4768 = vmatpush.bf16.msra.mxu0 %v3159
    %4769 = vmatpush.bf16.msra.mxu0 %v3155
    %4770 = vmatmul.bf16.gmra.mxu0 %v1016
    %v4771 = vpop.f32.mrf.mxu0
    %v4772 = vadd.f32 %v4759, %v4771
    %v4773 = vpop.f32.mrf.mxu0
    %4774 = vdwg.mxu0
    %4775 = vmatpush.bf16.msra.mxu0 %v3215
    %4776 = vmatpush.bf16.msra.mxu0 %v3211
    %4777 = vmatpush.bf16.msra.mxu0 %v3207
    %4778 = vmatpush.bf16.msra.mxu0 %v3203
    %4779 = vmatpush.bf16.msra.mxu0 %v3199
    %4780 = vmatpush.bf16.msra.mxu0 %v3195
    %4781 = vmatpush.bf16.msra.mxu0 %v3191
    %4782 = vmatpush.bf16.msra.mxu0 %v3187
    %4783 = vmatmul.bf16.gmra.mxu0 %v1017
    %v4784 = vpop.f32.mrf.mxu0
    %v4785 = vadd.f32 %v4772, %v4784
    %v4786 = vpop.f32.mrf.mxu0
    %4787 = vdwg.mxu0
    %4788 = vmatpush.bf16.msra.mxu0 %v3247
    %4789 = vmatpush.bf16.msra.mxu0 %v3243
    %4790 = vmatpush.bf16.msra.mxu0 %v3239
    %4791 = vmatpush.bf16.msra.mxu0 %v3235
    %4792 = vmatpush.bf16.msra.mxu0 %v3231
    %4793 = vmatpush.bf16.msra.mxu0 %v3227
    %4794 = vmatpush.bf16.msra.mxu0 %v3223
    %4795 = vmatpush.bf16.msra.mxu0 %v3219
    %4796 = vmatmul.bf16.gmra.mxu0 %v1018
    %v4797 = vpop.f32.mrf.mxu0
    %v4798 = vadd.f32 %v4785, %v4797
    %v4799 = vpop.f32.mrf.mxu0
    %4800 = vdwg.mxu0
    %4801 = vmatpush.bf16.msra.mxu0 %v3279
    %4802 = vmatpush.bf16.msra.mxu0 %v3275
    %4803 = vmatpush.bf16.msra.mxu0 %v3271
    %4804 = vmatpush.bf16.msra.mxu0 %v3267
    %4805 = vmatpush.bf16.msra.mxu0 %v3263
    %4806 = vmatpush.bf16.msra.mxu0 %v3259
    %4807 = vmatpush.bf16.msra.mxu0 %v3255
    %4808 = vmatpush.bf16.msra.mxu0 %v3251
    %4809 = vmatmul.bf16.gmra.mxu0 %v1019
    %v4810 = vpop.f32.mrf.mxu0
    %v4811 = vadd.f32 %v4798, %v4810
    %v4812 = vpop.f32.mrf.mxu0
    %4813 = vdwg.mxu0
    %4814 = vmatpush.bf16.msra.mxu0 %v3311
    %4815 = vmatpush.bf16.msra.mxu0 %v3307
    %4816 = vmatpush.bf16.msra.mxu0 %v3303
    %4817 = vmatpush.bf16.msra.mxu0 %v3299
    %4818 = vmatpush.bf16.msra.mxu0 %v3295
    %4819 = vmatpush.bf16.msra.mxu0 %v3291
    %4820 = vmatpush.bf16.msra.mxu0 %v3287
    %4821 = vmatpush.bf16.msra.mxu0 %v3283
    %4822 = vmatmul.bf16.gmra.mxu0 %v1020
    %v4823 = vpop.f32.mrf.mxu0
    %v4824 = vadd.f32 %v4811, %v4823
    %v4825 = vpop.f32.mrf.mxu0
    %4826 = vdwg.mxu0
    %4827 = vmatpush.bf16.msra.mxu0 %v3343
    %4828 = vmatpush.bf16.msra.mxu0 %v3339
    %4829 = vmatpush.bf16.msra.mxu0 %v3335
    %4830 = vmatpush.bf16.msra.mxu0 %v3331
    %4831 = vmatpush.bf16.msra.mxu0 %v3327
    %4832 = vmatpush.bf16.msra.mxu0 %v3323
    %4833 = vmatpush.bf16.msra.mxu0 %v3319
    %4834 = vmatpush.bf16.msra.mxu0 %v3315
    %4835 = vmatmul.bf16.gmra.mxu0 %v1021
    %v4836 = vpop.f32.mrf.mxu0
    %v4837 = vadd.f32 %v4824, %v4836
    %v4838 = vpop.f32.mrf.mxu0
    %4839 = vdwg.mxu0
    %4840 = vmatpush.bf16.msra.mxu0 %v3375
    %4841 = vmatpush.bf16.msra.mxu0 %v3371
    %4842 = vmatpush.bf16.msra.mxu0 %v3367
    %4843 = vmatpush.bf16.msra.mxu0 %v3363
    %4844 = vmatpush.bf16.msra.mxu0 %v3359
    %4845 = vmatpush.bf16.msra.mxu0 %v3355
    %4846 = vmatpush.bf16.msra.mxu0 %v3351
    %4847 = vmatpush.bf16.msra.mxu0 %v3347
    %4848 = vmatmul.bf16.gmra.mxu0 %v1022
    %v4849 = vpop.f32.mrf.mxu0
    %v4850 = vadd.f32 %v4837, %v4849
    %v4851 = vpop.f32.mrf.mxu0
    %4852 = vdwg.mxu0
    %4853 = vmatpush.bf16.msra.mxu0 %v3407
    %4854 = vmatpush.bf16.msra.mxu0 %v3403
    %4855 = vmatpush.bf16.msra.mxu0 %v3399
    %4856 = vmatpush.bf16.msra.mxu0 %v3395
    %4857 = vmatpush.bf16.msra.mxu0 %v3391
    %4858 = vmatpush.bf16.msra.mxu0 %v3387
    %4859 = vmatpush.bf16.msra.mxu0 %v3383
    %4860 = vmatpush.bf16.msra.mxu0 %v3379
    %4861 = vmatmul.bf16.gmra.mxu0 %v1023
    %v4862 = vpop.f32.mrf.mxu0
    %v4863 = vadd.f32 %v4850, %v4862
    %v4864 = vpop.f32.mrf.mxu0
    %4865 = vdwg.mxu0
    %4866 = vmatpush.bf16.msra.mxu0 %v3439
    %4867 = vmatpush.bf16.msra.mxu0 %v3435
    %4868 = vmatpush.bf16.msra.mxu0 %v3431
    %4869 = vmatpush.bf16.msra.mxu0 %v3427
    %4870 = vmatpush.bf16.msra.mxu0 %v3423
    %4871 = vmatpush.bf16.msra.mxu0 %v3419
    %4872 = vmatpush.bf16.msra.mxu0 %v3415
    %4873 = vmatpush.bf16.msra.mxu0 %v3411
    %4874 = vmatmul.bf16.gmra.mxu0 %v1024
    %v4875 = vpop.f32.mrf.mxu0
    %v4876 = vadd.f32 %v4863, %v4875
    %v4877 = vpop.f32.mrf.mxu0
    %4878 = vdwg.mxu0
    %4879 = vmatpush.bf16.msra.mxu0 %v3471
    %4880 = vmatpush.bf16.msra.mxu0 %v3467
    %4881 = vmatpush.bf16.msra.mxu0 %v3463
    %4882 = vmatpush.bf16.msra.mxu0 %v3459
    %4883 = vmatpush.bf16.msra.mxu0 %v3455
    %4884 = vmatpush.bf16.msra.mxu0 %v3451
    %4885 = vmatpush.bf16.msra.mxu0 %v3447
    %4886 = vmatpush.bf16.msra.mxu0 %v3443
    %4887 = vmatmul.bf16.gmra.mxu0 %v1025
    %v4888 = vpop.f32.mrf.mxu0
    %v4889 = vadd.f32 %v4876, %v4888
    %v4890 = vpop.f32.mrf.mxu0
    %4891 = vdwg.mxu0
    %4892 = vmatpush.bf16.msra.mxu0 %v3503
    %4893 = vmatpush.bf16.msra.mxu0 %v3499
    %4894 = vmatpush.bf16.msra.mxu0 %v3495
    %4895 = vmatpush.bf16.msra.mxu0 %v3491
    %4896 = vmatpush.bf16.msra.mxu0 %v3487
    %4897 = vmatpush.bf16.msra.mxu0 %v3483
    %4898 = vmatpush.bf16.msra.mxu0 %v3479
    %4899 = vmatpush.bf16.msra.mxu0 %v3475
    %4900 = vmatmul.bf16.gmra.mxu0 %v1026
    %v4901 = vpop.f32.mrf.mxu0
    %v4902 = vadd.f32 %v4889, %v4901
    %v4903 = vpop.f32.mrf.mxu0
    %4904 = vdwg.mxu0
    %4905 = vmatpush.bf16.msra.mxu0 %v3535
    %4906 = vmatpush.bf16.msra.mxu0 %v3531
    %4907 = vmatpush.bf16.msra.mxu0 %v3527
    %4908 = vmatpush.bf16.msra.mxu0 %v3523
    %4909 = vmatpush.bf16.msra.mxu0 %v3519
    %4910 = vmatpush.bf16.msra.mxu0 %v3515
    %4911 = vmatpush.bf16.msra.mxu0 %v3511
    %4912 = vmatpush.bf16.msra.mxu0 %v3507
    %4913 = vmatmul.bf16.gmra.mxu0 %v1027
    %v4914 = vpop.f32.mrf.mxu0
    %v4915 = vadd.f32 %v4902, %v4914
    %v4916 = vpop.f32.mrf.mxu0
    %4917 = vdwg.mxu0
    %4918 = vmatpush.bf16.msra.mxu0 %v3567
    %4919 = vmatpush.bf16.msra.mxu0 %v3563
    %4920 = vmatpush.bf16.msra.mxu0 %v3559
    %4921 = vmatpush.bf16.msra.mxu0 %v3555
    %4922 = vmatpush.bf16.msra.mxu0 %v3551
    %4923 = vmatpush.bf16.msra.mxu0 %v3547
    %4924 = vmatpush.bf16.msra.mxu0 %v3543
    %4925 = vmatpush.bf16.msra.mxu0 %v3539
    %4926 = vmatmul.bf16.gmra.mxu0 %v1028
    %v4927 = vpop.f32.mrf.mxu0
    %v4928 = vadd.f32 %v4915, %v4927
    %v4929 = vpop.f32.mrf.mxu0
    %4930 = vdwg.mxu0
    %4931 = vmatpush.bf16.msra.mxu0 %v3599
    %4932 = vmatpush.bf16.msra.mxu0 %v3595
    %4933 = vmatpush.bf16.msra.mxu0 %v3591
    %4934 = vmatpush.bf16.msra.mxu0 %v3587
    %4935 = vmatpush.bf16.msra.mxu0 %v3583
    %4936 = vmatpush.bf16.msra.mxu0 %v3579
    %4937 = vmatpush.bf16.msra.mxu0 %v3575
    %4938 = vmatpush.bf16.msra.mxu0 %v3571
    %4939 = vmatmul.bf16.gmra.mxu0 %v1029
    %v4940 = vpop.f32.mrf.mxu0
    %v4941 = vadd.f32 %v4928, %v4940
    %v4942 = vpop.f32.mrf.mxu0
    %4943 = vdwg.mxu0
    %v4944 = vmax.f32 %v4317, 0.0
    %v4945 = vmax.f32 %v4525, 0.0
    %v4946 = vmax.f32 %v4733, 0.0
    %v4947 = vmax.f32 %v4941, 0.0
    %v4948 = vpack.c.bf16 %v4944, %v4944
    %v4949 = vpack.c.bf16 %v4945, %v4945
    %v4950 = vpack.c.bf16 %v4946, %v4946
    %v4951 = vpack.c.bf16 %v4947, %v4947
    %v4952 = vld [vmem:[#allocation10] sm:$0xf]
    %v4953 = vld [vmem:[#allocation10 + $0x4] sm:$0xf]
    %v4954 = vld [vmem:[#allocation10 + $0x8] sm:$0xf]
    %v4955 = vld [vmem:[#allocation10 + $0xc] sm:$0xf]
    %v4956 = vld [vmem:[#allocation10 + $0x10] sm:$0xf]
    %v4957 = vld [vmem:[#allocation10 + $0x14] sm:$0xf]
    %v4958 = vld [vmem:[#allocation10 + $0x18] sm:$0xf]
    %v4959 = vld [vmem:[#allocation10 + $0x1c] sm:$0xf]
    %v4960 = vld [vmem:[#allocation10 + $0x20] sm:$0xf]
    %v4961 = vld [vmem:[#allocation10 + $0x24] sm:$0xf]
    %v4962 = vld [vmem:[#allocation10 + $0x28] sm:$0xf]
    %v4963 = vld [vmem:[#allocation10 + $0x2c] sm:$0xf]
    %v4964 = vld [vmem:[#allocation10 + $0x30] sm:$0xf]
    %v4965 = vld [vmem:[#allocation10 + $0x34] sm:$0xf]
    %v4966 = vld [vmem:[#allocation10 + $0x38] sm:$0xf]
    %v4967 = vld [vmem:[#allocation10 + $0x3c] sm:$0xf]
    %v4968 = vld [vmem:[#allocation10 + $0x40] sm:$0xf]
    %v4969 = vld [vmem:[#allocation10 + $0x44] sm:$0xf]
    %v4970 = vld [vmem:[#allocation10 + $0x48] sm:$0xf]
    %v4971 = vld [vmem:[#allocation10 + $0x4c] sm:$0xf]
    %v4972 = vld [vmem:[#allocation10 + $0x50] sm:$0xf]
    %v4973 = vld [vmem:[#allocation10 + $0x54] sm:$0xf]
    %v4974 = vld [vmem:[#allocation10 + $0x58] sm:$0xf]
    %v4975 = vld [vmem:[#allocation10 + $0x5c] sm:$0xf]
    %v4976 = vld [vmem:[#allocation10 + $0x60] sm:$0xf]
    %v4977 = vld [vmem:[#allocation10 + $0x64] sm:$0xf]
    %v4978 = vld [vmem:[#allocation10 + $0x68] sm:$0xf]
    %v4979 = vld [vmem:[#allocation10 + $0x6c] sm:$0xf]
    %v4980 = vld [vmem:[#allocation10 + $0x70] sm:$0xf]
    %v4981 = vld [vmem:[#allocation10 + $0x74] sm:$0xf]
    %v4982 = vld [vmem:[#allocation10 + $0x78] sm:$0xf]
    %v4983 = vld [vmem:[#allocation10 + $0x7c] sm:$0xf]
    %v4984 = vld [vmem:[#allocation10 + $0x80] sm:$0xf]
    %v4985 = vld [vmem:[#allocation10 + $0x84] sm:$0xf]
    %v4986 = vld [vmem:[#allocation10 + $0x88] sm:$0xf]
    %v4987 = vld [vmem:[#allocation10 + $0x8c] sm:$0xf]
    %v4988 = vld [vmem:[#allocation10 + $0x90] sm:$0xf]
    %v4989 = vld [vmem:[#allocation10 + $0x94] sm:$0xf]
    %v4990 = vld [vmem:[#allocation10 + $0x98] sm:$0xf]
    %v4991 = vld [vmem:[#allocation10 + $0x9c] sm:$0xf]
    %v4992 = vld [vmem:[#allocation10 + $0xa0] sm:$0xf]
    %v4993 = vld [vmem:[#allocation10 + $0xa4] sm:$0xf]
    %v4994 = vld [vmem:[#allocation10 + $0xa8] sm:$0xf]
    %v4995 = vld [vmem:[#allocation10 + $0xac] sm:$0xf]
    %v4996 = vld [vmem:[#allocation10 + $0xb0] sm:$0xf]
    %v4997 = vld [vmem:[#allocation10 + $0xb4] sm:$0xf]
    %v4998 = vld [vmem:[#allocation10 + $0xb8] sm:$0xf]
    %v4999 = vld [vmem:[#allocation10 + $0xbc] sm:$0xf]
    %v5000 = vld [vmem:[#allocation10 + $0xc0] sm:$0xf]
    %v5001 = vld [vmem:[#allocation10 + $0xc4] sm:$0xf]
    %v5002 = vld [vmem:[#allocation10 + $0xc8] sm:$0xf]
    %v5003 = vld [vmem:[#allocation10 + $0xcc] sm:$0xf]
    %v5004 = vld [vmem:[#allocation10 + $0xd0] sm:$0xf]
    %v5005 = vld [vmem:[#allocation10 + $0xd4] sm:$0xf]
    %v5006 = vld [vmem:[#allocation10 + $0xd8] sm:$0xf]
    %v5007 = vld [vmem:[#allocation10 + $0xdc] sm:$0xf]
    %v5008 = vld [vmem:[#allocation10 + $0xe0] sm:$0xf]
    %v5009 = vld [vmem:[#allocation10 + $0xe4] sm:$0xf]
    %v5010 = vld [vmem:[#allocation10 + $0xe8] sm:$0xf]
    %v5011 = vld [vmem:[#allocation10 + $0xec] sm:$0xf]
    %v5012 = vld [vmem:[#allocation10 + $0xf0] sm:$0xf]
    %v5013 = vld [vmem:[#allocation10 + $0xf4] sm:$0xf]
    %v5014 = vld [vmem:[#allocation10 + $0xf8] sm:$0xf]
    %v5015 = vld [vmem:[#allocation10 + $0xfc] sm:$0xf]
    %v5016 = vld [vmem:[#allocation11] sm:$0x1]
    %v5018 = vperm.slane %v5016, 0
    %v5084 = vunpack.c.l.b16 %v4952
    %v5085 = vunpack.c.l.b16 %v4953
    %v5086 = vunpack.c.l.b16 %v4954
    %v5087 = vunpack.c.l.b16 %v4955
    %v5088 = vunpack.c.l.b16 %v4956
    %v5089 = vunpack.c.l.b16 %v4957
    %v5090 = vunpack.c.l.b16 %v4958
    %v5091 = vunpack.c.l.b16 %v4959
    %v5092 = vunpack.c.l.b16 %v4960
    %v5093 = vunpack.c.l.b16 %v4961
    %v5094 = vunpack.c.l.b16 %v4962
    %v5095 = vunpack.c.l.b16 %v4963
    %v5096 = vunpack.c.l.b16 %v4964
    %v5097 = vunpack.c.l.b16 %v4965
    %v5098 = vunpack.c.l.b16 %v4966
    %v5099 = vunpack.c.l.b16 %v4967
    %v5100 = vunpack.c.l.b16 %v4968
    %v5101 = vunpack.c.l.b16 %v4969
    %v5102 = vunpack.c.l.b16 %v4970
    %v5103 = vunpack.c.l.b16 %v4971
    %v5104 = vunpack.c.l.b16 %v4972
    %v5105 = vunpack.c.l.b16 %v4973
    %v5106 = vunpack.c.l.b16 %v4974
    %v5107 = vunpack.c.l.b16 %v4975
    %v5108 = vunpack.c.l.b16 %v4976
    %v5109 = vunpack.c.l.b16 %v4977
    %v5110 = vunpack.c.l.b16 %v4978
    %v5111 = vunpack.c.l.b16 %v4979
    %v5112 = vunpack.c.l.b16 %v4980
    %v5113 = vunpack.c.l.b16 %v4981
    %v5114 = vunpack.c.l.b16 %v4982
    %v5115 = vunpack.c.l.b16 %v4983
    %v5116 = vunpack.c.l.b16 %v4984
    %v5117 = vunpack.c.l.b16 %v4985
    %v5118 = vunpack.c.l.b16 %v4986
    %v5119 = vunpack.c.l.b16 %v4987
    %v5120 = vunpack.c.l.b16 %v4988
    %v5121 = vunpack.c.l.b16 %v4989
    %v5122 = vunpack.c.l.b16 %v4990
    %v5123 = vunpack.c.l.b16 %v4991
    %v5124 = vunpack.c.l.b16 %v4992
    %v5125 = vunpack.c.l.b16 %v4993
    %v5126 = vunpack.c.l.b16 %v4994
    %v5127 = vunpack.c.l.b16 %v4995
    %v5128 = vunpack.c.l.b16 %v4996
    %v5129 = vunpack.c.l.b16 %v4997
    %v5130 = vunpack.c.l.b16 %v4998
    %v5131 = vunpack.c.l.b16 %v4999
    %v5132 = vunpack.c.l.b16 %v5000
    %v5133 = vunpack.c.l.b16 %v5001
    %v5134 = vunpack.c.l.b16 %v5002
    %v5135 = vunpack.c.l.b16 %v5003
    %v5136 = vunpack.c.l.b16 %v5004
    %v5137 = vunpack.c.l.b16 %v5005
    %v5138 = vunpack.c.l.b16 %v5006
    %v5139 = vunpack.c.l.b16 %v5007
    %v5140 = vunpack.c.l.b16 %v5008
    %v5141 = vunpack.c.l.b16 %v5009
    %v5142 = vunpack.c.l.b16 %v5010
    %v5143 = vunpack.c.l.b16 %v5011
    %v5144 = vunpack.c.l.b16 %v5012
    %v5145 = vunpack.c.l.b16 %v5013
    %v5146 = vunpack.c.l.b16 %v5014
    %v5147 = vunpack.c.l.b16 %v5015
    %v5148 = vpack.c.b16 %v5085, %v5084
    %v5149 = vpack.c.b16 %v5087, %v5086
    %v5150 = vpack.c.b16 %v5089, %v5088
    %v5151 = vpack.c.b16 %v5091, %v5090
    %v5152 = vpack.c.b16 %v5093, %v5092
    %v5153 = vpack.c.b16 %v5095, %v5094
    %v5154 = vpack.c.b16 %v5097, %v5096
    %v5155 = vpack.c.b16 %v5099, %v5098
    %v5156 = vpack.c.b16 %v5101, %v5100
    %v5157 = vpack.c.b16 %v5103, %v5102
    %v5158 = vpack.c.b16 %v5105, %v5104
    %v5159 = vpack.c.b16 %v5107, %v5106
    %v5160 = vpack.c.b16 %v5109, %v5108
    %v5161 = vpack.c.b16 %v5111, %v5110
    %v5162 = vpack.c.b16 %v5113, %v5112
    %v5163 = vpack.c.b16 %v5115, %v5114
    %v5164 = vpack.c.b16 %v5117, %v5116
    %v5165 = vpack.c.b16 %v5119, %v5118
    %v5166 = vpack.c.b16 %v5121, %v5120
    %v5167 = vpack.c.b16 %v5123, %v5122
    %v5168 = vpack.c.b16 %v5125, %v5124
    %v5169 = vpack.c.b16 %v5127, %v5126
    %v5170 = vpack.c.b16 %v5129, %v5128
    %v5171 = vpack.c.b16 %v5131, %v5130
    %v5172 = vpack.c.b16 %v5133, %v5132
    %v5173 = vpack.c.b16 %v5135, %v5134
    %v5174 = vpack.c.b16 %v5137, %v5136
    %v5175 = vpack.c.b16 %v5139, %v5138
    %v5176 = vpack.c.b16 %v5141, %v5140
    %v5177 = vpack.c.b16 %v5143, %v5142
    %v5178 = vpack.c.b16 %v5145, %v5144
    %v5179 = vpack.c.b16 %v5147, %v5146
    %5212 = vmatpush.bf16.msra.mxu0 %v5155
    %5213 = vmatpush.bf16.msra.mxu0 %v5154
    %5214 = vmatpush.bf16.msra.mxu0 %v5153
    %5215 = vmatpush.bf16.msra.mxu0 %v5152
    %5216 = vmatpush.bf16.msra.mxu0 %v5151
    %5217 = vmatpush.bf16.msra.mxu0 %v5150
    %5218 = vmatpush.bf16.msra.mxu0 %v5149
    %5219 = vmatpush.bf16.msra.mxu0 %v5148
    %5220 = vmatmul.bf16.gmra.mxu0 %v4948
    %v5221 = vpop.f32.mrf.mxu0
    %v5222 = vadd.f32 %v5018, %v5221
    %v5223 = vpop.f32.mrf.mxu0
    %5224 = vdwg.mxu0
    %5225 = vmatpush.bf16.msra.mxu0 %v5163
    %5226 = vmatpush.bf16.msra.mxu0 %v5162
    %5227 = vmatpush.bf16.msra.mxu0 %v5161
    %5228 = vmatpush.bf16.msra.mxu0 %v5160
    %5229 = vmatpush.bf16.msra.mxu0 %v5159
    %5230 = vmatpush.bf16.msra.mxu0 %v5158
    %5231 = vmatpush.bf16.msra.mxu0 %v5157
    %5232 = vmatpush.bf16.msra.mxu0 %v5156
    %5233 = vmatmul.bf16.gmra.mxu0 %v4949
    %v5234 = vpop.f32.mrf.mxu0
    %v5235 = vadd.f32 %v5222, %v5234
    %v5236 = vpop.f32.mrf.mxu0
    %5237 = vdwg.mxu0
    %5238 = vmatpush.bf16.msra.mxu0 %v5171
    %5239 = vmatpush.bf16.msra.mxu0 %v5170
    %5240 = vmatpush.bf16.msra.mxu0 %v5169
    %5241 = vmatpush.bf16.msra.mxu0 %v5168
    %5242 = vmatpush.bf16.msra.mxu0 %v5167
    %5243 = vmatpush.bf16.msra.mxu0 %v5166
    %5244 = vmatpush.bf16.msra.mxu0 %v5165
    %5245 = vmatpush.bf16.msra.mxu0 %v5164
    %5246 = vmatmul.bf16.gmra.mxu0 %v4950
    %v5247 = vpop.f32.mrf.mxu0
    %v5248 = vadd.f32 %v5235, %v5247
    %v5249 = vpop.f32.mrf.mxu0
    %5250 = vdwg.mxu0
    %5251 = vmatpush.bf16.msra.mxu0 %v5179
    %5252 = vmatpush.bf16.msra.mxu0 %v5178
    %5253 = vmatpush.bf16.msra.mxu0 %v5177
    %5254 = vmatpush.bf16.msra.mxu0 %v5176
    %5255 = vmatpush.bf16.msra.mxu0 %v5175
    %5256 = vmatpush.bf16.msra.mxu0 %v5174
    %5257 = vmatpush.bf16.msra.mxu0 %v5173
    %5258 = vmatpush.bf16.msra.mxu0 %v5172
    %5259 = vmatmul.bf16.gmra.mxu0 %v4951
    %v5260 = vpop.f32.mrf.mxu0
    %v5261 = vadd.f32 %v5248, %v5260
    %v5262 = vpop.f32.mrf.mxu0
    %5263 = vdwg.mxu0
    %5264 = vst [vmem:[%s9] sm:$0xff] %v5261
    // Predicated region
    $region62: #{dqn_forward.1} parent=1 // pred_check
      _
    $region63: #{dqn_forward.1} parent=1 // pred_check_branch
      %5266 = sbr.rel (0) target = $region65
    $region64: #{dqn_forward.1} parent=1 // pred_region
      _
    $region65: #{dqn_forward.1} parent=1 // pred_fallthru
      _
    // Predicated region
    $region66: #{dqn_forward.1} parent=1 // pred_check
      _
    $region67: #{dqn_forward.1} parent=1 // pred_check_branch
      %5268 = sbr.rel (0) target = $region69
    $region68: #{dqn_forward.1} parent=1 // pred_region
      _
    $region69: #{dqn_forward.1} parent=1 // pred_fallthru
      _
    %5269 = vsyncpa [#allocation4], 1
    %5270 = vsyncpa [#allocation6], 1
    %5271 = vsyncpa [#allocation9], 1
    %5272 = vsyncpa [#allocation12], 1

</llo_original>
